<compile_context>
chip_gen: v7x
topology: tpu7x:2x2x1
jax: 0.10.0
libtpu: 0.0.40
codegen_flags: <defaults>
</compile_context>

<pallas_src>
import numpy as np

import jax
import jax.numpy as jnp
from jax.experimental import pallas as pl
from jax.experimental.pallas import tpu as pltpu


# --------------------------------------------------------------------------
# Init-time weight preparation (numpy, runs once)
# --------------------------------------------------------------------------
def _banded_conv_weight(wt, width):
    """wt: (Cout, Cin, K, K).  Activations are laid out as A[h, w*Cin + ci].

    Returns Wbig (K, width*Cin, Wo*Cout) such that
        out2d[ho, wo*Cout + co] = sum_dy (A[ho+dy, :] @ Wbig[dy])[wo*Cout + co]
    equals the valid cross-correlation computed by nn.Conv2d."""
    cout, cin, k, _ = wt.shape
    wo = width - k + 1
    big = np.zeros((k, width, cin, wo, cout), np.float32)
    for dy in range(k):
        for dx in range(k):
            tap = wt[:, :, dy, dx].T  # (Cin, Cout)
            for o in range(wo):
                big[dy, o + dx, :, o, :] = tap
    return big.reshape(k, width * cin, wo * cout)


def _pool_col_selectors(w, c):
    """0/1 matrices selecting even / odd spatial columns of a (.., w*c) tensor."""
    wo = w // 2
    s_even = np.zeros((w * c, wo * c), np.float32)
    s_odd = np.zeros((w * c, wo * c), np.float32)
    eye = np.eye(c, dtype=np.float32)
    for o in range(wo):
        s_even[(2 * o) * c:(2 * o + 1) * c, o * c:(o + 1) * c] = eye
        s_odd[(2 * o + 1) * c:(2 * o + 2) * c, o * c:(o + 1) * c] = eye
    return s_even, s_odd


def _pool_row_selectors(h):
    ho = h // 2
    r_even = np.zeros((ho, h), np.float32)
    r_odd = np.zeros((ho, h), np.float32)
    r_even[np.arange(ho), 2 * np.arange(ho)] = 1.0
    r_odd[np.arange(ho), 2 * np.arange(ho) + 1] = 1.0
    return r_even, r_odd


_KPARAM_ORDER = ("c1w", "c1b", "p1se", "p1so", "p1re", "p1ro",
                 "c2w", "c2b", "p2se", "p2so", "p2re", "p2ro",
                 "f1w", "f1b", "f2w", "f2b", "f3w", "f3b")


def prepare_params(params):
    """Turn PyTorch-layout parameters into kernel-ready operands (done once)."""
    c1w = np.asarray(params["conv1_w"], np.float32)
    c1b = np.asarray(params["conv1_b"], np.float32)
    c2w = np.asarray(params["conv2_w"], np.float32)
    c2b = np.asarray(params["conv2_b"], np.float32)
    f1w = np.asarray(params["fc1_w"], np.float32)
    f1b = np.asarray(params["fc1_b"], np.float32)
    f2w = np.asarray(params["fc2_w"], np.float32)
    f2b = np.asarray(params["fc2_b"], np.float32)
    f3w = np.asarray(params["fc3_w"], np.float32)
    f3b = np.asarray(params["fc3_b"], np.float32)

    p1se, p1so = _pool_col_selectors(28, 6)
    p1re, p1ro = _pool_row_selectors(28)
    p2se, p2so = _pool_col_selectors(10, 16)
    p2re, p2ro = _pool_row_selectors(10)

    # fc1 rows permuted so that the kernel's (h, w, c) flatten order reproduces
    # PyTorch's x.view(-1, 16*5*5) which flattens (c, h, w).
    f1w_r = np.transpose(f1w.reshape(120, 16, 5, 5), (2, 3, 1, 0)).reshape(400, 120)

    kp = dict(
        c1w=_banded_conv_weight(c1w, 32),          # (5, 96, 168)
        c1b=np.tile(c1b, 28)[None, :],             # (1, 168)  ordered (w, c)
        p1se=p1se, p1so=p1so, p1re=p1re, p1ro=p1ro,
        c2w=_banded_conv_weight(c2w, 14),          # (5, 84, 160)
        c2b=np.tile(c2b, 10)[None, :],             # (1, 160)
        p2se=p2se, p2so=p2so, p2re=p2re, p2ro=p2ro,
        f1w=f1w_r,                                 # (400, 120)
        f1b=f1b[None, :],
        f2w=np.ascontiguousarray(f2w.T),           # (120, 84)
        f2b=f2b[None, :],
        f3w=np.ascontiguousarray(f3w.T),           # (84, 10)
        f3b=f3b[None, :],
    )
    return {k: jnp.asarray(v, jnp.float32) for k, v in kp.items()}


# --------------------------------------------------------------------------
# Fused whole-network Pallas kernel (one image per grid step)
# --------------------------------------------------------------------------
def _lenet_kernel(x_ref, c1w_ref, c1b_ref, p1se_ref, p1so_ref, p1re_ref, p1ro_ref,
                  c2w_ref, c2b_ref, p2se_ref, p2so_ref, p2re_ref, p2ro_ref,
                  f1w_ref, f1b_ref, f2w_ref, f2b_ref, f3w_ref, f3b_ref, out_ref):
    def mm(a, b):
        return jnp.dot(a, b, preferred_element_type=jnp.float32)

    # ---- conv1 (5x5, valid) + bias + ReLU : 5 banded MXU matmuls ----
    # input  x: (32, 32*3)   output y1: (28, 28*6), columns ordered (w, c)
    acc = mm(x_ref[0, 0:28, :], c1w_ref[0])
    for dy in range(1, 5):
        acc = acc + mm(x_ref[0, dy:dy + 28, :], c1w_ref[dy])
    y1 = jnp.maximum(acc + c1b_ref[...], 0.0)                       # (28, 168)

    # ---- maxpool1 2x2 stride 2 : max of 0/1-selection matmuls ----
    cp = jnp.maximum(mm(y1, p1se_ref[...]), mm(y1, p1so_ref[...]))  # (28, 84)
    p1 = jnp.maximum(mm(p1re_ref[...], cp), mm(p1ro_ref[...], cp))  # (14, 84)

    # ---- conv2 (5x5, valid) + bias + ReLU ----
    acc2 = mm(p1[0:10, :], c2w_ref[0])
    for dy in range(1, 5):
        acc2 = acc2 + mm(p1[dy:dy + 10, :], c2w_ref[dy])
    y2 = jnp.maximum(acc2 + c2b_ref[...], 0.0)                      # (10, 160)

    # ---- maxpool2 2x2 stride 2 ----
    cp2 = jnp.maximum(mm(y2, p2se_ref[...]), mm(y2, p2so_ref[...]))  # (10, 80)
    p2 = jnp.maximum(mm(p2re_ref[...], cp2), mm(p2ro_ref[...], cp2))  # (5, 80)

    # ---- fc1 + ReLU (flatten folded into pre-permuted weight rows) ----
    z = f1b_ref[...]                                                # (1, 120)
    for h in range(5):
        z = z + mm(p2[h:h + 1, :], f1w_ref[h * 80:(h + 1) * 80, :])
    z = jnp.maximum(z, 0.0)

    # ---- fc2 + ReLU, fc3 ----
    z = jnp.maximum(mm(z, f2w_ref[...]) + f2b_ref[...], 0.0)        # (1, 84)
    z = mm(z, f3w_ref[...]) + f3b_ref[...]                          # (1, 10)

    out_ref[0] = z


def lenet_forward(kparams, x_nchw):
    """x_nchw: (N, 3, 32, 32) float32 -> logits (N, 10)."""
    n = x_nchw.shape[0]
    # Only per-call layout op: NCHW input -> per-image lane-dense (H, W*Cin).
    x2d = jnp.transpose(x_nchw, (0, 2, 3, 1)).reshape(n, 32, 32 * 3)

    weights = [kparams[k] for k in _KPARAM_ORDER]
    in_specs = [pl.BlockSpec((1, 32, 96), lambda i: (i, 0, 0))]
    for w in weights:  # weights: full arrays, resident across the whole grid
        in_specs.append(pl.BlockSpec(w.shape, lambda i, nd=w.ndim: (0,) * nd))

    out = pl.pallas_call(
        _lenet_kernel,
        out_shape=jax.ShapeDtypeStruct((n, 1, 10), jnp.float32),
        grid=(n,),
        in_specs=in_specs,
        out_specs=pl.BlockSpec((1, 1, 10), lambda i: (i, 0, 0)),
        compiler_params=pltpu.CompilerParams(
            dimension_semantics=("parallel",)),
    )(x2d, *weights)
    return out.reshape(n, 10)


# --------------------------------------------------------------------------
# Parameters (deterministic, PyTorch-default-style uniform init)
# --------------------------------------------------------------------------
def init_params(key):
    keys = jax.random.split(key, 10)

    def u(k, shape, fan_in):
        bound = 1.0 / jnp.sqrt(jnp.float32(fan_in))
        return jax.random.uniform(k, shape, jnp.float32, -bound, bound)

    return {
        "conv1_w": u(keys[0], (6, 3, 5, 5), 3 * 25),
        "conv1_b": u(keys[1], (6,), 3 * 25),
        "conv2_w": u(keys[2], (16, 6, 5, 5), 6 * 25),
        "conv2_b": u(keys[3], (16,), 6 * 25),
        "fc1_w": u(keys[4], (120, 400), 400),
        "fc1_b": u(keys[5], (120,), 400),
        "fc2_w": u(keys[6], (84, 120), 120),
        "fc2_b": u(keys[7], (84,), 120),
        "fc3_w": u(keys[8], (10, 84), 84),
        "fc3_b": u(keys[9], (10,), 84),
    }


# --------------------------------------------------------------------------
# Plain-JAX reference (mirrors LeNet.forward) for a correctness check
# --------------------------------------------------------------------------
def lenet_reference(params, x_nchw):
    hi = jax.lax.Precision.HIGHEST

    def conv(x, w, b):
        y = jax.lax.conv_general_dilated(
            x, w, (1, 1), "VALID",
            dimension_numbers=("NCHW", "OIHW", "NCHW"), precision=hi)
        return jnp.maximum(y + b[None, :, None, None], 0.0)

    def pool(x):  # 2x2, stride 2, NCHW
        return jnp.maximum(
            jnp.maximum(x[:, :, 0::2, 0::2], x[:, :, 0::2, 1::2]),
            jnp.maximum(x[:, :, 1::2, 0::2], x[:, :, 1::2, 1::2]))

    x = pool(conv(x_nchw, params["conv1_w"], params["conv1_b"]))
    x = pool(conv(x, params["conv2_w"], params["conv2_b"]))
    x = x.reshape(x.shape[0], 16 * 5 * 5)            # PyTorch (C,H,W) flatten
    x = jnp.maximum(jnp.dot(x, params["fc1_w"].T, precision=hi) + params["fc1_b"], 0.0)
    x = jnp.maximum(jnp.dot(x, params["fc2_w"].T, precision=hi) + params["fc2_b"], 0.0)
    return jnp.dot(x, params["fc3_w"].T, precision=hi) + params["fc3_b"]


if __name__ == "__main__":
    key = jax.random.PRNGKey(0)
    pkey, xkey = jax.random.split(key)
    params = init_params(pkey)
    kparams = prepare_params(params)          # one-time layout work

    # CIFAR-shaped input: batch=2, 3 channels, 32x32 (required for 16*5*5 flatten).
    x = jax.random.normal(xkey, (2, 3, 32, 32), jnp.float32)

    fwd = jax.jit(lenet_forward)
    out = jax.block_until_ready(fwd(kparams, x))
    assert out.shape == (2, 10), out.shape
    assert out.dtype == jnp.float32

    ref = jax.block_until_ready(jax.jit(lenet_reference)(params, x))
    np.testing.assert_allclose(np.asarray(out), np.asarray(ref), rtol=5e-3, atol=5e-3)

    print("KERNEL_OK")
</pallas_src>

<mosaic_0001>
module attributes {stable_mosaic.version = 11 : i64} {
  func.func @_lenet_kernel(%arg0: i32, %arg1: memref<1x32x96xf32, #tpu.memory_space<vmem>>, %arg2: memref<5x96x168xf32, #tpu.memory_space<vmem>>, %arg3: memref<1x168xf32, #tpu.memory_space<vmem>>, %arg4: memref<168x84xf32, #tpu.memory_space<vmem>>, %arg5: memref<168x84xf32, #tpu.memory_space<vmem>>, %arg6: memref<14x28xf32, #tpu.memory_space<vmem>>, %arg7: memref<14x28xf32, #tpu.memory_space<vmem>>, %arg8: memref<5x84x160xf32, #tpu.memory_space<vmem>>, %arg9: memref<1x160xf32, #tpu.memory_space<vmem>>, %arg10: memref<160x80xf32, #tpu.memory_space<vmem>>, %arg11: memref<160x80xf32, #tpu.memory_space<vmem>>, %arg12: memref<5x10xf32, #tpu.memory_space<vmem>>, %arg13: memref<5x10xf32, #tpu.memory_space<vmem>>, %arg14: memref<400x120xf32, #tpu.memory_space<vmem>>, %arg15: memref<1x120xf32, #tpu.memory_space<vmem>>, %arg16: memref<120x84xf32, #tpu.memory_space<vmem>>, %arg17: memref<1x84xf32, #tpu.memory_space<vmem>>, %arg18: memref<84x10xf32, #tpu.memory_space<vmem>>, %arg19: memref<1x10xf32, #tpu.memory_space<vmem>>, %arg20: memref<1x1x10xf32, #tpu.memory_space<vmem>>) attributes {dimension_semantics = [#tpu.dimension_semantics<parallel>], iteration_bounds = array<i64: 2>, scalar_prefetch = 0 : i64, scratch_operands = 0 : i64, tpu.core_type = #tpu.core_type<tc>, window_params = [{transform_indices = @transform_0, window_bounds = array<i64: 1, 32, 96>}, {pipeline_mode = #tpu.pipeline_mode<synchronous>, transform_indices = @transform_1, window_bounds = array<i64: 5, 96, 168>}, {pipeline_mode = #tpu.pipeline_mode<synchronous>, transform_indices = @transform_2, window_bounds = array<i64: 1, 168>}, {pipeline_mode = #tpu.pipeline_mode<synchronous>, transform_indices = @transform_3, window_bounds = array<i64: 168, 84>}, {pipeline_mode = #tpu.pipeline_mode<synchronous>, transform_indices = @transform_4, window_bounds = array<i64: 168, 84>}, {pipeline_mode = #tpu.pipeline_mode<synchronous>, transform_indices = @transform_5, window_bounds = array<i64: 14, 28>}, {pipeline_mode = #tpu.pipeline_mode<synchronous>, transform_indices = @transform_6, window_bounds = array<i64: 14, 28>}, {pipeline_mode = #tpu.pipeline_mode<synchronous>, transform_indices = @transform_7, window_bounds = array<i64: 5, 84, 160>}, {pipeline_mode = #tpu.pipeline_mode<synchronous>, transform_indices = @transform_8, window_bounds = array<i64: 1, 160>}, {pipeline_mode = #tpu.pipeline_mode<synchronous>, transform_indices = @transform_9, window_bounds = array<i64: 160, 80>}, {pipeline_mode = #tpu.pipeline_mode<synchronous>, transform_indices = @transform_10, window_bounds = array<i64: 160, 80>}, {pipeline_mode = #tpu.pipeline_mode<synchronous>, transform_indices = @transform_11, window_bounds = array<i64: 5, 10>}, {pipeline_mode = #tpu.pipeline_mode<synchronous>, transform_indices = @transform_12, window_bounds = array<i64: 5, 10>}, {pipeline_mode = #tpu.pipeline_mode<synchronous>, transform_indices = @transform_13, window_bounds = array<i64: 400, 120>}, {pipeline_mode = #tpu.pipeline_mode<synchronous>, transform_indices = @transform_14, window_bounds = array<i64: 1, 120>}, {pipeline_mode = #tpu.pipeline_mode<synchronous>, transform_indices = @transform_15, window_bounds = array<i64: 120, 84>}, {pipeline_mode = #tpu.pipeline_mode<synchronous>, transform_indices = @transform_16, window_bounds = array<i64: 1, 84>}, {pipeline_mode = #tpu.pipeline_mode<synchronous>, transform_indices = @transform_17, window_bounds = array<i64: 84, 10>}, {pipeline_mode = #tpu.pipeline_mode<synchronous>, transform_indices = @transform_18, window_bounds = array<i64: 1, 10>}, {transform_indices = @transform_19, window_bounds = array<i64: 1, 1, 10>}]} {
    %c0 = arith.constant 0 : index
    %c0_0 = arith.constant 0 : index
    %c0_1 = arith.constant 0 : index
    %0 = vector.load %arg1[%c0, %c0_0, %c0_1] : memref<1x32x96xf32, #tpu.memory_space<vmem>>, vector<1x28x96xf32>
    %1 = vector.shape_cast %0 : vector<1x28x96xf32> to vector<28x96xf32>
    %c0_2 = arith.constant 0 : index
    %c0_3 = arith.constant 0 : index
    %c0_4 = arith.constant 0 : index
    %2 = vector.load %arg2[%c0_2, %c0_3, %c0_4] : memref<5x96x168xf32, #tpu.memory_space<vmem>>, vector<1x96x168xf32>
    %3 = vector.shape_cast %2 : vector<1x96x168xf32> to vector<96x168xf32>
    %cst = arith.constant dense<0.000000e+00> : vector<28x168xf32>
    %4 = tpu.matmul %1, %3, %cst {dimension_numbers = #tpu.dot_dimension_numbers<[1], [0], [0], [1], [0, 0, 1, 1], [], []>} : vector<28x96xf32>, vector<96x168xf32>, vector<28x168xf32> -> vector<28x168xf32>
    %c0_5 = arith.constant 0 : index
    %c1 = arith.constant 1 : index
    %c0_6 = arith.constant 0 : index
    %5 = vector.load %arg1[%c0_5, %c1, %c0_6] : memref<1x32x96xf32, #tpu.memory_space<vmem>>, vector<1x28x96xf32>
    %6 = vector.shape_cast %5 : vector<1x28x96xf32> to vector<28x96xf32>
    %c1_7 = arith.constant 1 : index
    %c0_8 = arith.constant 0 : index
    %c0_9 = arith.constant 0 : index
    %7 = vector.load %arg2[%c1_7, %c0_8, %c0_9] : memref<5x96x168xf32, #tpu.memory_space<vmem>>, vector<1x96x168xf32>
    %8 = vector.shape_cast %7 : vector<1x96x168xf32> to vector<96x168xf32>
    %cst_10 = arith.constant dense<0.000000e+00> : vector<28x168xf32>
    %9 = tpu.matmul %6, %8, %cst_10 {dimension_numbers = #tpu.dot_dimension_numbers<[1], [0], [0], [1], [0, 0, 1, 1], [], []>} : vector<28x96xf32>, vector<96x168xf32>, vector<28x168xf32> -> vector<28x168xf32>
    %10 = arith.addf %4, %9 : vector<28x168xf32>
    %c0_11 = arith.constant 0 : index
    %c2 = arith.constant 2 : index
    %c0_12 = arith.constant 0 : index
    %11 = vector.load %arg1[%c0_11, %c2, %c0_12] : memref<1x32x96xf32, #tpu.memory_space<vmem>>, vector<1x28x96xf32>
    %12 = vector.shape_cast %11 : vector<1x28x96xf32> to vector<28x96xf32>
    %c2_13 = arith.constant 2 : index
    %c0_14 = arith.constant 0 : index
    %c0_15 = arith.constant 0 : index
    %13 = vector.load %arg2[%c2_13, %c0_14, %c0_15] : memref<5x96x168xf32, #tpu.memory_space<vmem>>, vector<1x96x168xf32>
    %14 = vector.shape_cast %13 : vector<1x96x168xf32> to vector<96x168xf32>
    %cst_16 = arith.constant dense<0.000000e+00> : vector<28x168xf32>
    %15 = tpu.matmul %12, %14, %cst_16 {dimension_numbers = #tpu.dot_dimension_numbers<[1], [0], [0], [1], [0, 0, 1, 1], [], []>} : vector<28x96xf32>, vector<96x168xf32>, vector<28x168xf32> -> vector<28x168xf32>
    %16 = arith.addf %10, %15 : vector<28x168xf32>
    %c0_17 = arith.constant 0 : index
    %c3 = arith.constant 3 : index
    %c0_18 = arith.constant 0 : index
    %17 = vector.load %arg1[%c0_17, %c3, %c0_18] : memref<1x32x96xf32, #tpu.memory_space<vmem>>, vector<1x28x96xf32>
    %18 = vector.shape_cast %17 : vector<1x28x96xf32> to vector<28x96xf32>
    %c3_19 = arith.constant 3 : index
    %c0_20 = arith.constant 0 : index
    %c0_21 = arith.constant 0 : index
    %19 = vector.load %arg2[%c3_19, %c0_20, %c0_21] : memref<5x96x168xf32, #tpu.memory_space<vmem>>, vector<1x96x168xf32>
    %20 = vector.shape_cast %19 : vector<1x96x168xf32> to vector<96x168xf32>
    %cst_22 = arith.constant dense<0.000000e+00> : vector<28x168xf32>
    %21 = tpu.matmul %18, %20, %cst_22 {dimension_numbers = #tpu.dot_dimension_numbers<[1], [0], [0], [1], [0, 0, 1, 1], [], []>} : vector<28x96xf32>, vector<96x168xf32>, vector<28x168xf32> -> vector<28x168xf32>
    %22 = arith.addf %16, %21 : vector<28x168xf32>
    %c0_23 = arith.constant 0 : index
    %c4 = arith.constant 4 : index
    %c0_24 = arith.constant 0 : index
    %23 = vector.load %arg1[%c0_23, %c4, %c0_24] : memref<1x32x96xf32, #tpu.memory_space<vmem>>, vector<1x28x96xf32>
    %24 = vector.shape_cast %23 : vector<1x28x96xf32> to vector<28x96xf32>
    %c4_25 = arith.constant 4 : index
    %c0_26 = arith.constant 0 : index
    %c0_27 = arith.constant 0 : index
    %25 = vector.load %arg2[%c4_25, %c0_26, %c0_27] : memref<5x96x168xf32, #tpu.memory_space<vmem>>, vector<1x96x168xf32>
    %26 = vector.shape_cast %25 : vector<1x96x168xf32> to vector<96x168xf32>
    %cst_28 = arith.constant dense<0.000000e+00> : vector<28x168xf32>
    %27 = tpu.matmul %24, %26, %cst_28 {dimension_numbers = #tpu.dot_dimension_numbers<[1], [0], [0], [1], [0, 0, 1, 1], [], []>} : vector<28x96xf32>, vector<96x168xf32>, vector<28x168xf32> -> vector<28x168xf32>
    %28 = arith.addf %22, %27 : vector<28x168xf32>
    %c0_29 = arith.constant 0 : index
    %c0_30 = arith.constant 0 : index
    %29 = vector.load %arg3[%c0_29, %c0_30] : memref<1x168xf32, #tpu.memory_space<vmem>>, vector<1x168xf32>
    %30 = vector.broadcast %29 : vector<1x168xf32> to vector<28x168xf32>
    %31 = arith.addf %28, %30 : vector<28x168xf32>
    %cst_31 = arith.constant 0.000000e+00 : f32
    %32 = vector.broadcast %cst_31 : f32 to vector<28x168xf32>
    %33 = arith.maximumf %31, %32 : vector<28x168xf32>
    %c0_32 = arith.constant 0 : index
    %c0_33 = arith.constant 0 : index
    %34 = vector.load %arg4[%c0_32, %c0_33] : memref<168x84xf32, #tpu.memory_space<vmem>>, vector<168x84xf32>
    %cst_34 = arith.constant dense<0.000000e+00> : vector<28x84xf32>
    %35 = tpu.matmul %33, %34, %cst_34 {dimension_numbers = #tpu.dot_dimension_numbers<[1], [0], [0], [1], [0, 0, 1, 1], [], []>} : vector<28x168xf32>, vector<168x84xf32>, vector<28x84xf32> -> vector<28x84xf32>
    %c0_35 = arith.constant 0 : index
    %c0_36 = arith.constant 0 : index
    %36 = vector.load %arg5[%c0_35, %c0_36] : memref<168x84xf32, #tpu.memory_space<vmem>>, vector<168x84xf32>
    %cst_37 = arith.constant dense<0.000000e+00> : vector<28x84xf32>
    %37 = tpu.matmul %33, %36, %cst_37 {dimension_numbers = #tpu.dot_dimension_numbers<[1], [0], [0], [1], [0, 0, 1, 1], [], []>} : vector<28x168xf32>, vector<168x84xf32>, vector<28x84xf32> -> vector<28x84xf32>
    %38 = arith.maximumf %35, %37 : vector<28x84xf32>
    %c0_38 = arith.constant 0 : index
    %c0_39 = arith.constant 0 : index
    %39 = vector.load %arg6[%c0_38, %c0_39] : memref<14x28xf32, #tpu.memory_space<vmem>>, vector<14x28xf32>
    %cst_40 = arith.constant dense<0.000000e+00> : vector<14x84xf32>
    %40 = tpu.matmul %39, %38, %cst_40 {dimension_numbers = #tpu.dot_dimension_numbers<[1], [0], [0], [1], [0, 0, 1, 1], [], []>} : vector<14x28xf32>, vector<28x84xf32>, vector<14x84xf32> -> vector<14x84xf32>
    %c0_41 = arith.constant 0 : index
    %c0_42 = arith.constant 0 : index
    %41 = vector.load %arg7[%c0_41, %c0_42] : memref<14x28xf32, #tpu.memory_space<vmem>>, vector<14x28xf32>
    %cst_43 = arith.constant dense<0.000000e+00> : vector<14x84xf32>
    %42 = tpu.matmul %41, %38, %cst_43 {dimension_numbers = #tpu.dot_dimension_numbers<[1], [0], [0], [1], [0, 0, 1, 1], [], []>} : vector<14x28xf32>, vector<28x84xf32>, vector<14x84xf32> -> vector<14x84xf32>
    %43 = arith.maximumf %40, %42 : vector<14x84xf32>
    %44 = vector.extract_strided_slice %43 {offsets = [0, 0], sizes = [10, 84], strides = [1, 1]} : vector<14x84xf32> to vector<10x84xf32>
    %c0_44 = arith.constant 0 : index
    %c0_45 = arith.constant 0 : index
    %c0_46 = arith.constant 0 : index
    %45 = vector.load %arg8[%c0_44, %c0_45, %c0_46] : memref<5x84x160xf32, #tpu.memory_space<vmem>>, vector<1x84x160xf32>
    %46 = vector.shape_cast %45 : vector<1x84x160xf32> to vector<84x160xf32>
    %cst_47 = arith.constant dense<0.000000e+00> : vector<10x160xf32>
    %47 = tpu.matmul %44, %46, %cst_47 {dimension_numbers = #tpu.dot_dimension_numbers<[1], [0], [0], [1], [0, 0, 1, 1], [], []>} : vector<10x84xf32>, vector<84x160xf32>, vector<10x160xf32> -> vector<10x160xf32>
    %48 = vector.extract_strided_slice %43 {offsets = [1, 0], sizes = [10, 84], strides = [1, 1]} : vector<14x84xf32> to vector<10x84xf32>
    %c1_48 = arith.constant 1 : index
    %c0_49 = arith.constant 0 : index
    %c0_50 = arith.constant 0 : index
    %49 = vector.load %arg8[%c1_48, %c0_49, %c0_50] : memref<5x84x160xf32, #tpu.memory_space<vmem>>, vector<1x84x160xf32>
    %50 = vector.shape_cast %49 : vector<1x84x160xf32> to vector<84x160xf32>
    %cst_51 = arith.constant dense<0.000000e+00> : vector<10x160xf32>
    %51 = tpu.matmul %48, %50, %cst_51 {dimension_numbers = #tpu.dot_dimension_numbers<[1], [0], [0], [1], [0, 0, 1, 1], [], []>} : vector<10x84xf32>, vector<84x160xf32>, vector<10x160xf32> -> vector<10x160xf32>
    %52 = arith.addf %47, %51 : vector<10x160xf32>
    %53 = vector.extract_strided_slice %43 {offsets = [2, 0], sizes = [10, 84], strides = [1, 1]} : vector<14x84xf32> to vector<10x84xf32>
    %c2_52 = arith.constant 2 : index
    %c0_53 = arith.constant 0 : index
    %c0_54 = arith.constant 0 : index
    %54 = vector.load %arg8[%c2_52, %c0_53, %c0_54] : memref<5x84x160xf32, #tpu.memory_space<vmem>>, vector<1x84x160xf32>
    %55 = vector.shape_cast %54 : vector<1x84x160xf32> to vector<84x160xf32>
    %cst_55 = arith.constant dense<0.000000e+00> : vector<10x160xf32>
    %56 = tpu.matmul %53, %55, %cst_55 {dimension_numbers = #tpu.dot_dimension_numbers<[1], [0], [0], [1], [0, 0, 1, 1], [], []>} : vector<10x84xf32>, vector<84x160xf32>, vector<10x160xf32> -> vector<10x160xf32>
    %57 = arith.addf %52, %56 : vector<10x160xf32>
    %58 = vector.extract_strided_slice %43 {offsets = [3, 0], sizes = [10, 84], strides = [1, 1]} : vector<14x84xf32> to vector<10x84xf32>
    %c3_56 = arith.constant 3 : index
    %c0_57 = arith.constant 0 : index
    %c0_58 = arith.constant 0 : index
    %59 = vector.load %arg8[%c3_56, %c0_57, %c0_58] : memref<5x84x160xf32, #tpu.memory_space<vmem>>, vector<1x84x160xf32>
    %60 = vector.shape_cast %59 : vector<1x84x160xf32> to vector<84x160xf32>
    %cst_59 = arith.constant dense<0.000000e+00> : vector<10x160xf32>
    %61 = tpu.matmul %58, %60, %cst_59 {dimension_numbers = #tpu.dot_dimension_numbers<[1], [0], [0], [1], [0, 0, 1, 1], [], []>} : vector<10x84xf32>, vector<84x160xf32>, vector<10x160xf32> -> vector<10x160xf32>
    %62 = arith.addf %57, %61 : vector<10x160xf32>
    %63 = vector.extract_strided_slice %43 {offsets = [4, 0], sizes = [10, 84], strides = [1, 1]} : vector<14x84xf32> to vector<10x84xf32>
    %c4_60 = arith.constant 4 : index
    %c0_61 = arith.constant 0 : index
    %c0_62 = arith.constant 0 : index
    %64 = vector.load %arg8[%c4_60, %c0_61, %c0_62] : memref<5x84x160xf32, #tpu.memory_space<vmem>>, vector<1x84x160xf32>
    %65 = vector.shape_cast %64 : vector<1x84x160xf32> to vector<84x160xf32>
    %cst_63 = arith.constant dense<0.000000e+00> : vector<10x160xf32>
    %66 = tpu.matmul %63, %65, %cst_63 {dimension_numbers = #tpu.dot_dimension_numbers<[1], [0], [0], [1], [0, 0, 1, 1], [], []>} : vector<10x84xf32>, vector<84x160xf32>, vector<10x160xf32> -> vector<10x160xf32>
    %67 = arith.addf %62, %66 : vector<10x160xf32>
    %c0_64 = arith.constant 0 : index
    %c0_65 = arith.constant 0 : index
    %68 = vector.load %arg9[%c0_64, %c0_65] : memref<1x160xf32, #tpu.memory_space<vmem>>, vector<1x160xf32>
    %69 = vector.broadcast %68 : vector<1x160xf32> to vector<10x160xf32>
    %70 = arith.addf %67, %69 : vector<10x160xf32>
    %cst_66 = arith.constant 0.000000e+00 : f32
    %71 = vector.broadcast %cst_66 : f32 to vector<10x160xf32>
    %72 = arith.maximumf %70, %71 : vector<10x160xf32>
    %c0_67 = arith.constant 0 : index
    %c0_68 = arith.constant 0 : index
    %73 = vector.load %arg10[%c0_67, %c0_68] : memref<160x80xf32, #tpu.memory_space<vmem>>, vector<160x80xf32>
    %cst_69 = arith.constant dense<0.000000e+00> : vector<10x80xf32>
    %74 = tpu.matmul %72, %73, %cst_69 {dimension_numbers = #tpu.dot_dimension_numbers<[1], [0], [0], [1], [0, 0, 1, 1], [], []>} : vector<10x160xf32>, vector<160x80xf32>, vector<10x80xf32> -> vector<10x80xf32>
    %c0_70 = arith.constant 0 : index
    %c0_71 = arith.constant 0 : index
    %75 = vector.load %arg11[%c0_70, %c0_71] : memref<160x80xf32, #tpu.memory_space<vmem>>, vector<160x80xf32>
    %cst_72 = arith.constant dense<0.000000e+00> : vector<10x80xf32>
    %76 = tpu.matmul %72, %75, %cst_72 {dimension_numbers = #tpu.dot_dimension_numbers<[1], [0], [0], [1], [0, 0, 1, 1], [], []>} : vector<10x160xf32>, vector<160x80xf32>, vector<10x80xf32> -> vector<10x80xf32>
    %77 = arith.maximumf %74, %76 : vector<10x80xf32>
    %c0_73 = arith.constant 0 : index
    %c0_74 = arith.constant 0 : index
    %78 = vector.load %arg12[%c0_73, %c0_74] : memref<5x10xf32, #tpu.memory_space<vmem>>, vector<5x10xf32>
    %cst_75 = arith.constant dense<0.000000e+00> : vector<5x80xf32>
    %79 = tpu.matmul %78, %77, %cst_75 {dimension_numbers = #tpu.dot_dimension_numbers<[1], [0], [0], [1], [0, 0, 1, 1], [], []>} : vector<5x10xf32>, vector<10x80xf32>, vector<5x80xf32> -> vector<5x80xf32>
    %c0_76 = arith.constant 0 : index
    %c0_77 = arith.constant 0 : index
    %80 = vector.load %arg13[%c0_76, %c0_77] : memref<5x10xf32, #tpu.memory_space<vmem>>, vector<5x10xf32>
    %cst_78 = arith.constant dense<0.000000e+00> : vector<5x80xf32>
    %81 = tpu.matmul %80, %77, %cst_78 {dimension_numbers = #tpu.dot_dimension_numbers<[1], [0], [0], [1], [0, 0, 1, 1], [], []>} : vector<5x10xf32>, vector<10x80xf32>, vector<5x80xf32> -> vector<5x80xf32>
    %82 = arith.maximumf %79, %81 : vector<5x80xf32>
    %c0_79 = arith.constant 0 : index
    %c0_80 = arith.constant 0 : index
    %83 = vector.load %arg15[%c0_79, %c0_80] : memref<1x120xf32, #tpu.memory_space<vmem>>, vector<1x120xf32>
    %84 = vector.extract_strided_slice %82 {offsets = [0, 0], sizes = [1, 80], strides = [1, 1]} : vector<5x80xf32> to vector<1x80xf32>
    %c0_81 = arith.constant 0 : index
    %c0_82 = arith.constant 0 : index
    %85 = vector.load %arg14[%c0_81, %c0_82] : memref<400x120xf32, #tpu.memory_space<vmem>>, vector<80x120xf32>
    %cst_83 = arith.constant dense<0.000000e+00> : vector<1x120xf32>
    %86 = tpu.matmul %84, %85, %cst_83 {dimension_numbers = #tpu.dot_dimension_numbers<[1], [0], [0], [1], [0, 0, 1, 1], [], []>} : vector<1x80xf32>, vector<80x120xf32>, vector<1x120xf32> -> vector<1x120xf32>
    %87 = arith.addf %83, %86 : vector<1x120xf32>
    %88 = vector.extract_strided_slice %82 {offsets = [1, 0], sizes = [1, 80], strides = [1, 1]} : vector<5x80xf32> to vector<1x80xf32>
    %c80 = arith.constant 80 : index
    %c0_84 = arith.constant 0 : index
    %89 = vector.load %arg14[%c80, %c0_84] : memref<400x120xf32, #tpu.memory_space<vmem>>, vector<80x120xf32>
    %cst_85 = arith.constant dense<0.000000e+00> : vector<1x120xf32>
    %90 = tpu.matmul %88, %89, %cst_85 {dimension_numbers = #tpu.dot_dimension_numbers<[1], [0], [0], [1], [0, 0, 1, 1], [], []>} : vector<1x80xf32>, vector<80x120xf32>, vector<1x120xf32> -> vector<1x120xf32>
    %91 = arith.addf %87, %90 : vector<1x120xf32>
    %92 = vector.extract_strided_slice %82 {offsets = [2, 0], sizes = [1, 80], strides = [1, 1]} : vector<5x80xf32> to vector<1x80xf32>
    %c160 = arith.constant 160 : index
    %c0_86 = arith.constant 0 : index
    %93 = vector.load %arg14[%c160, %c0_86] : memref<400x120xf32, #tpu.memory_space<vmem>>, vector<80x120xf32>
    %cst_87 = arith.constant dense<0.000000e+00> : vector<1x120xf32>
    %94 = tpu.matmul %92, %93, %cst_87 {dimension_numbers = #tpu.dot_dimension_numbers<[1], [0], [0], [1], [0, 0, 1, 1], [], []>} : vector<1x80xf32>, vector<80x120xf32>, vector<1x120xf32> -> vector<1x120xf32>
    %95 = arith.addf %91, %94 : vector<1x120xf32>
    %96 = vector.extract_strided_slice %82 {offsets = [3, 0], sizes = [1, 80], strides = [1, 1]} : vector<5x80xf32> to vector<1x80xf32>
    %c240 = arith.constant 240 : index
    %c0_88 = arith.constant 0 : index
    %97 = vector.load %arg14[%c240, %c0_88] : memref<400x120xf32, #tpu.memory_space<vmem>>, vector<80x120xf32>
    %cst_89 = arith.constant dense<0.000000e+00> : vector<1x120xf32>
    %98 = tpu.matmul %96, %97, %cst_89 {dimension_numbers = #tpu.dot_dimension_numbers<[1], [0], [0], [1], [0, 0, 1, 1], [], []>} : vector<1x80xf32>, vector<80x120xf32>, vector<1x120xf32> -> vector<1x120xf32>
    %99 = arith.addf %95, %98 : vector<1x120xf32>
    %100 = vector.extract_strided_slice %82 {offsets = [4, 0], sizes = [1, 80], strides = [1, 1]} : vector<5x80xf32> to vector<1x80xf32>
    %c320 = arith.constant 320 : index
    %c0_90 = arith.constant 0 : index
    %101 = vector.load %arg14[%c320, %c0_90] : memref<400x120xf32, #tpu.memory_space<vmem>>, vector<80x120xf32>
    %cst_91 = arith.constant dense<0.000000e+00> : vector<1x120xf32>
    %102 = tpu.matmul %100, %101, %cst_91 {dimension_numbers = #tpu.dot_dimension_numbers<[1], [0], [0], [1], [0, 0, 1, 1], [], []>} : vector<1x80xf32>, vector<80x120xf32>, vector<1x120xf32> -> vector<1x120xf32>
    %103 = arith.addf %99, %102 : vector<1x120xf32>
    %cst_92 = arith.constant 0.000000e+00 : f32
    %104 = vector.broadcast %cst_92 : f32 to vector<1x120xf32>
    %105 = arith.maximumf %103, %104 : vector<1x120xf32>
    %c0_93 = arith.constant 0 : index
    %c0_94 = arith.constant 0 : index
    %106 = vector.load %arg16[%c0_93, %c0_94] : memref<120x84xf32, #tpu.memory_space<vmem>>, vector<120x84xf32>
    %cst_95 = arith.constant dense<0.000000e+00> : vector<1x84xf32>
    %107 = tpu.matmul %105, %106, %cst_95 {dimension_numbers = #tpu.dot_dimension_numbers<[1], [0], [0], [1], [0, 0, 1, 1], [], []>} : vector<1x120xf32>, vector<120x84xf32>, vector<1x84xf32> -> vector<1x84xf32>
    %c0_96 = arith.constant 0 : index
    %c0_97 = arith.constant 0 : index
    %108 = vector.load %arg17[%c0_96, %c0_97] : memref<1x84xf32, #tpu.memory_space<vmem>>, vector<1x84xf32>
    %109 = arith.addf %107, %108 : vector<1x84xf32>
    %cst_98 = arith.constant 0.000000e+00 : f32
    %110 = vector.broadcast %cst_98 : f32 to vector<1x84xf32>
    %111 = arith.maximumf %109, %110 : vector<1x84xf32>
    %c0_99 = arith.constant 0 : index
    %c0_100 = arith.constant 0 : index
    %112 = vector.load %arg18[%c0_99, %c0_100] : memref<84x10xf32, #tpu.memory_space<vmem>>, vector<84x10xf32>
    %cst_101 = arith.constant dense<0.000000e+00> : vector<1x10xf32>
    %113 = tpu.matmul %111, %112, %cst_101 {dimension_numbers = #tpu.dot_dimension_numbers<[1], [0], [0], [1], [0, 0, 1, 1], [], []>} : vector<1x84xf32>, vector<84x10xf32>, vector<1x10xf32> -> vector<1x10xf32>
    %c0_102 = arith.constant 0 : index
    %c0_103 = arith.constant 0 : index
    %114 = vector.load %arg19[%c0_102, %c0_103] : memref<1x10xf32, #tpu.memory_space<vmem>>, vector<1x10xf32>
    %115 = arith.addf %113, %114 : vector<1x10xf32>
    %c0_104 = arith.constant 0 : index
    %c0_105 = arith.constant 0 : index
    %c0_106 = arith.constant 0 : index
    %116 = vector.load %arg20[%c0_104, %c0_105, %c0_106] : memref<1x1x10xf32, #tpu.memory_space<vmem>>, vector<1x1x10xf32>
    %117 = vector.shape_cast %116 : vector<1x1x10xf32> to vector<1x10xf32>
    %118 = vector.shape_cast %115 : vector<1x10xf32> to vector<1x1x10xf32>
    tpu.vector_store %arg20[%c0_104, %c0_105, %c0_106], %118 {strides = array<i32>} : memref<1x1x10xf32, #tpu.memory_space<vmem>>, vector<1x1x10xf32>,
    return
  }
  func.func @transform_0(%arg0: i32) -> (i32, i32, i32) {
    %c0_i32 = arith.constant 0 : i32
    %c0_i32_0 = arith.constant 0 : i32
    %c0_i32_1 = arith.constant 0 : i32
    return %arg0, %c0_i32, %c0_i32_0 : i32, i32, i32
  }
  func.func @transform_1(%arg0: i32) -> (i32, i32, i32) {
    %c0_i32 = arith.constant 0 : i32
    %c0_i32_0 = arith.constant 0 : i32
    %c0_i32_1 = arith.constant 0 : i32
    %c0_i32_2 = arith.constant 0 : i32
    return %c0_i32, %c0_i32_0, %c0_i32_1 : i32, i32, i32
  }
  func.func @transform_2(%arg0: i32) -> (i32, i32) {
    %c0_i32 = arith.constant 0 : i32
    %c0_i32_0 = arith.constant 0 : i32
    %c0_i32_1 = arith.constant 0 : i32
    return %c0_i32, %c0_i32_0 : i32, i32
  }
  func.func @transform_3(%arg0: i32) -> (i32, i32) {
    %c0_i32 = arith.constant 0 : i32
    %c0_i32_0 = arith.constant 0 : i32
    %c0_i32_1 = arith.constant 0 : i32
    return %c0_i32, %c0_i32_0 : i32, i32
  }
  func.func @transform_4(%arg0: i32) -> (i32, i32) {
    %c0_i32 = arith.constant 0 : i32
    %c0_i32_0 = arith.constant 0 : i32
    %c0_i32_1 = arith.constant 0 : i32
    return %c0_i32, %c0_i32_0 : i32, i32
  }
  func.func @transform_5(%arg0: i32) -> (i32, i32) {
    %c0_i32 = arith.constant 0 : i32
    %c0_i32_0 = arith.constant 0 : i32
    %c0_i32_1 = arith.constant 0 : i32
    return %c0_i32, %c0_i32_0 : i32, i32
  }
  func.func @transform_6(%arg0: i32) -> (i32, i32) {
    %c0_i32 = arith.constant 0 : i32
    %c0_i32_0 = arith.constant 0 : i32
    %c0_i32_1 = arith.constant 0 : i32
    return %c0_i32, %c0_i32_0 : i32, i32
  }
  func.func @transform_7(%arg0: i32) -> (i32, i32, i32) {
    %c0_i32 = arith.constant 0 : i32
    %c0_i32_0 = arith.constant 0 : i32
    %c0_i32_1 = arith.constant 0 : i32
    %c0_i32_2 = arith.constant 0 : i32
    return %c0_i32, %c0_i32_0, %c0_i32_1 : i32, i32, i32
  }
  func.func @transform_8(%arg0: i32) -> (i32, i32) {
    %c0_i32 = arith.constant 0 : i32
    %c0_i32_0 = arith.constant 0 : i32
    %c0_i32_1 = arith.constant 0 : i32
    return %c0_i32, %c0_i32_0 : i32, i32
  }
  func.func @transform_9(%arg0: i32) -> (i32, i32) {
    %c0_i32 = arith.constant 0 : i32
    %c0_i32_0 = arith.constant 0 : i32
    %c0_i32_1 = arith.constant 0 : i32
    return %c0_i32, %c0_i32_0 : i32, i32
  }
  func.func @transform_10(%arg0: i32) -> (i32, i32) {
    %c0_i32 = arith.constant 0 : i32
    %c0_i32_0 = arith.constant 0 : i32
    %c0_i32_1 = arith.constant 0 : i32
    return %c0_i32, %c0_i32_0 : i32, i32
  }
  func.func @transform_11(%arg0: i32) -> (i32, i32) {
    %c0_i32 = arith.constant 0 : i32
    %c0_i32_0 = arith.constant 0 : i32
    %c0_i32_1 = arith.constant 0 : i32
    return %c0_i32, %c0_i32_0 : i32, i32
  }
  func.func @transform_12(%arg0: i32) -> (i32, i32) {
    %c0_i32 = arith.constant 0 : i32
    %c0_i32_0 = arith.constant 0 : i32
    %c0_i32_1 = arith.constant 0 : i32
    return %c0_i32, %c0_i32_0 : i32, i32
  }
  func.func @transform_13(%arg0: i32) -> (i32, i32) {
    %c0_i32 = arith.constant 0 : i32
    %c0_i32_0 = arith.constant 0 : i32
    %c0_i32_1 = arith.constant 0 : i32
    return %c0_i32, %c0_i32_0 : i32, i32
  }
  func.func @transform_14(%arg0: i32) -> (i32, i32) {
    %c0_i32 = arith.constant 0 : i32
    %c0_i32_0 = arith.constant 0 : i32
    %c0_i32_1 = arith.constant 0 : i32
    return %c0_i32, %c0_i32_0 : i32, i32
  }
  func.func @transform_15(%arg0: i32) -> (i32, i32) {
    %c0_i32 = arith.constant 0 : i32
    %c0_i32_0 = arith.constant 0 : i32
    %c0_i32_1 = arith.constant 0 : i32
    return %c0_i32, %c0_i32_0 : i32, i32
  }
  func.func @transform_16(%arg0: i32) -> (i32, i32) {
    %c0_i32 = arith.constant 0 : i32
    %c0_i32_0 = arith.constant 0 : i32
    %c0_i32_1 = arith.constant 0 : i32
    return %c0_i32, %c0_i32_0 : i32, i32
  }
  func.func @transform_17(%arg0: i32) -> (i32, i32) {
    %c0_i32 = arith.constant 0 : i32
    %c0_i32_0 = arith.constant 0 : i32
    %c0_i32_1 = arith.constant 0 : i32
    return %c0_i32, %c0_i32_0 : i32, i32
  }
  func.func @transform_18(%arg0: i32) -> (i32, i32) {
    %c0_i32 = arith.constant 0 : i32
    %c0_i32_0 = arith.constant 0 : i32
    %c0_i32_1 = arith.constant 0 : i32
    return %c0_i32, %c0_i32_0 : i32, i32
  }
  func.func @transform_19(%arg0: i32) -> (i32, i32, i32) {
    %c0_i32 = arith.constant 0 : i32
    %c0_i32_0 = arith.constant 0 : i32
    %c0_i32_1 = arith.constant 0 : i32
    return %arg0, %c0_i32, %c0_i32_0 : i32, i32, i32
  }
}

</mosaic_0001>

<llo_original>
// kernel: lenet_forward.1
$region0: #{lenet_forward.1}
  #allocation0 [shape = 'u32[]', space=smem, size = 0x4, offset = 0x4, fixed_abs, tag = 'smem constant byte address 0x4 - core index']
  #allocation1 [shape = 'u32[144,128]{1,0:T(1,128)}', space=vmem, size = 0x12000, scoped, tag = 'internal scratch']
  %s0 = inlined_call_operand.vmem [shape: f32[2,32,96], index: 0, kind: input, shape index: {}]
  %s1 = inlined_call_operand.vmem [shape: f32[5,96,168], index: 1, kind: input, shape index: {}]
  %s2 = inlined_call_operand.vmem [shape: f32[1,168], index: 2, kind: input, shape index: {}]
  %s3 = inlined_call_operand.vmem [shape: f32[168,84], index: 3, kind: input, shape index: {}]
  %s4 = inlined_call_operand.vmem [shape: f32[168,84], index: 4, kind: input, shape index: {}]
  %s5 = inlined_call_operand.vmem [shape: f32[14,28], index: 5, kind: input, shape index: {}]
  %s6 = inlined_call_operand.vmem [shape: f32[14,28], index: 6, kind: input, shape index: {}]
  %s7 = inlined_call_operand.vmem [shape: f32[5,84,160], index: 7, kind: input, shape index: {}]
  %s8 = inlined_call_operand.vmem [shape: f32[1,160], index: 8, kind: input, shape index: {}]
  %s9 = inlined_call_operand.vmem [shape: f32[160,80], index: 9, kind: input, shape index: {}]
  %s10 = inlined_call_operand.vmem [shape: f32[160,80], index: 10, kind: input, shape index: {}]
  %s11 = inlined_call_operand.vmem [shape: f32[5,10], index: 11, kind: input, shape index: {}]
  %s12 = inlined_call_operand.vmem [shape: f32[5,10], index: 12, kind: input, shape index: {}]
  %s13 = inlined_call_operand.vmem [shape: f32[400,120], index: 13, kind: input, shape index: {}]
  %s14 = inlined_call_operand.vmem [shape: f32[1,120], index: 14, kind: input, shape index: {}]
  %s15 = inlined_call_operand.vmem [shape: f32[120,84], index: 15, kind: input, shape index: {}]
  %s16 = inlined_call_operand.vmem [shape: f32[1,84], index: 16, kind: input, shape index: {}]
  %s17 = inlined_call_operand.vmem [shape: f32[84,10], index: 17, kind: input, shape index: {}]
  %s18 = inlined_call_operand.vmem [shape: f32[1,10], index: 18, kind: input, shape index: {}]
  %s19 = inlined_call_operand.hbm [shape: f32[2,1,10], index: 19, kind: output, shape index: {}]
  %s20 = sld [smem:[#allocation0]]
  $region109: #{lenet_forward.1} parent=0
    _
  %s22 = ssub.s32 1, %s20
  %s23 = scalar_select 0, %s22, %s20
  $region1: #{lenet_forward.1} parent=0
    #allocation2 [shape = 'u8[1024]{0}', space=vmem, size = 0x400, scoped, tag = 'output window, operand 0']
    #allocation3 [shape = 's32[2]{0}', space=sflag, size = 0x8, scoped, tag = 'scoped memory for lenet_forward.1']
    %24 = vsyncpa [#allocation3], 0
    %s25 = scalar_lea.sflag [#allocation3], 1
    %26 = vsyncpa %s25, 0
    loop: start=0, step=1, limit=4
    $region2: #{lenet_forward.1} parent=1 // loop_pre_header
      _
    $region3: #{lenet_forward.1} parent=1 // loop_header
      %s28 = sphi 0, %s32
      %p29 = scmp.ge.s32.totalorder %s28, 4
      %s38 = sphi 0, %s40
      %s41 = sphi 0, %s38
      %s42 = sphi 0, %s41
      %s58 = sphi 0, %s42
      %s62 = sphi 0, %s62
      %s64 = sphi 0, %s62
      %s65 = sphi 0, %s64
      %s79 = sphi 0, %s65
      %s83 = sphi 0, %s83
      %s85 = sphi 0, %s83
      %s86 = sphi 0, %s85
      %s100 = sphi 0, %s86
      %s104 = sphi 0, %s104
      %s106 = sphi 0, %s104
      %s107 = sphi 0, %s106
      %s121 = sphi 0, %s107
      %s125 = sphi 0, %s125
      %s127 = sphi 0, %s125
      %s128 = sphi 0, %s127
      %s142 = sphi 0, %s128
      %s146 = sphi 0, %s146
      %s148 = sphi 0, %s146
      %s149 = sphi 0, %s148
      %s163 = sphi 0, %s149
      %s167 = sphi 0, %s167
      %s169 = sphi 0, %s167
      %s170 = sphi 0, %s169
      %s184 = sphi 0, %s170
      %s188 = sphi 0, %s188
      %s190 = sphi 0, %s188
      %s191 = sphi 0, %s190
      %s205 = sphi 0, %s191
      %s209 = sphi 0, %s209
      %s211 = sphi 0, %s209
      %s212 = sphi 0, %s211
      %s226 = sphi 0, %s212
      %s230 = sphi 0, %s230
      %s232 = sphi 0, %s230
      %s233 = sphi 0, %s232
      %s247 = sphi 0, %s233
      %s251 = sphi 0, %s251
      %s253 = sphi 0, %s251
      %s254 = sphi 0, %s253
      %s268 = sphi 0, %s254
      %s272 = sphi 0, %s272
      %s274 = sphi 0, %s272
      %s275 = sphi 0, %s274
      %s289 = sphi 0, %s275
      %s293 = sphi 0, %s293
      %s295 = sphi 0, %s293
      %s296 = sphi 0, %s295
      %s310 = sphi 0, %s296
      %s314 = sphi 0, %s314
      %s316 = sphi 0, %s314
      %s317 = sphi 0, %s316
      %s331 = sphi 0, %s317
      %s335 = sphi 0, %s335
      %s337 = sphi 0, %s335
      %s338 = sphi 0, %s337
      %s352 = sphi 0, %s338
      %s356 = sphi 0, %s356
      %s358 = sphi 0, %s356
      %s359 = sphi 0, %s358
      %s373 = sphi 0, %s359
      %s377 = sphi 0, %s377
      %s379 = sphi 0, %s377
      %s380 = sphi 0, %s379
      %s394 = sphi 0, %s380
      %s398 = sphi 0, %s398
      %s400 = sphi 0, %s398
      %s401 = sphi 0, %s400
      %s415 = sphi 0, %s401
      %s419 = sphi 0, %s419
      %s421 = sphi 0, %s419
      %s422 = sphi 0, %s421
      %s436 = sphi 0, %s422
      %s442 = sphi 0, %s444
      %s445 = sphi 0, %s442
      %s446 = sphi 0, %s445
      %s462 = sphi 0, %s446
    $region4: #{lenet_forward.1} parent=1 // loop_header_branch
      %31 = sbr.rel (%p29) target = $region8
    $region5: #{lenet_forward.1} parent=1 // loop_body
      %s33 = ssub.s32 %s28, 1
      %s34 = ssub.s32 %s28, 2
      %s35 = sadd.s32 %s28, 1
      %s36 = ssub.s32 %s28, %s35
      %p37 = scmp.eq.s32.totalorder %s36, 0
      %s39 = sadd.s32 %s38, 1
      %s40 = scalar_select %p37, %s38, %s39
      %p43 = pneg %p37
      %p44 = scmp.eq.s32.totalorder %s28, 1
      %p45 = por %p43, %p44
      %p46 = scmp.ne.s32.totalorder %s38, %s41
      %p47 = scmp.eq.s32.totalorder %s28, 0
      %p48 = por %p46, %p47
      %p49 = scmp.ne.s32.totalorder %s38, %s41
      %p50 = scmp.eq.s32.totalorder %s33, 1
      %p51 = por %p49, %p50
      %p52 = scmp.ne.s32.totalorder %s41, %s42
      %p53 = scmp.eq.s32.totalorder %s33, 0
      %p54 = por %p52, %p53
      %p55 = scmp.ne.s32.totalorder %s41, %s42
      %p56 = scmp.eq.s32.totalorder %s34, 1
      %p57 = por %p55, %p56
      %p59 = scmp.ne.s32.totalorder %s42, %s58
      %p60 = scmp.eq.s32.totalorder %s34, 0
      %p61 = por %p59, %p60
      %s63 = sadd.s32 %s62, 1
      %p66 = scmp.eq.s32.totalorder %s28, 1
      %p67 = scmp.ne.s32.totalorder %s62, %s64
      %p68 = scmp.eq.s32.totalorder %s28, 0
      %p69 = por %p67, %p68
      %p70 = scmp.ne.s32.totalorder %s62, %s64
      %p71 = scmp.eq.s32.totalorder %s33, 1
      %p72 = por %p70, %p71
      %p73 = scmp.ne.s32.totalorder %s64, %s65
      %p74 = scmp.eq.s32.totalorder %s33, 0
      %p75 = por %p73, %p74
      %p76 = scmp.ne.s32.totalorder %s64, %s65
      %p77 = scmp.eq.s32.totalorder %s34, 1
      %p78 = por %p76, %p77
      %p80 = scmp.ne.s32.totalorder %s65, %s79
      %p81 = scmp.eq.s32.totalorder %s34, 0
      %p82 = por %p80, %p81
      %s84 = sadd.s32 %s83, 1
      %p87 = scmp.eq.s32.totalorder %s28, 1
      %p88 = scmp.ne.s32.totalorder %s83, %s85
      %p89 = scmp.eq.s32.totalorder %s28, 0
      %p90 = por %p88, %p89
      %p91 = scmp.ne.s32.totalorder %s83, %s85
      %p92 = scmp.eq.s32.totalorder %s33, 1
      %p93 = por %p91, %p92
      %p94 = scmp.ne.s32.totalorder %s85, %s86
      %p95 = scmp.eq.s32.totalorder %s33, 0
      %p96 = por %p94, %p95
      %p97 = scmp.ne.s32.totalorder %s85, %s86
      %p98 = scmp.eq.s32.totalorder %s34, 1
      %p99 = por %p97, %p98
      %p101 = scmp.ne.s32.totalorder %s86, %s100
      %p102 = scmp.eq.s32.totalorder %s34, 0
      %p103 = por %p101, %p102
      %s105 = sadd.s32 %s104, 1
      %p108 = scmp.eq.s32.totalorder %s28, 1
      %p109 = scmp.ne.s32.totalorder %s104, %s106
      %p110 = scmp.eq.s32.totalorder %s28, 0
      %p111 = por %p109, %p110
      %p112 = scmp.ne.s32.totalorder %s104, %s106
      %p113 = scmp.eq.s32.totalorder %s33, 1
      %p114 = por %p112, %p113
      %p115 = scmp.ne.s32.totalorder %s106, %s107
      %p116 = scmp.eq.s32.totalorder %s33, 0
      %p117 = por %p115, %p116
      %p118 = scmp.ne.s32.totalorder %s106, %s107
      %p119 = scmp.eq.s32.totalorder %s34, 1
      %p120 = por %p118, %p119
      %p122 = scmp.ne.s32.totalorder %s107, %s121
      %p123 = scmp.eq.s32.totalorder %s34, 0
      %p124 = por %p122, %p123
      %s126 = sadd.s32 %s125, 1
      %p129 = scmp.eq.s32.totalorder %s28, 1
      %p130 = scmp.ne.s32.totalorder %s125, %s127
      %p131 = scmp.eq.s32.totalorder %s28, 0
      %p132 = por %p130, %p131
      %p133 = scmp.ne.s32.totalorder %s125, %s127
      %p134 = scmp.eq.s32.totalorder %s33, 1
      %p135 = por %p133, %p134
      %p136 = scmp.ne.s32.totalorder %s127, %s128
      %p137 = scmp.eq.s32.totalorder %s33, 0
      %p138 = por %p136, %p137
      %p139 = scmp.ne.s32.totalorder %s127, %s128
      %p140 = scmp.eq.s32.totalorder %s34, 1
      %p141 = por %p139, %p140
      %p143 = scmp.ne.s32.totalorder %s128, %s142
      %p144 = scmp.eq.s32.totalorder %s34, 0
      %p145 = por %p143, %p144
      %s147 = sadd.s32 %s146, 1
      %p150 = scmp.eq.s32.totalorder %s28, 1
      %p151 = scmp.ne.s32.totalorder %s146, %s148
      %p152 = scmp.eq.s32.totalorder %s28, 0
      %p153 = por %p151, %p152
      %p154 = scmp.ne.s32.totalorder %s146, %s148
      %p155 = scmp.eq.s32.totalorder %s33, 1
      %p156 = por %p154, %p155
      %p157 = scmp.ne.s32.totalorder %s148, %s149
      %p158 = scmp.eq.s32.totalorder %s33, 0
      %p159 = por %p157, %p158
      %p160 = scmp.ne.s32.totalorder %s148, %s149
      %p161 = scmp.eq.s32.totalorder %s34, 1
      %p162 = por %p160, %p161
      %p164 = scmp.ne.s32.totalorder %s149, %s163
      %p165 = scmp.eq.s32.totalorder %s34, 0
      %p166 = por %p164, %p165
      %s168 = sadd.s32 %s167, 1
      %p171 = scmp.eq.s32.totalorder %s28, 1
      %p172 = scmp.ne.s32.totalorder %s167, %s169
      %p173 = scmp.eq.s32.totalorder %s28, 0
      %p174 = por %p172, %p173
      %p175 = scmp.ne.s32.totalorder %s167, %s169
      %p176 = scmp.eq.s32.totalorder %s33, 1
      %p177 = por %p175, %p176
      %p178 = scmp.ne.s32.totalorder %s169, %s170
      %p179 = scmp.eq.s32.totalorder %s33, 0
      %p180 = por %p178, %p179
      %p181 = scmp.ne.s32.totalorder %s169, %s170
      %p182 = scmp.eq.s32.totalorder %s34, 1
      %p183 = por %p181, %p182
      %p185 = scmp.ne.s32.totalorder %s170, %s184
      %p186 = scmp.eq.s32.totalorder %s34, 0
      %p187 = por %p185, %p186
      %s189 = sadd.s32 %s188, 1
      %p192 = scmp.eq.s32.totalorder %s28, 1
      %p193 = scmp.ne.s32.totalorder %s188, %s190
      %p194 = scmp.eq.s32.totalorder %s28, 0
      %p195 = por %p193, %p194
      %p196 = scmp.ne.s32.totalorder %s188, %s190
      %p197 = scmp.eq.s32.totalorder %s33, 1
      %p198 = por %p196, %p197
      %p199 = scmp.ne.s32.totalorder %s190, %s191
      %p200 = scmp.eq.s32.totalorder %s33, 0
      %p201 = por %p199, %p200
      %p202 = scmp.ne.s32.totalorder %s190, %s191
      %p203 = scmp.eq.s32.totalorder %s34, 1
      %p204 = por %p202, %p203
      %p206 = scmp.ne.s32.totalorder %s191, %s205
      %p207 = scmp.eq.s32.totalorder %s34, 0
      %p208 = por %p206, %p207
      %s210 = sadd.s32 %s209, 1
      %p213 = scmp.eq.s32.totalorder %s28, 1
      %p214 = scmp.ne.s32.totalorder %s209, %s211
      %p215 = scmp.eq.s32.totalorder %s28, 0
      %p216 = por %p214, %p215
      %p217 = scmp.ne.s32.totalorder %s209, %s211
      %p218 = scmp.eq.s32.totalorder %s33, 1
      %p219 = por %p217, %p218
      %p220 = scmp.ne.s32.totalorder %s211, %s212
      %p221 = scmp.eq.s32.totalorder %s33, 0
      %p222 = por %p220, %p221
      %p223 = scmp.ne.s32.totalorder %s211, %s212
      %p224 = scmp.eq.s32.totalorder %s34, 1
      %p225 = por %p223, %p224
      %p227 = scmp.ne.s32.totalorder %s212, %s226
      %p228 = scmp.eq.s32.totalorder %s34, 0
      %p229 = por %p227, %p228
      %s231 = sadd.s32 %s230, 1
      %p234 = scmp.eq.s32.totalorder %s28, 1
      %p235 = scmp.ne.s32.totalorder %s230, %s232
      %p236 = scmp.eq.s32.totalorder %s28, 0
      %p237 = por %p235, %p236
      %p238 = scmp.ne.s32.totalorder %s230, %s232
      %p239 = scmp.eq.s32.totalorder %s33, 1
      %p240 = por %p238, %p239
      %p241 = scmp.ne.s32.totalorder %s232, %s233
      %p242 = scmp.eq.s32.totalorder %s33, 0
      %p243 = por %p241, %p242
      %p244 = scmp.ne.s32.totalorder %s232, %s233
      %p245 = scmp.eq.s32.totalorder %s34, 1
      %p246 = por %p244, %p245
      %p248 = scmp.ne.s32.totalorder %s233, %s247
      %p249 = scmp.eq.s32.totalorder %s34, 0
      %p250 = por %p248, %p249
      %s252 = sadd.s32 %s251, 1
      %p255 = scmp.eq.s32.totalorder %s28, 1
      %p256 = scmp.ne.s32.totalorder %s251, %s253
      %p257 = scmp.eq.s32.totalorder %s28, 0
      %p258 = por %p256, %p257
      %p259 = scmp.ne.s32.totalorder %s251, %s253
      %p260 = scmp.eq.s32.totalorder %s33, 1
      %p261 = por %p259, %p260
      %p262 = scmp.ne.s32.totalorder %s253, %s254
      %p263 = scmp.eq.s32.totalorder %s33, 0
      %p264 = por %p262, %p263
      %p265 = scmp.ne.s32.totalorder %s253, %s254
      %p266 = scmp.eq.s32.totalorder %s34, 1
      %p267 = por %p265, %p266
      %p269 = scmp.ne.s32.totalorder %s254, %s268
      %p270 = scmp.eq.s32.totalorder %s34, 0
      %p271 = por %p269, %p270
      %s273 = sadd.s32 %s272, 1
      %p276 = scmp.eq.s32.totalorder %s28, 1
      %p277 = scmp.ne.s32.totalorder %s272, %s274
      %p278 = scmp.eq.s32.totalorder %s28, 0
      %p279 = por %p277, %p278
      %p280 = scmp.ne.s32.totalorder %s272, %s274
      %p281 = scmp.eq.s32.totalorder %s33, 1
      %p282 = por %p280, %p281
      %p283 = scmp.ne.s32.totalorder %s274, %s275
      %p284 = scmp.eq.s32.totalorder %s33, 0
      %p285 = por %p283, %p284
      %p286 = scmp.ne.s32.totalorder %s274, %s275
      %p287 = scmp.eq.s32.totalorder %s34, 1
      %p288 = por %p286, %p287
      %p290 = scmp.ne.s32.totalorder %s275, %s289
      %p291 = scmp.eq.s32.totalorder %s34, 0
      %p292 = por %p290, %p291
      %s294 = sadd.s32 %s293, 1
      %p297 = scmp.eq.s32.totalorder %s28, 1
      %p298 = scmp.ne.s32.totalorder %s293, %s295
      %p299 = scmp.eq.s32.totalorder %s28, 0
      %p300 = por %p298, %p299
      %p301 = scmp.ne.s32.totalorder %s293, %s295
      %p302 = scmp.eq.s32.totalorder %s33, 1
      %p303 = por %p301, %p302
      %p304 = scmp.ne.s32.totalorder %s295, %s296
      %p305 = scmp.eq.s32.totalorder %s33, 0
      %p306 = por %p304, %p305
      %p307 = scmp.ne.s32.totalorder %s295, %s296
      %p308 = scmp.eq.s32.totalorder %s34, 1
      %p309 = por %p307, %p308
      %p311 = scmp.ne.s32.totalorder %s296, %s310
      %p312 = scmp.eq.s32.totalorder %s34, 0
      %p313 = por %p311, %p312
      %s315 = sadd.s32 %s314, 1
      %p318 = scmp.eq.s32.totalorder %s28, 1
      %p319 = scmp.ne.s32.totalorder %s314, %s316
      %p320 = scmp.eq.s32.totalorder %s28, 0
      %p321 = por %p319, %p320
      %p322 = scmp.ne.s32.totalorder %s314, %s316
      %p323 = scmp.eq.s32.totalorder %s33, 1
      %p324 = por %p322, %p323
      %p325 = scmp.ne.s32.totalorder %s316, %s317
      %p326 = scmp.eq.s32.totalorder %s33, 0
      %p327 = por %p325, %p326
      %p328 = scmp.ne.s32.totalorder %s316, %s317
      %p329 = scmp.eq.s32.totalorder %s34, 1
      %p330 = por %p328, %p329
      %p332 = scmp.ne.s32.totalorder %s317, %s331
      %p333 = scmp.eq.s32.totalorder %s34, 0
      %p334 = por %p332, %p333
      %s336 = sadd.s32 %s335, 1
      %p339 = scmp.eq.s32.totalorder %s28, 1
      %p340 = scmp.ne.s32.totalorder %s335, %s337
      %p341 = scmp.eq.s32.totalorder %s28, 0
      %p342 = por %p340, %p341
      %p343 = scmp.ne.s32.totalorder %s335, %s337
      %p344 = scmp.eq.s32.totalorder %s33, 1
      %p345 = por %p343, %p344
      %p346 = scmp.ne.s32.totalorder %s337, %s338
      %p347 = scmp.eq.s32.totalorder %s33, 0
      %p348 = por %p346, %p347
      %p349 = scmp.ne.s32.totalorder %s337, %s338
      %p350 = scmp.eq.s32.totalorder %s34, 1
      %p351 = por %p349, %p350
      %p353 = scmp.ne.s32.totalorder %s338, %s352
      %p354 = scmp.eq.s32.totalorder %s34, 0
      %p355 = por %p353, %p354
      %s357 = sadd.s32 %s356, 1
      %p360 = scmp.eq.s32.totalorder %s28, 1
      %p361 = scmp.ne.s32.totalorder %s356, %s358
      %p362 = scmp.eq.s32.totalorder %s28, 0
      %p363 = por %p361, %p362
      %p364 = scmp.ne.s32.totalorder %s356, %s358
      %p365 = scmp.eq.s32.totalorder %s33, 1
      %p366 = por %p364, %p365
      %p367 = scmp.ne.s32.totalorder %s358, %s359
      %p368 = scmp.eq.s32.totalorder %s33, 0
      %p369 = por %p367, %p368
      %p370 = scmp.ne.s32.totalorder %s358, %s359
      %p371 = scmp.eq.s32.totalorder %s34, 1
      %p372 = por %p370, %p371
      %p374 = scmp.ne.s32.totalorder %s359, %s373
      %p375 = scmp.eq.s32.totalorder %s34, 0
      %p376 = por %p374, %p375
      %s378 = sadd.s32 %s377, 1
      %p381 = scmp.eq.s32.totalorder %s28, 1
      %p382 = scmp.ne.s32.totalorder %s377, %s379
      %p383 = scmp.eq.s32.totalorder %s28, 0
      %p384 = por %p382, %p383
      %p385 = scmp.ne.s32.totalorder %s377, %s379
      %p386 = scmp.eq.s32.totalorder %s33, 1
      %p387 = por %p385, %p386
      %p388 = scmp.ne.s32.totalorder %s379, %s380
      %p389 = scmp.eq.s32.totalorder %s33, 0
      %p390 = por %p388, %p389
      %p391 = scmp.ne.s32.totalorder %s379, %s380
      %p392 = scmp.eq.s32.totalorder %s34, 1
      %p393 = por %p391, %p392
      %p395 = scmp.ne.s32.totalorder %s380, %s394
      %p396 = scmp.eq.s32.totalorder %s34, 0
      %p397 = por %p395, %p396
      %s399 = sadd.s32 %s398, 1
      %p402 = scmp.eq.s32.totalorder %s28, 1
      %p403 = scmp.ne.s32.totalorder %s398, %s400
      %p404 = scmp.eq.s32.totalorder %s28, 0
      %p405 = por %p403, %p404
      %p406 = scmp.ne.s32.totalorder %s398, %s400
      %p407 = scmp.eq.s32.totalorder %s33, 1
      %p408 = por %p406, %p407
      %p409 = scmp.ne.s32.totalorder %s400, %s401
      %p410 = scmp.eq.s32.totalorder %s33, 0
      %p411 = por %p409, %p410
      %p412 = scmp.ne.s32.totalorder %s400, %s401
      %p413 = scmp.eq.s32.totalorder %s34, 1
      %p414 = por %p412, %p413
      %p416 = scmp.ne.s32.totalorder %s401, %s415
      %p417 = scmp.eq.s32.totalorder %s34, 0
      %p418 = por %p416, %p417
      %s420 = sadd.s32 %s419, 1
      %p423 = scmp.eq.s32.totalorder %s28, 1
      %p424 = scmp.ne.s32.totalorder %s419, %s421
      %p425 = scmp.eq.s32.totalorder %s28, 0
      %p426 = por %p424, %p425
      %p427 = scmp.ne.s32.totalorder %s419, %s421
      %p428 = scmp.eq.s32.totalorder %s33, 1
      %p429 = por %p427, %p428
      %p430 = scmp.ne.s32.totalorder %s421, %s422
      %p431 = scmp.eq.s32.totalorder %s33, 0
      %p432 = por %p430, %p431
      %p433 = scmp.ne.s32.totalorder %s421, %s422
      %p434 = scmp.eq.s32.totalorder %s34, 1
      %p435 = por %p433, %p434
      %p437 = scmp.ne.s32.totalorder %s422, %s436
      %p438 = scmp.eq.s32.totalorder %s34, 0
      %p439 = por %p437, %p438
      %s440 = ssub.s32 %s28, %s35
      %p441 = scmp.eq.s32.totalorder %s440, 0
      %s443 = sadd.s32 %s442, 1
      %s444 = scalar_select %p441, %s442, %s443
      %p447 = pneg %p441
      %p448 = scmp.eq.s32.totalorder %s28, 1
      %p449 = por %p447, %p448
      %p450 = scmp.ne.s32.totalorder %s442, %s445
      %p451 = scmp.eq.s32.totalorder %s28, 0
      %p452 = por %p450, %p451
      %p453 = scmp.ne.s32.totalorder %s442, %s445
      %p454 = scmp.eq.s32.totalorder %s33, 1
      %p455 = por %p453, %p454
      %p456 = scmp.ne.s32.totalorder %s445, %s446
      %p457 = scmp.eq.s32.totalorder %s33, 0
      %p458 = por %p456, %p457
      %p459 = scmp.ne.s32.totalorder %s445, %s446
      %p460 = scmp.eq.s32.totalorder %s34, 1
      %p461 = por %p459, %p460
      %p463 = scmp.ne.s32.totalorder %s446, %s462
      %p464 = scmp.eq.s32.totalorder %s34, 0
      %p465 = por %p463, %p464
      %p466 = scmp.le.s32.totalorder 1, %s28
      %p467 = scmp.lt.s32.totalorder %s28, 3
      %p468 = pnand %p466, %p467
      %p469 = pneg %p468
      // Predicated region
      $region9: #{lenet_forward.1} parent=5 // pred_check
        _
      $region10: #{lenet_forward.1} parent=5 // pred_check_branch
        %471 = sbr.rel (%p468) target = $region12
      $region11: #{lenet_forward.1} parent=5 // pred_region
        %s472 = ssub.s32 %s28, 1
        // Predicated region
        $region13: #{lenet_forward.1} parent=11 // pred_check
          %p473 = pneg %p75
        $region14: #{lenet_forward.1} parent=11 // pred_check_branch
          %475 = sbr.rel (%p473) target = $region16
        $region15: #{lenet_forward.1} parent=11 // pred_region
          _
        $region16: #{lenet_forward.1} parent=11 // pred_fallthru
          _
        // Predicated region
        $region17: #{lenet_forward.1} parent=11 // pred_check
          %p476 = pneg %p96
        $region18: #{lenet_forward.1} parent=11 // pred_check_branch
          %478 = sbr.rel (%p476) target = $region20
        $region19: #{lenet_forward.1} parent=11 // pred_region
          _
        $region20: #{lenet_forward.1} parent=11 // pred_fallthru
          _
        // Predicated region
        $region21: #{lenet_forward.1} parent=11 // pred_check
          %p479 = pneg %p117
        $region22: #{lenet_forward.1} parent=11 // pred_check_branch
          %481 = sbr.rel (%p479) target = $region24
        $region23: #{lenet_forward.1} parent=11 // pred_region
          _
        $region24: #{lenet_forward.1} parent=11 // pred_fallthru
          _
        // Predicated region
        $region25: #{lenet_forward.1} parent=11 // pred_check
          %p482 = pneg %p138
        $region26: #{lenet_forward.1} parent=11 // pred_check_branch
          %484 = sbr.rel (%p482) target = $region28
        $region27: #{lenet_forward.1} parent=11 // pred_region
          _
        $region28: #{lenet_forward.1} parent=11 // pred_fallthru
          _
        // Predicated region
        $region29: #{lenet_forward.1} parent=11 // pred_check
          %p485 = pneg %p159
        $region30: #{lenet_forward.1} parent=11 // pred_check_branch
          %487 = sbr.rel (%p485) target = $region32
        $region31: #{lenet_forward.1} parent=11 // pred_region
          _
        $region32: #{lenet_forward.1} parent=11 // pred_fallthru
          _
        // Predicated region
        $region33: #{lenet_forward.1} parent=11 // pred_check
          %p488 = pneg %p180
        $region34: #{lenet_forward.1} parent=11 // pred_check_branch
          %490 = sbr.rel (%p488) target = $region36
        $region35: #{lenet_forward.1} parent=11 // pred_region
          _
        $region36: #{lenet_forward.1} parent=11 // pred_fallthru
          _
        // Predicated region
        $region37: #{lenet_forward.1} parent=11 // pred_check
          %p491 = pneg %p201
        $region38: #{lenet_forward.1} parent=11 // pred_check_branch
          %493 = sbr.rel (%p491) target = $region40
        $region39: #{lenet_forward.1} parent=11 // pred_region
          _
        $region40: #{lenet_forward.1} parent=11 // pred_fallthru
          _
        // Predicated region
        $region41: #{lenet_forward.1} parent=11 // pred_check
          %p494 = pneg %p222
        $region42: #{lenet_forward.1} parent=11 // pred_check_branch
          %496 = sbr.rel (%p494) target = $region44
        $region43: #{lenet_forward.1} parent=11 // pred_region
          _
        $region44: #{lenet_forward.1} parent=11 // pred_fallthru
          _
        // Predicated region
        $region45: #{lenet_forward.1} parent=11 // pred_check
          %p497 = pneg %p243
        $region46: #{lenet_forward.1} parent=11 // pred_check_branch
          %499 = sbr.rel (%p497) target = $region48
        $region47: #{lenet_forward.1} parent=11 // pred_region
          _
        $region48: #{lenet_forward.1} parent=11 // pred_fallthru
          _
        // Predicated region
        $region49: #{lenet_forward.1} parent=11 // pred_check
          %p500 = pneg %p264
        $region50: #{lenet_forward.1} parent=11 // pred_check_branch
          %502 = sbr.rel (%p500) target = $region52
        $region51: #{lenet_forward.1} parent=11 // pred_region
          _
        $region52: #{lenet_forward.1} parent=11 // pred_fallthru
          _
        // Predicated region
        $region53: #{lenet_forward.1} parent=11 // pred_check
          %p503 = pneg %p285
        $region54: #{lenet_forward.1} parent=11 // pred_check_branch
          %505 = sbr.rel (%p503) target = $region56
        $region55: #{lenet_forward.1} parent=11 // pred_region
          _
        $region56: #{lenet_forward.1} parent=11 // pred_fallthru
          _
        // Predicated region
        $region57: #{lenet_forward.1} parent=11 // pred_check
          %p506 = pneg %p306
        $region58: #{lenet_forward.1} parent=11 // pred_check_branch
          %508 = sbr.rel (%p506) target = $region60
        $region59: #{lenet_forward.1} parent=11 // pred_region
          _
        $region60: #{lenet_forward.1} parent=11 // pred_fallthru
          _
        // Predicated region
        $region61: #{lenet_forward.1} parent=11 // pred_check
          %p509 = pneg %p327
        $region62: #{lenet_forward.1} parent=11 // pred_check_branch
          %511 = sbr.rel (%p509) target = $region64
        $region63: #{lenet_forward.1} parent=11 // pred_region
          _
        $region64: #{lenet_forward.1} parent=11 // pred_fallthru
          _
        // Predicated region
        $region65: #{lenet_forward.1} parent=11 // pred_check
          %p512 = pneg %p348
        $region66: #{lenet_forward.1} parent=11 // pred_check_branch
          %514 = sbr.rel (%p512) target = $region68
        $region67: #{lenet_forward.1} parent=11 // pred_region
          _
        $region68: #{lenet_forward.1} parent=11 // pred_fallthru
          _
        // Predicated region
        $region69: #{lenet_forward.1} parent=11 // pred_check
          %p515 = pneg %p369
        $region70: #{lenet_forward.1} parent=11 // pred_check_branch
          %517 = sbr.rel (%p515) target = $region72
        $region71: #{lenet_forward.1} parent=11 // pred_region
          _
        $region72: #{lenet_forward.1} parent=11 // pred_fallthru
          _
        // Predicated region
        $region73: #{lenet_forward.1} parent=11 // pred_check
          %p518 = pneg %p390
        $region74: #{lenet_forward.1} parent=11 // pred_check_branch
          %520 = sbr.rel (%p518) target = $region76
        $region75: #{lenet_forward.1} parent=11 // pred_region
          _
        $region76: #{lenet_forward.1} parent=11 // pred_fallthru
          _
        // Predicated region
        $region77: #{lenet_forward.1} parent=11 // pred_check
          %p521 = pneg %p411
        $region78: #{lenet_forward.1} parent=11 // pred_check_branch
          %523 = sbr.rel (%p521) target = $region80
        $region79: #{lenet_forward.1} parent=11 // pred_region
          _
        $region80: #{lenet_forward.1} parent=11 // pred_fallthru
          _
        // Predicated region
        $region81: #{lenet_forward.1} parent=11 // pred_check
          %p524 = pneg %p432
        $region82: #{lenet_forward.1} parent=11 // pred_check_branch
          %526 = sbr.rel (%p524) target = $region84
        $region83: #{lenet_forward.1} parent=11 // pred_region
          _
        $region84: #{lenet_forward.1} parent=11 // pred_fallthru
          _
      $region12: #{lenet_forward.1} parent=5 // pred_fallthru
        _
      %p527 = scmp.lt.s32.totalorder %s28, 2
      // Predicated region
      $region85: #{lenet_forward.1} parent=5 // pred_check
        %p528 = pneg %p527
      $region86: #{lenet_forward.1} parent=5 // pred_check_branch
        %530 = sbr.rel (%p528) target = $region88
      $region87: #{lenet_forward.1} parent=5 // pred_region
        // Predicated region
        $region89: #{lenet_forward.1} parent=87 // pred_check
          %p531 = pneg %p48
        $region90: #{lenet_forward.1} parent=87 // pred_check_branch
          %533 = sbr.rel (%p531) target = $region92
        $region91: #{lenet_forward.1} parent=87 // pred_region
          %p534 = scmp.lt.s32.totalorder %s28, 1
          %s535 = scalar_select %p534, %s28, 1
          %s536 = smul.addr %s535, 4
          %s537 = smul.addr %s536, 8
          %s538 = scalar_lea.vmem %s0, %s537
        $region92: #{lenet_forward.1} parent=87 // pred_fallthru
          _
      $region88: #{lenet_forward.1} parent=5 // pred_fallthru
        _
      %p539 = scmp.le.s32.totalorder 1, %s28
      %p540 = scmp.lt.s32.totalorder %s28, 3
      %p541 = pnand %p539, %p540
      %p542 = pneg %p541
      // Predicated region
      $region93: #{lenet_forward.1} parent=5 // pred_check
        _
      $region94: #{lenet_forward.1} parent=5 // pred_check_branch
        %544 = sbr.rel (%p541) target = $region96
      $region95: #{lenet_forward.1} parent=5 // pred_region
        %s545 = ssub.s32 %s28, 1
        %p546 = scmp.lt.s32.totalorder %s33, 1
        %s547 = scalar_select %p546, %s33, 1
        %s548 = smul.addr %s547, 4
        %s549 = smul.addr %s548, 8
        %s550 = scalar_lea.vmem %s0, %s549
        %p551 = pneg %p54
        %p552 = pneg %p51
        %p553 = pneg %p75
        %p554 = pneg %p72
        %p555 = pneg %p96
        %p556 = pneg %p93
        %p557 = pneg %p117
        %p558 = pneg %p114
        %p559 = pneg %p138
        %p560 = pneg %p135
        %p561 = pneg %p159
        %p562 = pneg %p156
        %p563 = pneg %p180
        %p564 = pneg %p177
        %p565 = pneg %p201
        %p566 = pneg %p198
        %p567 = pneg %p222
        %p568 = pneg %p219
        %p569 = pneg %p243
        %p570 = pneg %p240
        %p571 = pneg %p264
        %p572 = pneg %p261
        %p573 = pneg %p285
        %p574 = pneg %p282
        %p575 = pneg %p306
        %p576 = pneg %p303
        %p577 = pneg %p327
        %p578 = pneg %p324
        %p579 = pneg %p348
        %p580 = pneg %p345
        %p581 = pneg %p369
        %p582 = pneg %p366
        %p583 = pneg %p390
        %p584 = pneg %p387
        %p585 = pneg %p411
        %p586 = pneg %p408
        %p587 = pneg %p432
        %p588 = pneg %p429
        %p589 = pneg %p458
        %p590 = pneg %p455
        %s591 = sand.u32 %s445, 1
        %s592 = scalar_lea.sflag [#allocation3], %s591
        %s593 = sand.u32 %s445, 1
        %s594 = scalar_lea.vmem [#allocation2], %s593
        %p595 = scmp.lt.s32.totalorder %s33, 1
        %s596 = scalar_select %p595, %s33, 1
        %s597 = smul.addr %s596, 4
        %s598 = smul.addr %s597, 8
        %s599 = scalar_lea.vmem %s0, %s598
        %v600 = vld [vmem:[%s599] sm:$0xff]
        %v601 = vld [vmem:[%s599 + $0x8] sm:$0xff]
        %v602 = vld [vmem:[%s599 + $0x10] sm:$0xff]
        %v603 = vld [vmem:[%s599 + $0x18] sm:$0xf]
        %v604 = vld [vmem:[%s1] sm:$0xff]
        %v605 = vld [vmem:[%s1 + $0x8] sm:$0xff]
        %v606 = vld [vmem:[%s1 + $0x10] sm:$0xff]
        %v607 = vld [vmem:[%s1 + $0x18] sm:$0xff]
        %v608 = vld [vmem:[%s1 + $0x20] sm:$0xff]
        %v609 = vld [vmem:[%s1 + $0x28] sm:$0xff]
        %v610 = vld [vmem:[%s1 + $0x30] sm:$0xff]
        %v611 = vld [vmem:[%s1 + $0x38] sm:$0xff]
        %v612 = vld [vmem:[%s1 + $0x40] sm:$0xff]
        %v613 = vld [vmem:[%s1 + $0x48] sm:$0xff]
        %v614 = vld [vmem:[%s1 + $0x50] sm:$0xff]
        %v615 = vld [vmem:[%s1 + $0x58] sm:$0xff]
        %v616 = vld [vmem:[%s1 + $0x60] sm:$0xff]
        %v617 = vld [vmem:[%s1 + $0x68] sm:$0xff]
        %v618 = vld [vmem:[%s1 + $0x70] sm:$0xff]
        %v619 = vld [vmem:[%s1 + $0x78] sm:$0xff]
        %v620 = vld [vmem:[%s1 + $0x80] sm:$0xff]
        %v621 = vld [vmem:[%s1 + $0x88] sm:$0xff]
        %v622 = vld [vmem:[%s1 + $0x90] sm:$0xff]
        %v623 = vld [vmem:[%s1 + $0x98] sm:$0xff]
        %v624 = vld [vmem:[%s1 + $0xa0] sm:$0xff]
        %v625 = vld [vmem:[%s1 + $0xa8] sm:$0xff]
        %v626 = vld [vmem:[%s1 + $0xb0] sm:$0xff]
        %v627 = vld [vmem:[%s1 + $0xb8] sm:$0xff]
        %v628 = vld [vmem:[%s599 + $0x1] sm:$0xff]
        %v629 = vld [vmem:[%s599 + $0x9] sm:$0xff]
        %v630 = vld [vmem:[%s599 + $0x11] sm:$0xff]
        %v631 = vld [vmem:[%s599 + $0x19] sm:$0xf]
        %s632 = scalar_lea.vmem %s1, 192
        %v633 = vld [vmem:[%s632] sm:$0xff]
        %v634 = vld [vmem:[%s632 + $0x8] sm:$0xff]
        %v635 = vld [vmem:[%s632 + $0x10] sm:$0xff]
        %v636 = vld [vmem:[%s632 + $0x18] sm:$0xff]
        %v637 = vld [vmem:[%s632 + $0x20] sm:$0xff]
        %v638 = vld [vmem:[%s632 + $0x28] sm:$0xff]
        %v639 = vld [vmem:[%s632 + $0x30] sm:$0xff]
        %v640 = vld [vmem:[%s632 + $0x38] sm:$0xff]
        %v641 = vld [vmem:[%s632 + $0x40] sm:$0xff]
        %v642 = vld [vmem:[%s632 + $0x48] sm:$0xff]
        %v643 = vld [vmem:[%s632 + $0x50] sm:$0xff]
        %v644 = vld [vmem:[%s632 + $0x58] sm:$0xff]
        %v645 = vld [vmem:[%s632 + $0x60] sm:$0xff]
        %v646 = vld [vmem:[%s632 + $0x68] sm:$0xff]
        %v647 = vld [vmem:[%s632 + $0x70] sm:$0xff]
        %v648 = vld [vmem:[%s632 + $0x78] sm:$0xff]
        %v649 = vld [vmem:[%s632 + $0x80] sm:$0xff]
        %v650 = vld [vmem:[%s632 + $0x88] sm:$0xff]
        %v651 = vld [vmem:[%s632 + $0x90] sm:$0xff]
        %v652 = vld [vmem:[%s632 + $0x98] sm:$0xff]
        %v653 = vld [vmem:[%s632 + $0xa0] sm:$0xff]
        %v654 = vld [vmem:[%s632 + $0xa8] sm:$0xff]
        %v655 = vld [vmem:[%s632 + $0xb0] sm:$0xff]
        %v656 = vld [vmem:[%s632 + $0xb8] sm:$0xff]
        %vm657 = vcmask 785408
        %v659 = vsel %vm657, %v628, 0
        %v662 = vsel %vm657, %v629, 0
        %v665 = vsel %vm657, %v630, 0
        %v668 = vsel %vm657, %v631, 0
        %670 = vmatprep.subr.mxu0 %v634
        %671 = vmatpush1.msra.mxu0 %v633
        %672 = vmatprep.subr.mxu0 %v636
        %673 = vmatpush1.msra.mxu0 %v635
        %674 = vmatprep.subr.mxu0 %v638
        %675 = vmatpush1.msra.mxu0 %v637
        %676 = vmatprep.subr.mxu0 %v640
        %677 = vmatpush1.msra.mxu0 %v639
        %678 = vmatprep.subr.mxu0 %v642
        %679 = vmatpush1.msra.mxu0 %v641
        %680 = vmatprep.subr.mxu0 %v644
        %681 = vmatpush1.msra.mxu0 %v643
        %682 = vmatprep.subr.mxu0 %v646
        %683 = vmatpush1.msra.mxu0 %v645
        %684 = vmatprep.subr.mxu0 %v648
        %685 = vmatpush1.msra.mxu0 %v647
        %686 = vmatprep.subr.mxu0 %v650
        %687 = vmatpush1.msra.mxu0 %v649
        %688 = vmatprep.subr.mxu0 %v652
        %689 = vmatpush1.msra.mxu0 %v651
        %690 = vmatprep.subr.mxu0 %v654
        %691 = vmatpush1.msra.mxu0 %v653
        %692 = vmatprep.subr.mxu0 %v656
        %693 = vmatpush1.msra.mxu0 %v655
        %694 = vmatprep.subr.mxu0 0.0
        %695 = vmatpush1.msra.mxu0 0.0
        %696 = vmatprep.subr.mxu0 0.0
        %697 = vmatpush1.msra.mxu0 0.0
        %698 = vmatprep.subr.mxu0 0.0
        %699 = vmatpush1.msra.mxu0 0.0
        %700 = vmatprep.subr.mxu0 0.0
        %701 = vmatpush1.msra.mxu0 0.0
        %702 = vmatprep.subr.mxu0 0.0
        %703 = vmatpush1.msra.mxu0 0.0
        %704 = vmatprep.subr.mxu0 0.0
        %705 = vmatpush1.msra.mxu0 0.0
        %706 = vmatprep.subr.mxu0 0.0
        %707 = vmatpush1.msra.mxu0 0.0
        %708 = vmatprep.subr.mxu0 0.0
        %709 = vmatpush1.msra.mxu0 0.0
        %710 = vmatprep.subr.mxu0 0.0
        %711 = vmatpush1.msra.mxu0 0.0
        %712 = vmatprep.subr.mxu0 0.0
        %713 = vmatpush1.msra.mxu0 0.0
        %714 = vmatprep.subr.mxu0 0.0
        %715 = vmatpush1.msra.mxu0 0.0
        %716 = vmatprep.subr.mxu0 0.0
        %717 = vmatpush1.msra.mxu0 0.0
        %718 = vmatprep.subr.mxu0 0.0
        %719 = vmatpush1.msra.mxu0 0.0
        %720 = vmatprep.subr.mxu0 0.0
        %721 = vmatpush1.msra.mxu0 0.0
        %722 = vmatprep.subr.mxu0 0.0
        %723 = vmatpush1.msra.mxu0 0.0
        %724 = vmatprep.subr.mxu0 0.0
        %725 = vmatpush1.msra.mxu0 0.0
        %726 = vmatprep.subr.mxu0 0.0
        %727 = vmatpush1.msra.mxu0 0.0
        %728 = vmatprep.subr.mxu0 0.0
        %729 = vmatpush1.msra.mxu0 0.0
        %730 = vmatprep.subr.mxu0 0.0
        %731 = vmatpush1.msra.mxu0 0.0
        %732 = vmatprep.subr.mxu0 0.0
        %733 = vmatpush1.msra.mxu0 0.0
        %734 = vmatprep.mubr.f32.mxu0 0.0
        %735 = vmatmul.mubr.f32.gmra.mrb[0].mxu0 %v659
        %v736 = vpop.f32.mrb[0].mxu0
        %v737 = vadd.f32 0.0, %v736
        %v738 = vpop.f32.mrb[0].mxu0
        %v739 = vadd.f32 0.0, %v738
        %740 = vmatprep.mubr.f32.mxu0 0.0
        %741 = vmatmul.mubr.f32.gmra.mrb[0].mxu0 %v662
        %v742 = vpop.f32.mrb[0].mxu0
        %v743 = vadd.f32 0.0, %v742
        %v744 = vpop.f32.mrb[0].mxu0
        %v745 = vadd.f32 0.0, %v744
        %746 = vmatprep.mubr.f32.mxu0 0.0
        %747 = vmatmul.mubr.f32.gmra.mrb[0].mxu0 %v665
        %v748 = vpop.f32.mrb[0].mxu0
        %v749 = vadd.f32 0.0, %v748
        %v750 = vpop.f32.mrb[0].mxu0
        %v751 = vadd.f32 0.0, %v750
        %752 = vmatprep.mubr.f32.mxu0 0.0
        %753 = vmatmul.mubr.f32.gmra.mrb[0].mxu0 %v668
        %v754 = vpop.f32.mrb[0].mxu0
        %v755 = vadd.f32 0.0, %v754
        %v756 = vpop.f32.mrb[0].mxu0
        %v757 = vadd.f32 0.0, %v756
        %758 = vdwg.mxu0
        %v760 = vsel %vm657, %v600, 0
        %v763 = vsel %vm657, %v601, 0
        %v766 = vsel %vm657, %v602, 0
        %v769 = vsel %vm657, %v603, 0
        %771 = vmatprep.subr.mxu0 %v605
        %772 = vmatpush1.msra.mxu0 %v604
        %773 = vmatprep.subr.mxu0 %v607
        %774 = vmatpush1.msra.mxu0 %v606
        %775 = vmatprep.subr.mxu0 %v609
        %776 = vmatpush1.msra.mxu0 %v608
        %777 = vmatprep.subr.mxu0 %v611
        %778 = vmatpush1.msra.mxu0 %v610
        %779 = vmatprep.subr.mxu0 %v613
        %780 = vmatpush1.msra.mxu0 %v612
        %781 = vmatprep.subr.mxu0 %v615
        %782 = vmatpush1.msra.mxu0 %v614
        %783 = vmatprep.subr.mxu0 %v617
        %784 = vmatpush1.msra.mxu0 %v616
        %785 = vmatprep.subr.mxu0 %v619
        %786 = vmatpush1.msra.mxu0 %v618
        %787 = vmatprep.subr.mxu0 %v621
        %788 = vmatpush1.msra.mxu0 %v620
        %789 = vmatprep.subr.mxu0 %v623
        %790 = vmatpush1.msra.mxu0 %v622
        %791 = vmatprep.subr.mxu0 %v625
        %792 = vmatpush1.msra.mxu0 %v624
        %793 = vmatprep.subr.mxu0 %v627
        %794 = vmatpush1.msra.mxu0 %v626
        %795 = vmatprep.subr.mxu0 0.0
        %796 = vmatpush1.msra.mxu0 0.0
        %797 = vmatprep.subr.mxu0 0.0
        %798 = vmatpush1.msra.mxu0 0.0
        %799 = vmatprep.subr.mxu0 0.0
        %800 = vmatpush1.msra.mxu0 0.0
        %801 = vmatprep.subr.mxu0 0.0
        %802 = vmatpush1.msra.mxu0 0.0
        %803 = vmatprep.subr.mxu0 0.0
        %804 = vmatpush1.msra.mxu0 0.0
        %805 = vmatprep.subr.mxu0 0.0
        %806 = vmatpush1.msra.mxu0 0.0
        %807 = vmatprep.subr.mxu0 0.0
        %808 = vmatpush1.msra.mxu0 0.0
        %809 = vmatprep.subr.mxu0 0.0
        %810 = vmatpush1.msra.mxu0 0.0
        %811 = vmatprep.subr.mxu0 0.0
        %812 = vmatpush1.msra.mxu0 0.0
        %813 = vmatprep.subr.mxu0 0.0
        %814 = vmatpush1.msra.mxu0 0.0
        %815 = vmatprep.subr.mxu0 0.0
        %816 = vmatpush1.msra.mxu0 0.0
        %817 = vmatprep.subr.mxu0 0.0
        %818 = vmatpush1.msra.mxu0 0.0
        %819 = vmatprep.subr.mxu0 0.0
        %820 = vmatpush1.msra.mxu0 0.0
        %821 = vmatprep.subr.mxu0 0.0
        %822 = vmatpush1.msra.mxu0 0.0
        %823 = vmatprep.subr.mxu0 0.0
        %824 = vmatpush1.msra.mxu0 0.0
        %825 = vmatprep.subr.mxu0 0.0
        %826 = vmatpush1.msra.mxu0 0.0
        %827 = vmatprep.subr.mxu0 0.0
        %828 = vmatpush1.msra.mxu0 0.0
        %829 = vmatprep.subr.mxu0 0.0
        %830 = vmatpush1.msra.mxu0 0.0
        %831 = vmatprep.subr.mxu0 0.0
        %832 = vmatpush1.msra.mxu0 0.0
        %833 = vmatprep.subr.mxu0 0.0
        %834 = vmatpush1.msra.mxu0 0.0
        %835 = vmatprep.mubr.f32.mxu0 0.0
        %836 = vmatmul.mubr.f32.gmra.mrb[0].mxu0 %v760
        %v837 = vpop.f32.mrb[0].mxu0
        %v838 = vadd.f32 %v737, %v837
        %v839 = vpop.f32.mrb[0].mxu0
        %v840 = vadd.f32 %v739, %v839
        %841 = vmatprep.mubr.f32.mxu0 0.0
        %842 = vmatmul.mubr.f32.gmra.mrb[0].mxu0 %v763
        %v843 = vpop.f32.mrb[0].mxu0
        %v844 = vadd.f32 %v743, %v843
        %v845 = vpop.f32.mrb[0].mxu0
        %v846 = vadd.f32 %v745, %v845
        %847 = vmatprep.mubr.f32.mxu0 0.0
        %848 = vmatmul.mubr.f32.gmra.mrb[0].mxu0 %v766
        %v849 = vpop.f32.mrb[0].mxu0
        %v850 = vadd.f32 %v749, %v849
        %v851 = vpop.f32.mrb[0].mxu0
        %v852 = vadd.f32 %v751, %v851
        %853 = vmatprep.mubr.f32.mxu0 0.0
        %854 = vmatmul.mubr.f32.gmra.mrb[0].mxu0 %v769
        %v855 = vpop.f32.mrb[0].mxu0
        %v856 = vadd.f32 %v755, %v855
        %v857 = vpop.f32.mrb[0].mxu0
        %v858 = vadd.f32 %v757, %v857
        %859 = vdwg.mxu0
        %v860 = vld [vmem:[%s599 + $0x2] sm:$0xff]
        %v861 = vld [vmem:[%s599 + $0xa] sm:$0xff]
        %v862 = vld [vmem:[%s599 + $0x12] sm:$0xff]
        %v863 = vld [vmem:[%s599 + $0x1a] sm:$0xf]
        %s864 = scalar_lea.vmem %s1, 384
        %v865 = vld [vmem:[%s864] sm:$0xff]
        %v866 = vld [vmem:[%s864 + $0x8] sm:$0xff]
        %v867 = vld [vmem:[%s864 + $0x10] sm:$0xff]
        %v868 = vld [vmem:[%s864 + $0x18] sm:$0xff]
        %v869 = vld [vmem:[%s864 + $0x20] sm:$0xff]
        %v870 = vld [vmem:[%s864 + $0x28] sm:$0xff]
        %v871 = vld [vmem:[%s864 + $0x30] sm:$0xff]
        %v872 = vld [vmem:[%s864 + $0x38] sm:$0xff]
        %v873 = vld [vmem:[%s864 + $0x40] sm:$0xff]
        %v874 = vld [vmem:[%s864 + $0x48] sm:$0xff]
        %v875 = vld [vmem:[%s864 + $0x50] sm:$0xff]
        %v876 = vld [vmem:[%s864 + $0x58] sm:$0xff]
        %v877 = vld [vmem:[%s864 + $0x60] sm:$0xff]
        %v878 = vld [vmem:[%s864 + $0x68] sm:$0xff]
        %v879 = vld [vmem:[%s864 + $0x70] sm:$0xff]
        %v880 = vld [vmem:[%s864 + $0x78] sm:$0xff]
        %v881 = vld [vmem:[%s864 + $0x80] sm:$0xff]
        %v882 = vld [vmem:[%s864 + $0x88] sm:$0xff]
        %v883 = vld [vmem:[%s864 + $0x90] sm:$0xff]
        %v884 = vld [vmem:[%s864 + $0x98] sm:$0xff]
        %v885 = vld [vmem:[%s864 + $0xa0] sm:$0xff]
        %v886 = vld [vmem:[%s864 + $0xa8] sm:$0xff]
        %v887 = vld [vmem:[%s864 + $0xb0] sm:$0xff]
        %v888 = vld [vmem:[%s864 + $0xb8] sm:$0xff]
        %v890 = vsel %vm657, %v860, 0
        %v893 = vsel %vm657, %v861, 0
        %v896 = vsel %vm657, %v862, 0
        %v899 = vsel %vm657, %v863, 0
        %901 = vmatprep.subr.mxu0 %v866
        %902 = vmatpush1.msra.mxu0 %v865
        %903 = vmatprep.subr.mxu0 %v868
        %904 = vmatpush1.msra.mxu0 %v867
        %905 = vmatprep.subr.mxu0 %v870
        %906 = vmatpush1.msra.mxu0 %v869
        %907 = vmatprep.subr.mxu0 %v872
        %908 = vmatpush1.msra.mxu0 %v871
        %909 = vmatprep.subr.mxu0 %v874
        %910 = vmatpush1.msra.mxu0 %v873
        %911 = vmatprep.subr.mxu0 %v876
        %912 = vmatpush1.msra.mxu0 %v875
        %913 = vmatprep.subr.mxu0 %v878
        %914 = vmatpush1.msra.mxu0 %v877
        %915 = vmatprep.subr.mxu0 %v880
        %916 = vmatpush1.msra.mxu0 %v879
        %917 = vmatprep.subr.mxu0 %v882
        %918 = vmatpush1.msra.mxu0 %v881
        %919 = vmatprep.subr.mxu0 %v884
        %920 = vmatpush1.msra.mxu0 %v883
        %921 = vmatprep.subr.mxu0 %v886
        %922 = vmatpush1.msra.mxu0 %v885
        %923 = vmatprep.subr.mxu0 %v888
        %924 = vmatpush1.msra.mxu0 %v887
        %925 = vmatprep.subr.mxu0 0.0
        %926 = vmatpush1.msra.mxu0 0.0
        %927 = vmatprep.subr.mxu0 0.0
        %928 = vmatpush1.msra.mxu0 0.0
        %929 = vmatprep.subr.mxu0 0.0
        %930 = vmatpush1.msra.mxu0 0.0
        %931 = vmatprep.subr.mxu0 0.0
        %932 = vmatpush1.msra.mxu0 0.0
        %933 = vmatprep.subr.mxu0 0.0
        %934 = vmatpush1.msra.mxu0 0.0
        %935 = vmatprep.subr.mxu0 0.0
        %936 = vmatpush1.msra.mxu0 0.0
        %937 = vmatprep.subr.mxu0 0.0
        %938 = vmatpush1.msra.mxu0 0.0
        %939 = vmatprep.subr.mxu0 0.0
        %940 = vmatpush1.msra.mxu0 0.0
        %941 = vmatprep.subr.mxu0 0.0
        %942 = vmatpush1.msra.mxu0 0.0
        %943 = vmatprep.subr.mxu0 0.0
        %944 = vmatpush1.msra.mxu0 0.0
        %945 = vmatprep.subr.mxu0 0.0
        %946 = vmatpush1.msra.mxu0 0.0
        %947 = vmatprep.subr.mxu0 0.0
        %948 = vmatpush1.msra.mxu0 0.0
        %949 = vmatprep.subr.mxu0 0.0
        %950 = vmatpush1.msra.mxu0 0.0
        %951 = vmatprep.subr.mxu0 0.0
        %952 = vmatpush1.msra.mxu0 0.0
        %953 = vmatprep.subr.mxu0 0.0
        %954 = vmatpush1.msra.mxu0 0.0
        %955 = vmatprep.subr.mxu0 0.0
        %956 = vmatpush1.msra.mxu0 0.0
        %957 = vmatprep.subr.mxu0 0.0
        %958 = vmatpush1.msra.mxu0 0.0
        %959 = vmatprep.subr.mxu0 0.0
        %960 = vmatpush1.msra.mxu0 0.0
        %961 = vmatprep.subr.mxu0 0.0
        %962 = vmatpush1.msra.mxu0 0.0
        %963 = vmatprep.subr.mxu0 0.0
        %964 = vmatpush1.msra.mxu0 0.0
        %965 = vmatprep.mubr.f32.mxu0 0.0
        %966 = vmatmul.mubr.f32.gmra.mrb[0].mxu0 %v890
        %v967 = vpop.f32.mrb[0].mxu0
        %v968 = vadd.f32 0.0, %v967
        %v969 = vpop.f32.mrb[0].mxu0
        %v970 = vadd.f32 0.0, %v969
        %971 = vmatprep.mubr.f32.mxu0 0.0
        %972 = vmatmul.mubr.f32.gmra.mrb[0].mxu0 %v893
        %v973 = vpop.f32.mrb[0].mxu0
        %v974 = vadd.f32 0.0, %v973
        %v975 = vpop.f32.mrb[0].mxu0
        %v976 = vadd.f32 0.0, %v975
        %977 = vmatprep.mubr.f32.mxu0 0.0
        %978 = vmatmul.mubr.f32.gmra.mrb[0].mxu0 %v896
        %v979 = vpop.f32.mrb[0].mxu0
        %v980 = vadd.f32 0.0, %v979
        %v981 = vpop.f32.mrb[0].mxu0
        %v982 = vadd.f32 0.0, %v981
        %983 = vmatprep.mubr.f32.mxu0 0.0
        %984 = vmatmul.mubr.f32.gmra.mrb[0].mxu0 %v899
        %v985 = vpop.f32.mrb[0].mxu0
        %v986 = vadd.f32 0.0, %v985
        %v987 = vpop.f32.mrb[0].mxu0
        %v988 = vadd.f32 0.0, %v987
        %989 = vdwg.mxu0
        %v990 = vadd.f32 %v838, %v968
        %v991 = vadd.f32 %v840, %v970
        %v992 = vadd.f32 %v844, %v974
        %v993 = vadd.f32 %v846, %v976
        %v994 = vadd.f32 %v850, %v980
        %v995 = vadd.f32 %v852, %v982
        %v996 = vadd.f32 %v856, %v986
        %v997 = vadd.f32 %v858, %v988
        %v998 = vld [vmem:[%s599 + $0x3] sm:$0xff]
        %v999 = vld [vmem:[%s599 + $0xb] sm:$0xff]
        %v1000 = vld [vmem:[%s599 + $0x13] sm:$0xff]
        %v1001 = vld [vmem:[%s599 + $0x1b] sm:$0xf]
        %s1002 = scalar_lea.vmem %s1, 576
        %v1003 = vld [vmem:[%s1002] sm:$0xff]
        %v1004 = vld [vmem:[%s1002 + $0x8] sm:$0xff]
        %v1005 = vld [vmem:[%s1002 + $0x10] sm:$0xff]
        %v1006 = vld [vmem:[%s1002 + $0x18] sm:$0xff]
        %v1007 = vld [vmem:[%s1002 + $0x20] sm:$0xff]
        %v1008 = vld [vmem:[%s1002 + $0x28] sm:$0xff]
        %v1009 = vld [vmem:[%s1002 + $0x30] sm:$0xff]
        %v1010 = vld [vmem:[%s1002 + $0x38] sm:$0xff]
        %v1011 = vld [vmem:[%s1002 + $0x40] sm:$0xff]
        %v1012 = vld [vmem:[%s1002 + $0x48] sm:$0xff]
        %v1013 = vld [vmem:[%s1002 + $0x50] sm:$0xff]
        %v1014 = vld [vmem:[%s1002 + $0x58] sm:$0xff]
        %v1015 = vld [vmem:[%s1002 + $0x60] sm:$0xff]
        %v1016 = vld [vmem:[%s1002 + $0x68] sm:$0xff]
        %v1017 = vld [vmem:[%s1002 + $0x70] sm:$0xff]
        %v1018 = vld [vmem:[%s1002 + $0x78] sm:$0xff]
        %v1019 = vld [vmem:[%s1002 + $0x80] sm:$0xff]
        %v1020 = vld [vmem:[%s1002 + $0x88] sm:$0xff]
        %v1021 = vld [vmem:[%s1002 + $0x90] sm:$0xff]
        %v1022 = vld [vmem:[%s1002 + $0x98] sm:$0xff]
        %v1023 = vld [vmem:[%s1002 + $0xa0] sm:$0xff]
        %v1024 = vld [vmem:[%s1002 + $0xa8] sm:$0xff]
        %v1025 = vld [vmem:[%s1002 + $0xb0] sm:$0xff]
        %v1026 = vld [vmem:[%s1002 + $0xb8] sm:$0xff]
        %v1028 = vsel %vm657, %v998, 0
        %v1031 = vsel %vm657, %v999, 0
        %v1034 = vsel %vm657, %v1000, 0
        %v1037 = vsel %vm657, %v1001, 0
        %1039 = vmatprep.subr.mxu0 %v1004
        %1040 = vmatpush1.msra.mxu0 %v1003
        %1041 = vmatprep.subr.mxu0 %v1006
        %1042 = vmatpush1.msra.mxu0 %v1005
        %1043 = vmatprep.subr.mxu0 %v1008
        %1044 = vmatpush1.msra.mxu0 %v1007
        %1045 = vmatprep.subr.mxu0 %v1010
        %1046 = vmatpush1.msra.mxu0 %v1009
        %1047 = vmatprep.subr.mxu0 %v1012
        %1048 = vmatpush1.msra.mxu0 %v1011
        %1049 = vmatprep.subr.mxu0 %v1014
        %1050 = vmatpush1.msra.mxu0 %v1013
        %1051 = vmatprep.subr.mxu0 %v1016
        %1052 = vmatpush1.msra.mxu0 %v1015
        %1053 = vmatprep.subr.mxu0 %v1018
        %1054 = vmatpush1.msra.mxu0 %v1017
        %1055 = vmatprep.subr.mxu0 %v1020
        %1056 = vmatpush1.msra.mxu0 %v1019
        %1057 = vmatprep.subr.mxu0 %v1022
        %1058 = vmatpush1.msra.mxu0 %v1021
        %1059 = vmatprep.subr.mxu0 %v1024
        %1060 = vmatpush1.msra.mxu0 %v1023
        %1061 = vmatprep.subr.mxu0 %v1026
        %1062 = vmatpush1.msra.mxu0 %v1025
        %1063 = vmatprep.subr.mxu0 0.0
        %1064 = vmatpush1.msra.mxu0 0.0
        %1065 = vmatprep.subr.mxu0 0.0
        %1066 = vmatpush1.msra.mxu0 0.0
        %1067 = vmatprep.subr.mxu0 0.0
        %1068 = vmatpush1.msra.mxu0 0.0
        %1069 = vmatprep.subr.mxu0 0.0
        %1070 = vmatpush1.msra.mxu0 0.0
        %1071 = vmatprep.subr.mxu0 0.0
        %1072 = vmatpush1.msra.mxu0 0.0
        %1073 = vmatprep.subr.mxu0 0.0
        %1074 = vmatpush1.msra.mxu0 0.0
        %1075 = vmatprep.subr.mxu0 0.0
        %1076 = vmatpush1.msra.mxu0 0.0
        %1077 = vmatprep.subr.mxu0 0.0
        %1078 = vmatpush1.msra.mxu0 0.0
        %1079 = vmatprep.subr.mxu0 0.0
        %1080 = vmatpush1.msra.mxu0 0.0
        %1081 = vmatprep.subr.mxu0 0.0
        %1082 = vmatpush1.msra.mxu0 0.0
        %1083 = vmatprep.subr.mxu0 0.0
        %1084 = vmatpush1.msra.mxu0 0.0
        %1085 = vmatprep.subr.mxu0 0.0
        %1086 = vmatpush1.msra.mxu0 0.0
        %1087 = vmatprep.subr.mxu0 0.0
        %1088 = vmatpush1.msra.mxu0 0.0
        %1089 = vmatprep.subr.mxu0 0.0
        %1090 = vmatpush1.msra.mxu0 0.0
        %1091 = vmatprep.subr.mxu0 0.0
        %1092 = vmatpush1.msra.mxu0 0.0
        %1093 = vmatprep.subr.mxu0 0.0
        %1094 = vmatpush1.msra.mxu0 0.0
        %1095 = vmatprep.subr.mxu0 0.0
        %1096 = vmatpush1.msra.mxu0 0.0
        %1097 = vmatprep.subr.mxu0 0.0
        %1098 = vmatpush1.msra.mxu0 0.0
        %1099 = vmatprep.subr.mxu0 0.0
        %1100 = vmatpush1.msra.mxu0 0.0
        %1101 = vmatprep.subr.mxu0 0.0
        %1102 = vmatpush1.msra.mxu0 0.0
        %1103 = vmatprep.mubr.f32.mxu0 0.0
        %1104 = vmatmul.mubr.f32.gmra.mrb[0].mxu0 %v1028
        %v1105 = vpop.f32.mrb[0].mxu0
        %v1106 = vadd.f32 0.0, %v1105
        %v1107 = vpop.f32.mrb[0].mxu0
        %v1108 = vadd.f32 0.0, %v1107
        %1109 = vmatprep.mubr.f32.mxu0 0.0
        %1110 = vmatmul.mubr.f32.gmra.mrb[0].mxu0 %v1031
        %v1111 = vpop.f32.mrb[0].mxu0
        %v1112 = vadd.f32 0.0, %v1111
        %v1113 = vpop.f32.mrb[0].mxu0
        %v1114 = vadd.f32 0.0, %v1113
        %1115 = vmatprep.mubr.f32.mxu0 0.0
        %1116 = vmatmul.mubr.f32.gmra.mrb[0].mxu0 %v1034
        %v1117 = vpop.f32.mrb[0].mxu0
        %v1118 = vadd.f32 0.0, %v1117
        %v1119 = vpop.f32.mrb[0].mxu0
        %v1120 = vadd.f32 0.0, %v1119
        %1121 = vmatprep.mubr.f32.mxu0 0.0
        %1122 = vmatmul.mubr.f32.gmra.mrb[0].mxu0 %v1037
        %v1123 = vpop.f32.mrb[0].mxu0
        %v1124 = vadd.f32 0.0, %v1123
        %v1125 = vpop.f32.mrb[0].mxu0
        %v1126 = vadd.f32 0.0, %v1125
        %1127 = vdwg.mxu0
        %v1128 = vadd.f32 %v990, %v1106
        %v1129 = vadd.f32 %v991, %v1108
        %v1130 = vadd.f32 %v992, %v1112
        %v1131 = vadd.f32 %v993, %v1114
        %v1132 = vadd.f32 %v994, %v1118
        %v1133 = vadd.f32 %v995, %v1120
        %v1134 = vadd.f32 %v996, %v1124
        %v1135 = vadd.f32 %v997, %v1126
        %v1136 = vld [vmem:[%s599 + $0x4] sm:$0xff]
        %v1137 = vld [vmem:[%s599 + $0xc] sm:$0xff]
        %v1138 = vld [vmem:[%s599 + $0x14] sm:$0xff]
        %v1139 = vld [vmem:[%s599 + $0x1c] sm:$0xf]
        %s1140 = scalar_lea.vmem %s1, 768
        %v1141 = vld [vmem:[%s1140] sm:$0xff]
        %v1142 = vld [vmem:[%s1140 + $0x8] sm:$0xff]
        %v1143 = vld [vmem:[%s1140 + $0x10] sm:$0xff]
        %v1144 = vld [vmem:[%s1140 + $0x18] sm:$0xff]
        %v1145 = vld [vmem:[%s1140 + $0x20] sm:$0xff]
        %v1146 = vld [vmem:[%s1140 + $0x28] sm:$0xff]
        %v1147 = vld [vmem:[%s1140 + $0x30] sm:$0xff]
        %v1148 = vld [vmem:[%s1140 + $0x38] sm:$0xff]
        %v1149 = vld [vmem:[%s1140 + $0x40] sm:$0xff]
        %v1150 = vld [vmem:[%s1140 + $0x48] sm:$0xff]
        %v1151 = vld [vmem:[%s1140 + $0x50] sm:$0xff]
        %v1152 = vld [vmem:[%s1140 + $0x58] sm:$0xff]
        %v1153 = vld [vmem:[%s1140 + $0x60] sm:$0xff]
        %v1154 = vld [vmem:[%s1140 + $0x68] sm:$0xff]
        %v1155 = vld [vmem:[%s1140 + $0x70] sm:$0xff]
        %v1156 = vld [vmem:[%s1140 + $0x78] sm:$0xff]
        %v1157 = vld [vmem:[%s1140 + $0x80] sm:$0xff]
        %v1158 = vld [vmem:[%s1140 + $0x88] sm:$0xff]
        %v1159 = vld [vmem:[%s1140 + $0x90] sm:$0xff]
        %v1160 = vld [vmem:[%s1140 + $0x98] sm:$0xff]
        %v1161 = vld [vmem:[%s1140 + $0xa0] sm:$0xff]
        %v1162 = vld [vmem:[%s1140 + $0xa8] sm:$0xff]
        %v1163 = vld [vmem:[%s1140 + $0xb0] sm:$0xff]
        %v1164 = vld [vmem:[%s1140 + $0xb8] sm:$0xff]
        %v1166 = vsel %vm657, %v1136, 0
        %v1169 = vsel %vm657, %v1137, 0
        %v1172 = vsel %vm657, %v1138, 0
        %v1175 = vsel %vm657, %v1139, 0
        %1177 = vmatprep.subr.mxu0 %v1142
        %1178 = vmatpush1.msra.mxu0 %v1141
        %1179 = vmatprep.subr.mxu0 %v1144
        %1180 = vmatpush1.msra.mxu0 %v1143
        %1181 = vmatprep.subr.mxu0 %v1146
        %1182 = vmatpush1.msra.mxu0 %v1145
        %1183 = vmatprep.subr.mxu0 %v1148
        %1184 = vmatpush1.msra.mxu0 %v1147
        %1185 = vmatprep.subr.mxu0 %v1150
        %1186 = vmatpush1.msra.mxu0 %v1149
        %1187 = vmatprep.subr.mxu0 %v1152
        %1188 = vmatpush1.msra.mxu0 %v1151
        %1189 = vmatprep.subr.mxu0 %v1154
        %1190 = vmatpush1.msra.mxu0 %v1153
        %1191 = vmatprep.subr.mxu0 %v1156
        %1192 = vmatpush1.msra.mxu0 %v1155
        %1193 = vmatprep.subr.mxu0 %v1158
        %1194 = vmatpush1.msra.mxu0 %v1157
        %1195 = vmatprep.subr.mxu0 %v1160
        %1196 = vmatpush1.msra.mxu0 %v1159
        %1197 = vmatprep.subr.mxu0 %v1162
        %1198 = vmatpush1.msra.mxu0 %v1161
        %1199 = vmatprep.subr.mxu0 %v1164
        %1200 = vmatpush1.msra.mxu0 %v1163
        %1201 = vmatprep.subr.mxu0 0.0
        %1202 = vmatpush1.msra.mxu0 0.0
        %1203 = vmatprep.subr.mxu0 0.0
        %1204 = vmatpush1.msra.mxu0 0.0
        %1205 = vmatprep.subr.mxu0 0.0
        %1206 = vmatpush1.msra.mxu0 0.0
        %1207 = vmatprep.subr.mxu0 0.0
        %1208 = vmatpush1.msra.mxu0 0.0
        %1209 = vmatprep.subr.mxu0 0.0
        %1210 = vmatpush1.msra.mxu0 0.0
        %1211 = vmatprep.subr.mxu0 0.0
        %1212 = vmatpush1.msra.mxu0 0.0
        %1213 = vmatprep.subr.mxu0 0.0
        %1214 = vmatpush1.msra.mxu0 0.0
        %1215 = vmatprep.subr.mxu0 0.0
        %1216 = vmatpush1.msra.mxu0 0.0
        %1217 = vmatprep.subr.mxu0 0.0
        %1218 = vmatpush1.msra.mxu0 0.0
        %1219 = vmatprep.subr.mxu0 0.0
        %1220 = vmatpush1.msra.mxu0 0.0
        %1221 = vmatprep.subr.mxu0 0.0
        %1222 = vmatpush1.msra.mxu0 0.0
        %1223 = vmatprep.subr.mxu0 0.0
        %1224 = vmatpush1.msra.mxu0 0.0
        %1225 = vmatprep.subr.mxu0 0.0
        %1226 = vmatpush1.msra.mxu0 0.0
        %1227 = vmatprep.subr.mxu0 0.0
        %1228 = vmatpush1.msra.mxu0 0.0
        %1229 = vmatprep.subr.mxu0 0.0
        %1230 = vmatpush1.msra.mxu0 0.0
        %1231 = vmatprep.subr.mxu0 0.0
        %1232 = vmatpush1.msra.mxu0 0.0
        %1233 = vmatprep.subr.mxu0 0.0
        %1234 = vmatpush1.msra.mxu0 0.0
        %1235 = vmatprep.subr.mxu0 0.0
        %1236 = vmatpush1.msra.mxu0 0.0
        %1237 = vmatprep.subr.mxu0 0.0
        %1238 = vmatpush1.msra.mxu0 0.0
        %1239 = vmatprep.subr.mxu0 0.0
        %1240 = vmatpush1.msra.mxu0 0.0
        %1241 = vmatprep.mubr.f32.mxu0 0.0
        %1242 = vmatmul.mubr.f32.gmra.mrb[0].mxu0 %v1166
        %v1243 = vpop.f32.mrb[0].mxu0
        %v1244 = vadd.f32 0.0, %v1243
        %v1245 = vpop.f32.mrb[0].mxu0
        %v1246 = vadd.f32 0.0, %v1245
        %1247 = vmatprep.mubr.f32.mxu0 0.0
        %1248 = vmatmul.mubr.f32.gmra.mrb[0].mxu0 %v1169
        %v1249 = vpop.f32.mrb[0].mxu0
        %v1250 = vadd.f32 0.0, %v1249
        %v1251 = vpop.f32.mrb[0].mxu0
        %v1252 = vadd.f32 0.0, %v1251
        %1253 = vmatprep.mubr.f32.mxu0 0.0
        %1254 = vmatmul.mubr.f32.gmra.mrb[0].mxu0 %v1172
        %v1255 = vpop.f32.mrb[0].mxu0
        %v1256 = vadd.f32 0.0, %v1255
        %v1257 = vpop.f32.mrb[0].mxu0
        %v1258 = vadd.f32 0.0, %v1257
        %1259 = vmatprep.mubr.f32.mxu0 0.0
        %1260 = vmatmul.mubr.f32.gmra.mrb[0].mxu0 %v1175
        %v1261 = vpop.f32.mrb[0].mxu0
        %v1262 = vadd.f32 0.0, %v1261
        %v1263 = vpop.f32.mrb[0].mxu0
        %v1264 = vadd.f32 0.0, %v1263
        %1265 = vdwg.mxu0
        %v1266 = vadd.f32 %v1128, %v1244
        %v1267 = vadd.f32 %v1129, %v1246
        %v1268 = vadd.f32 %v1130, %v1250
        %v1269 = vadd.f32 %v1131, %v1252
        %v1270 = vadd.f32 %v1132, %v1256
        %v1271 = vadd.f32 %v1133, %v1258
        %v1272 = vadd.f32 %v1134, %v1262
        %v1273 = vadd.f32 %v1135, %v1264
        %v1274 = vld [vmem:[%s2] sm:$0x3]
        %v1276 = vlaneseq
        %v1277 = vshrl.u32 %v1276, 7
        %v1278 = vsub.s32 0, %v1277
        %v1279 = vrot.slane %v1274, %v1278
        %v1280 = vlaneseq
        %v1281 = vshrl.u32 %v1280, 7
        %v1282 = vsub.s32 1, %v1281
        %v1283 = vrot.slane %v1274, %v1282
        %v1286 = vadd.f32 %v1266, %v1279
        %v1287 = vadd.f32 %v1267, %v1283
        %v1288 = vadd.f32 %v1268, %v1279
        %v1289 = vadd.f32 %v1269, %v1283
        %v1290 = vadd.f32 %v1270, %v1279
        %v1291 = vadd.f32 %v1271, %v1283
        %v1292 = vadd.f32 %v1272, %v1279
        %v1293 = vadd.f32 %v1273, %v1283
        %v1294 = vmax.f32 %v1286, 0.0
        %v1295 = vmax.f32 %v1287, 0.0
        %v1296 = vmax.f32 %v1288, 0.0
        %v1297 = vmax.f32 %v1289, 0.0
        %v1298 = vmax.f32 %v1290, 0.0
        %v1299 = vmax.f32 %v1291, 0.0
        %v1300 = vmax.f32 %v1292, 0.0
        %v1301 = vmax.f32 %v1293, 0.0
        %v1302 = vld [vmem:[%s3] sm:$0xff]
        %v1303 = vld [vmem:[%s3 + $0x8] sm:$0xff]
        %v1304 = vld [vmem:[%s3 + $0x10] sm:$0xff]
        %v1305 = vld [vmem:[%s3 + $0x18] sm:$0xff]
        %v1306 = vld [vmem:[%s3 + $0x20] sm:$0xff]
        %v1307 = vld [vmem:[%s3 + $0x28] sm:$0xff]
        %v1308 = vld [vmem:[%s3 + $0x30] sm:$0xff]
        %v1309 = vld [vmem:[%s3 + $0x38] sm:$0xff]
        %v1310 = vld [vmem:[%s3 + $0x40] sm:$0xff]
        %v1311 = vld [vmem:[%s3 + $0x48] sm:$0xff]
        %v1312 = vld [vmem:[%s3 + $0x50] sm:$0xff]
        %v1313 = vld [vmem:[%s3 + $0x58] sm:$0xff]
        %v1314 = vld [vmem:[%s3 + $0x60] sm:$0xff]
        %v1315 = vld [vmem:[%s3 + $0x68] sm:$0xff]
        %v1316 = vld [vmem:[%s3 + $0x70] sm:$0xff]
        %v1317 = vld [vmem:[%s3 + $0x78] sm:$0xff]
        %v1318 = vld [vmem:[%s3 + $0x80] sm:$0xff]
        %v1319 = vld [vmem:[%s3 + $0x88] sm:$0xff]
        %v1320 = vld [vmem:[%s3 + $0x90] sm:$0xff]
        %v1321 = vld [vmem:[%s3 + $0x98] sm:$0xff]
        %v1322 = vld [vmem:[%s3 + $0xa0] sm:$0xff]
        %vm1323 = vcmask 326656
        %v1325 = vsel %vm1323, %v1295, 0
        %v1328 = vsel %vm1323, %v1297, 0
        %v1331 = vsel %vm1323, %v1299, 0
        %v1334 = vsel %vm1323, %v1301, 0
        %1336 = vmatprep.subr.mxu0 0.0
        %1337 = vmatpush1.msra.mxu0 %v1302
        %1338 = vmatprep.subr.mxu0 0.0
        %1339 = vmatpush1.msra.mxu0 %v1303
        %1340 = vmatprep.subr.mxu0 0.0
        %1341 = vmatpush1.msra.mxu0 %v1304
        %1342 = vmatprep.subr.mxu0 0.0
        %1343 = vmatpush1.msra.mxu0 %v1305
        %1344 = vmatprep.subr.mxu0 0.0
        %1345 = vmatpush1.msra.mxu0 %v1306
        %1346 = vmatprep.subr.mxu0 0.0
        %1347 = vmatpush1.msra.mxu0 %v1307
        %1348 = vmatprep.subr.mxu0 0.0
        %1349 = vmatpush1.msra.mxu0 %v1308
        %1350 = vmatprep.subr.mxu0 0.0
        %1351 = vmatpush1.msra.mxu0 %v1309
        %1352 = vmatprep.subr.mxu0 0.0
        %1353 = vmatpush1.msra.mxu0 %v1310
        %1354 = vmatprep.subr.mxu0 0.0
        %1355 = vmatpush1.msra.mxu0 %v1311
        %1356 = vmatprep.subr.mxu0 0.0
        %1357 = vmatpush1.msra.mxu0 %v1312
        %1358 = vmatprep.subr.mxu0 0.0
        %1359 = vmatpush1.msra.mxu0 %v1313
        %1360 = vmatprep.subr.mxu0 0.0
        %1361 = vmatpush1.msra.mxu0 %v1314
        %1362 = vmatprep.subr.mxu0 0.0
        %1363 = vmatpush1.msra.mxu0 %v1315
        %1364 = vmatprep.subr.mxu0 0.0
        %1365 = vmatpush1.msra.mxu0 %v1316
        %1366 = vmatprep.subr.mxu0 0.0
        %1367 = vmatpush1.msra.mxu0 %v1317
        %1368 = vmatprep.subr.mxu0 0.0
        %1369 = vmatpush1.msra.mxu0 %v1318
        %1370 = vmatprep.subr.mxu0 0.0
        %1371 = vmatpush1.msra.mxu0 %v1319
        %1372 = vmatprep.subr.mxu0 0.0
        %1373 = vmatpush1.msra.mxu0 %v1320
        %1374 = vmatprep.subr.mxu0 0.0
        %1375 = vmatpush1.msra.mxu0 %v1321
        %1376 = vmatprep.subr.mxu0 0.0
        %1377 = vmatpush1.msra.mxu0 %v1322
        %1378 = vmatprep.subr.mxu0 0.0
        %1379 = vmatpush1.msra.mxu0 0.0
        %1380 = vmatprep.subr.mxu0 0.0
        %1381 = vmatpush1.msra.mxu0 0.0
        %1382 = vmatprep.subr.mxu0 0.0
        %1383 = vmatpush1.msra.mxu0 0.0
        %1384 = vmatprep.subr.mxu0 0.0
        %1385 = vmatpush1.msra.mxu0 0.0
        %1386 = vmatprep.subr.mxu0 0.0
        %1387 = vmatpush1.msra.mxu0 0.0
        %1388 = vmatprep.subr.mxu0 0.0
        %1389 = vmatpush1.msra.mxu0 0.0
        %1390 = vmatprep.subr.mxu0 0.0
        %1391 = vmatpush1.msra.mxu0 0.0
        %1392 = vmatprep.subr.mxu0 0.0
        %1393 = vmatpush1.msra.mxu0 0.0
        %1394 = vmatprep.subr.mxu0 0.0
        %1395 = vmatpush1.msra.mxu0 0.0
        %1396 = vmatprep.subr.mxu0 0.0
        %1397 = vmatpush1.msra.mxu0 0.0
        %1398 = vmatprep.subr.mxu0 0.0
        %1399 = vmatpush1.msra.mxu0 0.0
        %1400 = vmatprep.mubr.f32.mxu0 %v1325
        %1401 = vmatmul.mubr.f32.gmra.mrb[0].mxu0 %v1294
        %v1402 = vpop.f32.mrb[0].mxu0
        %v1403 = vadd.f32 0.0, %v1402
        %v1404 = vpop.f32.mrb[0].mxu0
        %1405 = vmatprep.mubr.f32.mxu0 %v1328
        %1406 = vmatmul.mubr.f32.gmra.mrb[0].mxu0 %v1296
        %v1407 = vpop.f32.mrb[0].mxu0
        %v1408 = vadd.f32 0.0, %v1407
        %v1409 = vpop.f32.mrb[0].mxu0
        %1410 = vmatprep.mubr.f32.mxu0 %v1331
        %1411 = vmatmul.mubr.f32.gmra.mrb[0].mxu0 %v1298
        %v1412 = vpop.f32.mrb[0].mxu0
        %v1413 = vadd.f32 0.0, %v1412
        %v1414 = vpop.f32.mrb[0].mxu0
        %1415 = vmatprep.mubr.f32.mxu0 %v1334
        %1416 = vmatmul.mubr.f32.gmra.mrb[0].mxu0 %v1300
        %v1417 = vpop.f32.mrb[0].mxu0
        %v1418 = vadd.f32 0.0, %v1417
        %v1419 = vpop.f32.mrb[0].mxu0
        %1420 = vdwg.mxu0
        %v1421 = vld [vmem:[%s4] sm:$0xff]
        %v1422 = vld [vmem:[%s4 + $0x8] sm:$0xff]
        %v1423 = vld [vmem:[%s4 + $0x10] sm:$0xff]
        %v1424 = vld [vmem:[%s4 + $0x18] sm:$0xff]
        %v1425 = vld [vmem:[%s4 + $0x20] sm:$0xff]
        %v1426 = vld [vmem:[%s4 + $0x28] sm:$0xff]
        %v1427 = vld [vmem:[%s4 + $0x30] sm:$0xff]
        %v1428 = vld [vmem:[%s4 + $0x38] sm:$0xff]
        %v1429 = vld [vmem:[%s4 + $0x40] sm:$0xff]
        %v1430 = vld [vmem:[%s4 + $0x48] sm:$0xff]
        %v1431 = vld [vmem:[%s4 + $0x50] sm:$0xff]
        %v1432 = vld [vmem:[%s4 + $0x58] sm:$0xff]
        %v1433 = vld [vmem:[%s4 + $0x60] sm:$0xff]
        %v1434 = vld [vmem:[%s4 + $0x68] sm:$0xff]
        %v1435 = vld [vmem:[%s4 + $0x70] sm:$0xff]
        %v1436 = vld [vmem:[%s4 + $0x78] sm:$0xff]
        %v1437 = vld [vmem:[%s4 + $0x80] sm:$0xff]
        %v1438 = vld [vmem:[%s4 + $0x88] sm:$0xff]
        %v1439 = vld [vmem:[%s4 + $0x90] sm:$0xff]
        %v1440 = vld [vmem:[%s4 + $0x98] sm:$0xff]
        %v1441 = vld [vmem:[%s4 + $0xa0] sm:$0xff]
        %1442 = vmatprep.subr.mxu0 0.0
        %1443 = vmatpush1.msra.mxu0 %v1421
        %1444 = vmatprep.subr.mxu0 0.0
        %1445 = vmatpush1.msra.mxu0 %v1422
        %1446 = vmatprep.subr.mxu0 0.0
        %1447 = vmatpush1.msra.mxu0 %v1423
        %1448 = vmatprep.subr.mxu0 0.0
        %1449 = vmatpush1.msra.mxu0 %v1424
        %1450 = vmatprep.subr.mxu0 0.0
        %1451 = vmatpush1.msra.mxu0 %v1425
        %1452 = vmatprep.subr.mxu0 0.0
        %1453 = vmatpush1.msra.mxu0 %v1426
        %1454 = vmatprep.subr.mxu0 0.0
        %1455 = vmatpush1.msra.mxu0 %v1427
        %1456 = vmatprep.subr.mxu0 0.0
        %1457 = vmatpush1.msra.mxu0 %v1428
        %1458 = vmatprep.subr.mxu0 0.0
        %1459 = vmatpush1.msra.mxu0 %v1429
        %1460 = vmatprep.subr.mxu0 0.0
        %1461 = vmatpush1.msra.mxu0 %v1430
        %1462 = vmatprep.subr.mxu0 0.0
        %1463 = vmatpush1.msra.mxu0 %v1431
        %1464 = vmatprep.subr.mxu0 0.0
        %1465 = vmatpush1.msra.mxu0 %v1432
        %1466 = vmatprep.subr.mxu0 0.0
        %1467 = vmatpush1.msra.mxu0 %v1433
        %1468 = vmatprep.subr.mxu0 0.0
        %1469 = vmatpush1.msra.mxu0 %v1434
        %1470 = vmatprep.subr.mxu0 0.0
        %1471 = vmatpush1.msra.mxu0 %v1435
        %1472 = vmatprep.subr.mxu0 0.0
        %1473 = vmatpush1.msra.mxu0 %v1436
        %1474 = vmatprep.subr.mxu0 0.0
        %1475 = vmatpush1.msra.mxu0 %v1437
        %1476 = vmatprep.subr.mxu0 0.0
        %1477 = vmatpush1.msra.mxu0 %v1438
        %1478 = vmatprep.subr.mxu0 0.0
        %1479 = vmatpush1.msra.mxu0 %v1439
        %1480 = vmatprep.subr.mxu0 0.0
        %1481 = vmatpush1.msra.mxu0 %v1440
        %1482 = vmatprep.subr.mxu0 0.0
        %1483 = vmatpush1.msra.mxu0 %v1441
        %1484 = vmatprep.subr.mxu0 0.0
        %1485 = vmatpush1.msra.mxu0 0.0
        %1486 = vmatprep.subr.mxu0 0.0
        %1487 = vmatpush1.msra.mxu0 0.0
        %1488 = vmatprep.subr.mxu0 0.0
        %1489 = vmatpush1.msra.mxu0 0.0
        %1490 = vmatprep.subr.mxu0 0.0
        %1491 = vmatpush1.msra.mxu0 0.0
        %1492 = vmatprep.subr.mxu0 0.0
        %1493 = vmatpush1.msra.mxu0 0.0
        %1494 = vmatprep.subr.mxu0 0.0
        %1495 = vmatpush1.msra.mxu0 0.0
        %1496 = vmatprep.subr.mxu0 0.0
        %1497 = vmatpush1.msra.mxu0 0.0
        %1498 = vmatprep.subr.mxu0 0.0
        %1499 = vmatpush1.msra.mxu0 0.0
        %1500 = vmatprep.subr.mxu0 0.0
        %1501 = vmatpush1.msra.mxu0 0.0
        %1502 = vmatprep.subr.mxu0 0.0
        %1503 = vmatpush1.msra.mxu0 0.0
        %1504 = vmatprep.subr.mxu0 0.0
        %1505 = vmatpush1.msra.mxu0 0.0
        %1506 = vmatprep.mubr.f32.mxu0 %v1325
        %1507 = vmatmul.mubr.f32.gmra.mrb[0].mxu0 %v1294
        %v1508 = vpop.f32.mrb[0].mxu0
        %v1509 = vadd.f32 0.0, %v1508
        %v1510 = vpop.f32.mrb[0].mxu0
        %1511 = vmatprep.mubr.f32.mxu0 %v1328
        %1512 = vmatmul.mubr.f32.gmra.mrb[0].mxu0 %v1296
        %v1513 = vpop.f32.mrb[0].mxu0
        %v1514 = vadd.f32 0.0, %v1513
        %v1515 = vpop.f32.mrb[0].mxu0
        %1516 = vmatprep.mubr.f32.mxu0 %v1331
        %1517 = vmatmul.mubr.f32.gmra.mrb[0].mxu0 %v1298
        %v1518 = vpop.f32.mrb[0].mxu0
        %v1519 = vadd.f32 0.0, %v1518
        %v1520 = vpop.f32.mrb[0].mxu0
        %1521 = vmatprep.mubr.f32.mxu0 %v1334
        %1522 = vmatmul.mubr.f32.gmra.mrb[0].mxu0 %v1300
        %v1523 = vpop.f32.mrb[0].mxu0
        %v1524 = vadd.f32 0.0, %v1523
        %v1525 = vpop.f32.mrb[0].mxu0
        %1526 = vdwg.mxu0
        %v1527 = vmax.f32 %v1403, %v1509
        %v1528 = vmax.f32 %v1408, %v1514
        %v1529 = vmax.f32 %v1413, %v1519
        %v1530 = vmax.f32 %v1418, %v1524
        %v1531 = vld [vmem:[%s5] sm:$0xff]
        %v1532 = vld [vmem:[%s5 + $0x8] sm:$0x3f]
        %vm1533 = vcmask 228352
        %v1535 = vsel %vm1533, %v1531, 0
        %v1538 = vsel %vm1533, %v1532, 0
        %vm1540 = vcmask 1043456
        %v1542 = vsel %vm1540, %v1530, 0
        %1544 = vmatprep.subr.mxu0 0.0
        %1545 = vmatpush1.msra.mxu0 %v1527
        %1546 = vmatprep.subr.mxu0 0.0
        %1547 = vmatpush1.msra.mxu0 %v1528
        %1548 = vmatprep.subr.mxu0 0.0
        %1549 = vmatpush1.msra.mxu0 %v1529
        %1550 = vmatprep.subr.mxu0 0.0
        %1551 = vmatpush1.msra.mxu0 %v1542
        %1552 = vmatprep.subr.mxu0 0.0
        %1553 = vmatpush1.msra.mxu0 0.0
        %1554 = vmatprep.subr.mxu0 0.0
        %1555 = vmatpush1.msra.mxu0 0.0
        %1556 = vmatprep.subr.mxu0 0.0
        %1557 = vmatpush1.msra.mxu0 0.0
        %1558 = vmatprep.subr.mxu0 0.0
        %1559 = vmatpush1.msra.mxu0 0.0
        %1560 = vmatprep.subr.mxu0 0.0
        %1561 = vmatpush1.msra.mxu0 0.0
        %1562 = vmatprep.subr.mxu0 0.0
        %1563 = vmatpush1.msra.mxu0 0.0
        %1564 = vmatprep.subr.mxu0 0.0
        %1565 = vmatpush1.msra.mxu0 0.0
        %1566 = vmatprep.subr.mxu0 0.0
        %1567 = vmatpush1.msra.mxu0 0.0
        %1568 = vmatprep.subr.mxu0 0.0
        %1569 = vmatpush1.msra.mxu0 0.0
        %1570 = vmatprep.subr.mxu0 0.0
        %1571 = vmatpush1.msra.mxu0 0.0
        %1572 = vmatprep.subr.mxu0 0.0
        %1573 = vmatpush1.msra.mxu0 0.0
        %1574 = vmatprep.subr.mxu0 0.0
        %1575 = vmatpush1.msra.mxu0 0.0
        %1576 = vmatprep.subr.mxu0 0.0
        %1577 = vmatpush1.msra.mxu0 0.0
        %1578 = vmatprep.subr.mxu0 0.0
        %1579 = vmatpush1.msra.mxu0 0.0
        %1580 = vmatprep.subr.mxu0 0.0
        %1581 = vmatpush1.msra.mxu0 0.0
        %1582 = vmatprep.subr.mxu0 0.0
        %1583 = vmatpush1.msra.mxu0 0.0
        %1584 = vmatprep.subr.mxu0 0.0
        %1585 = vmatpush1.msra.mxu0 0.0
        %1586 = vmatprep.subr.mxu0 0.0
        %1587 = vmatpush1.msra.mxu0 0.0
        %1588 = vmatprep.subr.mxu0 0.0
        %1589 = vmatpush1.msra.mxu0 0.0
        %1590 = vmatprep.subr.mxu0 0.0
        %1591 = vmatpush1.msra.mxu0 0.0
        %1592 = vmatprep.subr.mxu0 0.0
        %1593 = vmatpush1.msra.mxu0 0.0
        %1594 = vmatprep.subr.mxu0 0.0
        %1595 = vmatpush1.msra.mxu0 0.0
        %1596 = vmatprep.subr.mxu0 0.0
        %1597 = vmatpush1.msra.mxu0 0.0
        %1598 = vmatprep.subr.mxu0 0.0
        %1599 = vmatpush1.msra.mxu0 0.0
        %1600 = vmatprep.subr.mxu0 0.0
        %1601 = vmatpush1.msra.mxu0 0.0
        %1602 = vmatprep.subr.mxu0 0.0
        %1603 = vmatpush1.msra.mxu0 0.0
        %1604 = vmatprep.subr.mxu0 0.0
        %1605 = vmatpush1.msra.mxu0 0.0
        %1606 = vmatprep.subr.mxu0 0.0
        %1607 = vmatpush1.msra.mxu0 0.0
        %1608 = vmatprep.mubr.f32.mxu0 0.0
        %1609 = vmatmul.mubr.f32.gmra.mrb[0].mxu0 %v1535
        %v1610 = vpop.f32.mrb[0].mxu0
        %v1611 = vadd.f32 0.0, %v1610
        %v1612 = vpop.f32.mrb[0].mxu0
        %1613 = vmatprep.mubr.f32.mxu0 0.0
        %1614 = vmatmul.mubr.f32.gmra.mrb[0].mxu0 %v1538
        %v1615 = vpop.f32.mrb[0].mxu0
        %v1616 = vadd.f32 0.0, %v1615
        %v1617 = vpop.f32.mrb[0].mxu0
        %1618 = vdwg.mxu0
        %v1619 = vld [vmem:[%s6] sm:$0xff]
        %v1620 = vld [vmem:[%s6 + $0x8] sm:$0x3f]
        %v1622 = vsel %vm1533, %v1619, 0
        %v1625 = vsel %vm1533, %v1620, 0
        %1627 = vmatprep.subr.mxu0 0.0
        %1628 = vmatpush1.msra.mxu0 %v1527
        %1629 = vmatprep.subr.mxu0 0.0
        %1630 = vmatpush1.msra.mxu0 %v1528
        %1631 = vmatprep.subr.mxu0 0.0
        %1632 = vmatpush1.msra.mxu0 %v1529
        %1633 = vmatprep.subr.mxu0 0.0
        %1634 = vmatpush1.msra.mxu0 %v1542
        %1635 = vmatprep.subr.mxu0 0.0
        %1636 = vmatpush1.msra.mxu0 0.0
        %1637 = vmatprep.subr.mxu0 0.0
        %1638 = vmatpush1.msra.mxu0 0.0
        %1639 = vmatprep.subr.mxu0 0.0
        %1640 = vmatpush1.msra.mxu0 0.0
        %1641 = vmatprep.subr.mxu0 0.0
        %1642 = vmatpush1.msra.mxu0 0.0
        %1643 = vmatprep.subr.mxu0 0.0
        %1644 = vmatpush1.msra.mxu0 0.0
        %1645 = vmatprep.subr.mxu0 0.0
        %1646 = vmatpush1.msra.mxu0 0.0
        %1647 = vmatprep.subr.mxu0 0.0
        %1648 = vmatpush1.msra.mxu0 0.0
        %1649 = vmatprep.subr.mxu0 0.0
        %1650 = vmatpush1.msra.mxu0 0.0
        %1651 = vmatprep.subr.mxu0 0.0
        %1652 = vmatpush1.msra.mxu0 0.0
        %1653 = vmatprep.subr.mxu0 0.0
        %1654 = vmatpush1.msra.mxu0 0.0
        %1655 = vmatprep.subr.mxu0 0.0
        %1656 = vmatpush1.msra.mxu0 0.0
        %1657 = vmatprep.subr.mxu0 0.0
        %1658 = vmatpush1.msra.mxu0 0.0
        %1659 = vmatprep.subr.mxu0 0.0
        %1660 = vmatpush1.msra.mxu0 0.0
        %1661 = vmatprep.subr.mxu0 0.0
        %1662 = vmatpush1.msra.mxu0 0.0
        %1663 = vmatprep.subr.mxu0 0.0
        %1664 = vmatpush1.msra.mxu0 0.0
        %1665 = vmatprep.subr.mxu0 0.0
        %1666 = vmatpush1.msra.mxu0 0.0
        %1667 = vmatprep.subr.mxu0 0.0
        %1668 = vmatpush1.msra.mxu0 0.0
        %1669 = vmatprep.subr.mxu0 0.0
        %1670 = vmatpush1.msra.mxu0 0.0
        %1671 = vmatprep.subr.mxu0 0.0
        %1672 = vmatpush1.msra.mxu0 0.0
        %1673 = vmatprep.subr.mxu0 0.0
        %1674 = vmatpush1.msra.mxu0 0.0
        %1675 = vmatprep.subr.mxu0 0.0
        %1676 = vmatpush1.msra.mxu0 0.0
        %1677 = vmatprep.subr.mxu0 0.0
        %1678 = vmatpush1.msra.mxu0 0.0
        %1679 = vmatprep.subr.mxu0 0.0
        %1680 = vmatpush1.msra.mxu0 0.0
        %1681 = vmatprep.subr.mxu0 0.0
        %1682 = vmatpush1.msra.mxu0 0.0
        %1683 = vmatprep.subr.mxu0 0.0
        %1684 = vmatpush1.msra.mxu0 0.0
        %1685 = vmatprep.subr.mxu0 0.0
        %1686 = vmatpush1.msra.mxu0 0.0
        %1687 = vmatprep.subr.mxu0 0.0
        %1688 = vmatpush1.msra.mxu0 0.0
        %1689 = vmatprep.subr.mxu0 0.0
        %1690 = vmatpush1.msra.mxu0 0.0
        %1691 = vmatprep.mubr.f32.mxu0 0.0
        %1692 = vmatmul.mubr.f32.gmra.mrb[0].mxu0 %v1622
        %v1693 = vpop.f32.mrb[0].mxu0
        %v1694 = vadd.f32 0.0, %v1693
        %v1695 = vpop.f32.mrb[0].mxu0
        %1696 = vmatprep.mubr.f32.mxu0 0.0
        %1697 = vmatmul.mubr.f32.gmra.mrb[0].mxu0 %v1625
        %v1698 = vpop.f32.mrb[0].mxu0
        %v1699 = vadd.f32 0.0, %v1698
        %v1700 = vpop.f32.mrb[0].mxu0
        %1701 = vdwg.mxu0
        %v1702 = vmax.f32 %v1611, %v1694
        %v1703 = vmax.f32 %v1616, %v1699
        %v1704 = vld [vmem:[%s7] sm:$0xff]
        %v1705 = vld [vmem:[%s7 + $0x8] sm:$0xff]
        %v1706 = vld [vmem:[%s7 + $0x10] sm:$0xff]
        %v1707 = vld [vmem:[%s7 + $0x18] sm:$0xff]
        %v1708 = vld [vmem:[%s7 + $0x20] sm:$0xff]
        %v1709 = vld [vmem:[%s7 + $0x28] sm:$0xff]
        %v1710 = vld [vmem:[%s7 + $0x30] sm:$0xff]
        %v1711 = vld [vmem:[%s7 + $0x38] sm:$0xff]
        %v1712 = vld [vmem:[%s7 + $0x40] sm:$0xff]
        %v1713 = vld [vmem:[%s7 + $0x48] sm:$0xff]
        %v1714 = vld [vmem:[%s7 + $0x50] sm:$0xff]
        %v1715 = vld [vmem:[%s7 + $0x58] sm:$0xff]
        %v1716 = vld [vmem:[%s7 + $0x60] sm:$0xff]
        %v1717 = vld [vmem:[%s7 + $0x68] sm:$0xff]
        %v1718 = vld [vmem:[%s7 + $0x70] sm:$0xff]
        %v1719 = vld [vmem:[%s7 + $0x78] sm:$0xff]
        %v1720 = vld [vmem:[%s7 + $0x80] sm:$0xff]
        %v1721 = vld [vmem:[%s7 + $0x88] sm:$0xff]
        %v1722 = vld [vmem:[%s7 + $0x90] sm:$0xff]
        %v1723 = vld [vmem:[%s7 + $0x98] sm:$0xff]
        %v1724 = vld [vmem:[%s7 + $0xa0] sm:$0xf]
        %v1725 = vld [vmem:[%s7 + $0xa8] sm:$0xf]
        %s1726 = scalar_lea.vmem %s7, 176
        %v1727 = vld [vmem:[%s1726] sm:$0xff]
        %v1728 = vld [vmem:[%s1726 + $0x8] sm:$0xff]
        %v1729 = vld [vmem:[%s1726 + $0x10] sm:$0xff]
        %v1730 = vld [vmem:[%s1726 + $0x18] sm:$0xff]
        %v1731 = vld [vmem:[%s1726 + $0x20] sm:$0xff]
        %v1732 = vld [vmem:[%s1726 + $0x28] sm:$0xff]
        %v1733 = vld [vmem:[%s1726 + $0x30] sm:$0xff]
        %v1734 = vld [vmem:[%s1726 + $0x38] sm:$0xff]
        %v1735 = vld [vmem:[%s1726 + $0x40] sm:$0xff]
        %v1736 = vld [vmem:[%s1726 + $0x48] sm:$0xff]
        %v1737 = vld [vmem:[%s1726 + $0x50] sm:$0xff]
        %v1738 = vld [vmem:[%s1726 + $0x58] sm:$0xff]
        %v1739 = vld [vmem:[%s1726 + $0x60] sm:$0xff]
        %v1740 = vld [vmem:[%s1726 + $0x68] sm:$0xff]
        %v1741 = vld [vmem:[%s1726 + $0x70] sm:$0xff]
        %v1742 = vld [vmem:[%s1726 + $0x78] sm:$0xff]
        %v1743 = vld [vmem:[%s1726 + $0x80] sm:$0xff]
        %v1744 = vld [vmem:[%s1726 + $0x88] sm:$0xff]
        %v1745 = vld [vmem:[%s1726 + $0x90] sm:$0xff]
        %v1746 = vld [vmem:[%s1726 + $0x98] sm:$0xff]
        %v1747 = vld [vmem:[%s1726 + $0xa0] sm:$0xf]
        %v1748 = vld [vmem:[%s1726 + $0xa8] sm:$0xf]
        %vm1751 = vcmask 1046528
        %v1752 = vrot.slane %v1702, 1
        %v1753 = vrot.slane %v1703, 1
        %v1754 = vsel %vm1751, %v1752, %v1753
        %vm1755 = vcmask 687104
        %v1756 = vsel %vm1755, %v1754, 0
        %v1758 = vsel %vm1755, %v1753, 0
        %v1761 = vsel %vm1540, %v1747, 0
        %v1764 = vsel %vm1540, %v1748, 0
        %1766 = vmatprep.subr.mxu0 %v1728
        %1767 = vmatpush1.msra.mxu0 %v1727
        %1768 = vmatprep.subr.mxu0 %v1730
        %1769 = vmatpush1.msra.mxu0 %v1729
        %1770 = vmatprep.subr.mxu0 %v1732
        %1771 = vmatpush1.msra.mxu0 %v1731
        %1772 = vmatprep.subr.mxu0 %v1734
        %1773 = vmatpush1.msra.mxu0 %v1733
        %1774 = vmatprep.subr.mxu0 %v1736
        %1775 = vmatpush1.msra.mxu0 %v1735
        %1776 = vmatprep.subr.mxu0 %v1738
        %1777 = vmatpush1.msra.mxu0 %v1737
        %1778 = vmatprep.subr.mxu0 %v1740
        %1779 = vmatpush1.msra.mxu0 %v1739
        %1780 = vmatprep.subr.mxu0 %v1742
        %1781 = vmatpush1.msra.mxu0 %v1741
        %1782 = vmatprep.subr.mxu0 %v1744
        %1783 = vmatpush1.msra.mxu0 %v1743
        %1784 = vmatprep.subr.mxu0 %v1746
        %1785 = vmatpush1.msra.mxu0 %v1745
        %1786 = vmatprep.subr.mxu0 %v1764
        %1787 = vmatpush1.msra.mxu0 %v1761
        %1788 = vmatprep.subr.mxu0 0.0
        %1789 = vmatpush1.msra.mxu0 0.0
        %1790 = vmatprep.subr.mxu0 0.0
        %1791 = vmatpush1.msra.mxu0 0.0
        %1792 = vmatprep.subr.mxu0 0.0
        %1793 = vmatpush1.msra.mxu0 0.0
        %1794 = vmatprep.subr.mxu0 0.0
        %1795 = vmatpush1.msra.mxu0 0.0
        %1796 = vmatprep.subr.mxu0 0.0
        %1797 = vmatpush1.msra.mxu0 0.0
        %1798 = vmatprep.subr.mxu0 0.0
        %1799 = vmatpush1.msra.mxu0 0.0
        %1800 = vmatprep.subr.mxu0 0.0
        %1801 = vmatpush1.msra.mxu0 0.0
        %1802 = vmatprep.subr.mxu0 0.0
        %1803 = vmatpush1.msra.mxu0 0.0
        %1804 = vmatprep.subr.mxu0 0.0
        %1805 = vmatpush1.msra.mxu0 0.0
        %1806 = vmatprep.subr.mxu0 0.0
        %1807 = vmatpush1.msra.mxu0 0.0
        %1808 = vmatprep.subr.mxu0 0.0
        %1809 = vmatpush1.msra.mxu0 0.0
        %1810 = vmatprep.subr.mxu0 0.0
        %1811 = vmatpush1.msra.mxu0 0.0
        %1812 = vmatprep.subr.mxu0 0.0
        %1813 = vmatpush1.msra.mxu0 0.0
        %1814 = vmatprep.subr.mxu0 0.0
        %1815 = vmatpush1.msra.mxu0 0.0
        %1816 = vmatprep.subr.mxu0 0.0
        %1817 = vmatpush1.msra.mxu0 0.0
        %1818 = vmatprep.subr.mxu0 0.0
        %1819 = vmatpush1.msra.mxu0 0.0
        %1820 = vmatprep.subr.mxu0 0.0
        %1821 = vmatpush1.msra.mxu0 0.0
        %1822 = vmatprep.subr.mxu0 0.0
        %1823 = vmatpush1.msra.mxu0 0.0
        %1824 = vmatprep.subr.mxu0 0.0
        %1825 = vmatpush1.msra.mxu0 0.0
        %1826 = vmatprep.subr.mxu0 0.0
        %1827 = vmatpush1.msra.mxu0 0.0
        %1828 = vmatprep.subr.mxu0 0.0
        %1829 = vmatpush1.msra.mxu0 0.0
        %1830 = vmatprep.mubr.f32.mxu0 0.0
        %1831 = vmatmul.mubr.f32.gmra.mrb[0].mxu0 %v1756
        %v1832 = vpop.f32.mrb[0].mxu0
        %v1833 = vadd.f32 0.0, %v1832
        %v1834 = vpop.f32.mrb[0].mxu0
        %v1835 = vadd.f32 0.0, %v1834
        %1836 = vmatprep.mubr.f32.mxu0 0.0
        %1837 = vmatmul.mubr.f32.gmra.mrb[0].mxu0 %v1758
        %v1838 = vpop.f32.mrb[0].mxu0
        %v1839 = vadd.f32 0.0, %v1838
        %v1840 = vpop.f32.mrb[0].mxu0
        %v1841 = vadd.f32 0.0, %v1840
        %1842 = vdwg.mxu0
        %v1843 = vsel %vm1755, %v1702, 0
        %v1845 = vsel %vm1755, %v1703, 0
        %v1848 = vsel %vm1540, %v1724, 0
        %v1851 = vsel %vm1540, %v1725, 0
        %1853 = vmatprep.subr.mxu0 %v1705
        %1854 = vmatpush1.msra.mxu0 %v1704
        %1855 = vmatprep.subr.mxu0 %v1707
        %1856 = vmatpush1.msra.mxu0 %v1706
        %1857 = vmatprep.subr.mxu0 %v1709
        %1858 = vmatpush1.msra.mxu0 %v1708
        %1859 = vmatprep.subr.mxu0 %v1711
        %1860 = vmatpush1.msra.mxu0 %v1710
        %1861 = vmatprep.subr.mxu0 %v1713
        %1862 = vmatpush1.msra.mxu0 %v1712
        %1863 = vmatprep.subr.mxu0 %v1715
        %1864 = vmatpush1.msra.mxu0 %v1714
        %1865 = vmatprep.subr.mxu0 %v1717
        %1866 = vmatpush1.msra.mxu0 %v1716
        %1867 = vmatprep.subr.mxu0 %v1719
        %1868 = vmatpush1.msra.mxu0 %v1718
        %1869 = vmatprep.subr.mxu0 %v1721
        %1870 = vmatpush1.msra.mxu0 %v1720
        %1871 = vmatprep.subr.mxu0 %v1723
        %1872 = vmatpush1.msra.mxu0 %v1722
        %1873 = vmatprep.subr.mxu0 %v1851
        %1874 = vmatpush1.msra.mxu0 %v1848
        %1875 = vmatprep.subr.mxu0 0.0
        %1876 = vmatpush1.msra.mxu0 0.0
        %1877 = vmatprep.subr.mxu0 0.0
        %1878 = vmatpush1.msra.mxu0 0.0
        %1879 = vmatprep.subr.mxu0 0.0
        %1880 = vmatpush1.msra.mxu0 0.0
        %1881 = vmatprep.subr.mxu0 0.0
        %1882 = vmatpush1.msra.mxu0 0.0
        %1883 = vmatprep.subr.mxu0 0.0
        %1884 = vmatpush1.msra.mxu0 0.0
        %1885 = vmatprep.subr.mxu0 0.0
        %1886 = vmatpush1.msra.mxu0 0.0
        %1887 = vmatprep.subr.mxu0 0.0
        %1888 = vmatpush1.msra.mxu0 0.0
        %1889 = vmatprep.subr.mxu0 0.0
        %1890 = vmatpush1.msra.mxu0 0.0
        %1891 = vmatprep.subr.mxu0 0.0
        %1892 = vmatpush1.msra.mxu0 0.0
        %1893 = vmatprep.subr.mxu0 0.0
        %1894 = vmatpush1.msra.mxu0 0.0
        %1895 = vmatprep.subr.mxu0 0.0
        %1896 = vmatpush1.msra.mxu0 0.0
        %1897 = vmatprep.subr.mxu0 0.0
        %1898 = vmatpush1.msra.mxu0 0.0
        %1899 = vmatprep.subr.mxu0 0.0
        %1900 = vmatpush1.msra.mxu0 0.0
        %1901 = vmatprep.subr.mxu0 0.0
        %1902 = vmatpush1.msra.mxu0 0.0
        %1903 = vmatprep.subr.mxu0 0.0
        %1904 = vmatpush1.msra.mxu0 0.0
        %1905 = vmatprep.subr.mxu0 0.0
        %1906 = vmatpush1.msra.mxu0 0.0
        %1907 = vmatprep.subr.mxu0 0.0
        %1908 = vmatpush1.msra.mxu0 0.0
        %1909 = vmatprep.subr.mxu0 0.0
        %1910 = vmatpush1.msra.mxu0 0.0
        %1911 = vmatprep.subr.mxu0 0.0
        %1912 = vmatpush1.msra.mxu0 0.0
        %1913 = vmatprep.subr.mxu0 0.0
        %1914 = vmatpush1.msra.mxu0 0.0
        %1915 = vmatprep.subr.mxu0 0.0
        %1916 = vmatpush1.msra.mxu0 0.0
        %1917 = vmatprep.mubr.f32.mxu0 0.0
        %1918 = vmatmul.mubr.f32.gmra.mrb[0].mxu0 %v1843
        %v1919 = vpop.f32.mrb[0].mxu0
        %v1920 = vadd.f32 %v1833, %v1919
        %v1921 = vpop.f32.mrb[0].mxu0
        %v1922 = vadd.f32 %v1835, %v1921
        %1923 = vmatprep.mubr.f32.mxu0 0.0
        %1924 = vmatmul.mubr.f32.gmra.mrb[0].mxu0 %v1845
        %v1925 = vpop.f32.mrb[0].mxu0
        %v1926 = vadd.f32 %v1839, %v1925
        %v1927 = vpop.f32.mrb[0].mxu0
        %v1928 = vadd.f32 %v1841, %v1927
        %1929 = vdwg.mxu0
        %s1930 = scalar_lea.vmem %s7, 352
        %v1931 = vld [vmem:[%s1930] sm:$0xff]
        %v1932 = vld [vmem:[%s1930 + $0x8] sm:$0xff]
        %v1933 = vld [vmem:[%s1930 + $0x10] sm:$0xff]
        %v1934 = vld [vmem:[%s1930 + $0x18] sm:$0xff]
        %v1935 = vld [vmem:[%s1930 + $0x20] sm:$0xff]
        %v1936 = vld [vmem:[%s1930 + $0x28] sm:$0xff]
        %v1937 = vld [vmem:[%s1930 + $0x30] sm:$0xff]
        %v1938 = vld [vmem:[%s1930 + $0x38] sm:$0xff]
        %v1939 = vld [vmem:[%s1930 + $0x40] sm:$0xff]
        %v1940 = vld [vmem:[%s1930 + $0x48] sm:$0xff]
        %v1941 = vld [vmem:[%s1930 + $0x50] sm:$0xff]
        %v1942 = vld [vmem:[%s1930 + $0x58] sm:$0xff]
        %v1943 = vld [vmem:[%s1930 + $0x60] sm:$0xff]
        %v1944 = vld [vmem:[%s1930 + $0x68] sm:$0xff]
        %v1945 = vld [vmem:[%s1930 + $0x70] sm:$0xff]
        %v1946 = vld [vmem:[%s1930 + $0x78] sm:$0xff]
        %v1947 = vld [vmem:[%s1930 + $0x80] sm:$0xff]
        %v1948 = vld [vmem:[%s1930 + $0x88] sm:$0xff]
        %v1949 = vld [vmem:[%s1930 + $0x90] sm:$0xff]
        %v1950 = vld [vmem:[%s1930 + $0x98] sm:$0xff]
        %v1951 = vld [vmem:[%s1930 + $0xa0] sm:$0xf]
        %v1952 = vld [vmem:[%s1930 + $0xa8] sm:$0xf]
        %vm1953 = vcmask 1045504
        %v1954 = vrot.slane %v1702, 2
        %v1955 = vrot.slane %v1703, 2
        %v1956 = vsel %vm1953, %v1954, %v1955
        %v1957 = vsel %vm1755, %v1956, 0
        %v1959 = vsel %vm1755, %v1955, 0
        %v1962 = vsel %vm1540, %v1951, 0
        %v1965 = vsel %vm1540, %v1952, 0
        %1967 = vmatprep.subr.mxu0 %v1932
        %1968 = vmatpush1.msra.mxu0 %v1931
        %1969 = vmatprep.subr.mxu0 %v1934
        %1970 = vmatpush1.msra.mxu0 %v1933
        %1971 = vmatprep.subr.mxu0 %v1936
        %1972 = vmatpush1.msra.mxu0 %v1935
        %1973 = vmatprep.subr.mxu0 %v1938
        %1974 = vmatpush1.msra.mxu0 %v1937
        %1975 = vmatprep.subr.mxu0 %v1940
        %1976 = vmatpush1.msra.mxu0 %v1939
        %1977 = vmatprep.subr.mxu0 %v1942
        %1978 = vmatpush1.msra.mxu0 %v1941
        %1979 = vmatprep.subr.mxu0 %v1944
        %1980 = vmatpush1.msra.mxu0 %v1943
        %1981 = vmatprep.subr.mxu0 %v1946
        %1982 = vmatpush1.msra.mxu0 %v1945
        %1983 = vmatprep.subr.mxu0 %v1948
        %1984 = vmatpush1.msra.mxu0 %v1947
        %1985 = vmatprep.subr.mxu0 %v1950
        %1986 = vmatpush1.msra.mxu0 %v1949
        %1987 = vmatprep.subr.mxu0 %v1965
        %1988 = vmatpush1.msra.mxu0 %v1962
        %1989 = vmatprep.subr.mxu0 0.0
        %1990 = vmatpush1.msra.mxu0 0.0
        %1991 = vmatprep.subr.mxu0 0.0
        %1992 = vmatpush1.msra.mxu0 0.0
        %1993 = vmatprep.subr.mxu0 0.0
        %1994 = vmatpush1.msra.mxu0 0.0
        %1995 = vmatprep.subr.mxu0 0.0
        %1996 = vmatpush1.msra.mxu0 0.0
        %1997 = vmatprep.subr.mxu0 0.0
        %1998 = vmatpush1.msra.mxu0 0.0
        %1999 = vmatprep.subr.mxu0 0.0
        %2000 = vmatpush1.msra.mxu0 0.0
        %2001 = vmatprep.subr.mxu0 0.0
        %2002 = vmatpush1.msra.mxu0 0.0
        %2003 = vmatprep.subr.mxu0 0.0
        %2004 = vmatpush1.msra.mxu0 0.0
        %2005 = vmatprep.subr.mxu0 0.0
        %2006 = vmatpush1.msra.mxu0 0.0
        %2007 = vmatprep.subr.mxu0 0.0
        %2008 = vmatpush1.msra.mxu0 0.0
        %2009 = vmatprep.subr.mxu0 0.0
        %2010 = vmatpush1.msra.mxu0 0.0
        %2011 = vmatprep.subr.mxu0 0.0
        %2012 = vmatpush1.msra.mxu0 0.0
        %2013 = vmatprep.subr.mxu0 0.0
        %2014 = vmatpush1.msra.mxu0 0.0
        %2015 = vmatprep.subr.mxu0 0.0
        %2016 = vmatpush1.msra.mxu0 0.0
        %2017 = vmatprep.subr.mxu0 0.0
        %2018 = vmatpush1.msra.mxu0 0.0
        %2019 = vmatprep.subr.mxu0 0.0
        %2020 = vmatpush1.msra.mxu0 0.0
        %2021 = vmatprep.subr.mxu0 0.0
        %2022 = vmatpush1.msra.mxu0 0.0
        %2023 = vmatprep.subr.mxu0 0.0
        %2024 = vmatpush1.msra.mxu0 0.0
        %2025 = vmatprep.subr.mxu0 0.0
        %2026 = vmatpush1.msra.mxu0 0.0
        %2027 = vmatprep.subr.mxu0 0.0
        %2028 = vmatpush1.msra.mxu0 0.0
        %2029 = vmatprep.subr.mxu0 0.0
        %2030 = vmatpush1.msra.mxu0 0.0
        %2031 = vmatprep.mubr.f32.mxu0 0.0
        %2032 = vmatmul.mubr.f32.gmra.mrb[0].mxu0 %v1957
        %v2033 = vpop.f32.mrb[0].mxu0
        %v2034 = vadd.f32 0.0, %v2033
        %v2035 = vpop.f32.mrb[0].mxu0
        %v2036 = vadd.f32 0.0, %v2035
        %2037 = vmatprep.mubr.f32.mxu0 0.0
        %2038 = vmatmul.mubr.f32.gmra.mrb[0].mxu0 %v1959
        %v2039 = vpop.f32.mrb[0].mxu0
        %v2040 = vadd.f32 0.0, %v2039
        %v2041 = vpop.f32.mrb[0].mxu0
        %v2042 = vadd.f32 0.0, %v2041
        %2043 = vdwg.mxu0
        %v2044 = vadd.f32 %v1920, %v2034
        %v2045 = vadd.f32 %v1922, %v2036
        %v2046 = vadd.f32 %v1926, %v2040
        %v2047 = vadd.f32 %v1928, %v2042
        %s2048 = scalar_lea.vmem %s7, 528
        %v2049 = vld [vmem:[%s2048] sm:$0xff]
        %v2050 = vld [vmem:[%s2048 + $0x8] sm:$0xff]
        %v2051 = vld [vmem:[%s2048 + $0x10] sm:$0xff]
        %v2052 = vld [vmem:[%s2048 + $0x18] sm:$0xff]
        %v2053 = vld [vmem:[%s2048 + $0x20] sm:$0xff]
        %v2054 = vld [vmem:[%s2048 + $0x28] sm:$0xff]
        %v2055 = vld [vmem:[%s2048 + $0x30] sm:$0xff]
        %v2056 = vld [vmem:[%s2048 + $0x38] sm:$0xff]
        %v2057 = vld [vmem:[%s2048 + $0x40] sm:$0xff]
        %v2058 = vld [vmem:[%s2048 + $0x48] sm:$0xff]
        %v2059 = vld [vmem:[%s2048 + $0x50] sm:$0xff]
        %v2060 = vld [vmem:[%s2048 + $0x58] sm:$0xff]
        %v2061 = vld [vmem:[%s2048 + $0x60] sm:$0xff]
        %v2062 = vld [vmem:[%s2048 + $0x68] sm:$0xff]
        %v2063 = vld [vmem:[%s2048 + $0x70] sm:$0xff]
        %v2064 = vld [vmem:[%s2048 + $0x78] sm:$0xff]
        %v2065 = vld [vmem:[%s2048 + $0x80] sm:$0xff]
        %v2066 = vld [vmem:[%s2048 + $0x88] sm:$0xff]
        %v2067 = vld [vmem:[%s2048 + $0x90] sm:$0xff]
        %v2068 = vld [vmem:[%s2048 + $0x98] sm:$0xff]
        %v2069 = vld [vmem:[%s2048 + $0xa0] sm:$0xf]
        %v2070 = vld [vmem:[%s2048 + $0xa8] sm:$0xf]
        %vm2071 = vcmask 1044480
        %v2072 = vrot.slane %v1702, 3
        %v2073 = vrot.slane %v1703, 3
        %v2074 = vsel %vm2071, %v2072, %v2073
        %v2075 = vsel %vm1755, %v2074, 0
        %v2077 = vsel %vm1755, %v2073, 0
        %v2080 = vsel %vm1540, %v2069, 0
        %v2083 = vsel %vm1540, %v2070, 0
        %2085 = vmatprep.subr.mxu0 %v2050
        %2086 = vmatpush1.msra.mxu0 %v2049
        %2087 = vmatprep.subr.mxu0 %v2052
        %2088 = vmatpush1.msra.mxu0 %v2051
        %2089 = vmatprep.subr.mxu0 %v2054
        %2090 = vmatpush1.msra.mxu0 %v2053
        %2091 = vmatprep.subr.mxu0 %v2056
        %2092 = vmatpush1.msra.mxu0 %v2055
        %2093 = vmatprep.subr.mxu0 %v2058
        %2094 = vmatpush1.msra.mxu0 %v2057
        %2095 = vmatprep.subr.mxu0 %v2060
        %2096 = vmatpush1.msra.mxu0 %v2059
        %2097 = vmatprep.subr.mxu0 %v2062
        %2098 = vmatpush1.msra.mxu0 %v2061
        %2099 = vmatprep.subr.mxu0 %v2064
        %2100 = vmatpush1.msra.mxu0 %v2063
        %2101 = vmatprep.subr.mxu0 %v2066
        %2102 = vmatpush1.msra.mxu0 %v2065
        %2103 = vmatprep.subr.mxu0 %v2068
        %2104 = vmatpush1.msra.mxu0 %v2067
        %2105 = vmatprep.subr.mxu0 %v2083
        %2106 = vmatpush1.msra.mxu0 %v2080
        %2107 = vmatprep.subr.mxu0 0.0
        %2108 = vmatpush1.msra.mxu0 0.0
        %2109 = vmatprep.subr.mxu0 0.0
        %2110 = vmatpush1.msra.mxu0 0.0
        %2111 = vmatprep.subr.mxu0 0.0
        %2112 = vmatpush1.msra.mxu0 0.0
        %2113 = vmatprep.subr.mxu0 0.0
        %2114 = vmatpush1.msra.mxu0 0.0
        %2115 = vmatprep.subr.mxu0 0.0
        %2116 = vmatpush1.msra.mxu0 0.0
        %2117 = vmatprep.subr.mxu0 0.0
        %2118 = vmatpush1.msra.mxu0 0.0
        %2119 = vmatprep.subr.mxu0 0.0
        %2120 = vmatpush1.msra.mxu0 0.0
        %2121 = vmatprep.subr.mxu0 0.0
        %2122 = vmatpush1.msra.mxu0 0.0
        %2123 = vmatprep.subr.mxu0 0.0
        %2124 = vmatpush1.msra.mxu0 0.0
        %2125 = vmatprep.subr.mxu0 0.0
        %2126 = vmatpush1.msra.mxu0 0.0
        %2127 = vmatprep.subr.mxu0 0.0
        %2128 = vmatpush1.msra.mxu0 0.0
        %2129 = vmatprep.subr.mxu0 0.0
        %2130 = vmatpush1.msra.mxu0 0.0
        %2131 = vmatprep.subr.mxu0 0.0
        %2132 = vmatpush1.msra.mxu0 0.0
        %2133 = vmatprep.subr.mxu0 0.0
        %2134 = vmatpush1.msra.mxu0 0.0
        %2135 = vmatprep.subr.mxu0 0.0
        %2136 = vmatpush1.msra.mxu0 0.0
        %2137 = vmatprep.subr.mxu0 0.0
        %2138 = vmatpush1.msra.mxu0 0.0
        %2139 = vmatprep.subr.mxu0 0.0
        %2140 = vmatpush1.msra.mxu0 0.0
        %2141 = vmatprep.subr.mxu0 0.0
        %2142 = vmatpush1.msra.mxu0 0.0
        %2143 = vmatprep.subr.mxu0 0.0
        %2144 = vmatpush1.msra.mxu0 0.0
        %2145 = vmatprep.subr.mxu0 0.0
        %2146 = vmatpush1.msra.mxu0 0.0
        %2147 = vmatprep.subr.mxu0 0.0
        %2148 = vmatpush1.msra.mxu0 0.0
        %2149 = vmatprep.mubr.f32.mxu0 0.0
        %2150 = vmatmul.mubr.f32.gmra.mrb[0].mxu0 %v2075
        %v2151 = vpop.f32.mrb[0].mxu0
        %v2152 = vadd.f32 0.0, %v2151
        %v2153 = vpop.f32.mrb[0].mxu0
        %v2154 = vadd.f32 0.0, %v2153
        %2155 = vmatprep.mubr.f32.mxu0 0.0
        %2156 = vmatmul.mubr.f32.gmra.mrb[0].mxu0 %v2077
        %v2157 = vpop.f32.mrb[0].mxu0
        %v2158 = vadd.f32 0.0, %v2157
        %v2159 = vpop.f32.mrb[0].mxu0
        %v2160 = vadd.f32 0.0, %v2159
        %2161 = vdwg.mxu0
        %v2162 = vadd.f32 %v2044, %v2152
        %v2163 = vadd.f32 %v2045, %v2154
        %v2164 = vadd.f32 %v2046, %v2158
        %v2165 = vadd.f32 %v2047, %v2160
        %s2166 = scalar_lea.vmem %s7, 704
        %v2167 = vld [vmem:[%s2166] sm:$0xff]
        %v2168 = vld [vmem:[%s2166 + $0x8] sm:$0xff]
        %v2169 = vld [vmem:[%s2166 + $0x10] sm:$0xff]
        %v2170 = vld [vmem:[%s2166 + $0x18] sm:$0xff]
        %v2171 = vld [vmem:[%s2166 + $0x20] sm:$0xff]
        %v2172 = vld [vmem:[%s2166 + $0x28] sm:$0xff]
        %v2173 = vld [vmem:[%s2166 + $0x30] sm:$0xff]
        %v2174 = vld [vmem:[%s2166 + $0x38] sm:$0xff]
        %v2175 = vld [vmem:[%s2166 + $0x40] sm:$0xff]
        %v2176 = vld [vmem:[%s2166 + $0x48] sm:$0xff]
        %v2177 = vld [vmem:[%s2166 + $0x50] sm:$0xff]
        %v2178 = vld [vmem:[%s2166 + $0x58] sm:$0xff]
        %v2179 = vld [vmem:[%s2166 + $0x60] sm:$0xff]
        %v2180 = vld [vmem:[%s2166 + $0x68] sm:$0xff]
        %v2181 = vld [vmem:[%s2166 + $0x70] sm:$0xff]
        %v2182 = vld [vmem:[%s2166 + $0x78] sm:$0xff]
        %v2183 = vld [vmem:[%s2166 + $0x80] sm:$0xff]
        %v2184 = vld [vmem:[%s2166 + $0x88] sm:$0xff]
        %v2185 = vld [vmem:[%s2166 + $0x90] sm:$0xff]
        %v2186 = vld [vmem:[%s2166 + $0x98] sm:$0xff]
        %v2187 = vld [vmem:[%s2166 + $0xa0] sm:$0xf]
        %v2188 = vld [vmem:[%s2166 + $0xa8] sm:$0xf]
        %v2189 = vrot.slane %v1702, 4
        %v2190 = vrot.slane %v1703, 4
        %v2191 = vsel %vm1540, %v2189, %v2190
        %v2192 = vsel %vm1755, %v2191, 0
        %v2194 = vsel %vm1755, %v2190, 0
        %v2197 = vsel %vm1540, %v2187, 0
        %v2200 = vsel %vm1540, %v2188, 0
        %2202 = vmatprep.subr.mxu0 %v2168
        %2203 = vmatpush1.msra.mxu0 %v2167
        %2204 = vmatprep.subr.mxu0 %v2170
        %2205 = vmatpush1.msra.mxu0 %v2169
        %2206 = vmatprep.subr.mxu0 %v2172
        %2207 = vmatpush1.msra.mxu0 %v2171
        %2208 = vmatprep.subr.mxu0 %v2174
        %2209 = vmatpush1.msra.mxu0 %v2173
        %2210 = vmatprep.subr.mxu0 %v2176
        %2211 = vmatpush1.msra.mxu0 %v2175
        %2212 = vmatprep.subr.mxu0 %v2178
        %2213 = vmatpush1.msra.mxu0 %v2177
        %2214 = vmatprep.subr.mxu0 %v2180
        %2215 = vmatpush1.msra.mxu0 %v2179
        %2216 = vmatprep.subr.mxu0 %v2182
        %2217 = vmatpush1.msra.mxu0 %v2181
        %2218 = vmatprep.subr.mxu0 %v2184
        %2219 = vmatpush1.msra.mxu0 %v2183
        %2220 = vmatprep.subr.mxu0 %v2186
        %2221 = vmatpush1.msra.mxu0 %v2185
        %2222 = vmatprep.subr.mxu0 %v2200
        %2223 = vmatpush1.msra.mxu0 %v2197
        %2224 = vmatprep.subr.mxu0 0.0
        %2225 = vmatpush1.msra.mxu0 0.0
        %2226 = vmatprep.subr.mxu0 0.0
        %2227 = vmatpush1.msra.mxu0 0.0
        %2228 = vmatprep.subr.mxu0 0.0
        %2229 = vmatpush1.msra.mxu0 0.0
        %2230 = vmatprep.subr.mxu0 0.0
        %2231 = vmatpush1.msra.mxu0 0.0
        %2232 = vmatprep.subr.mxu0 0.0
        %2233 = vmatpush1.msra.mxu0 0.0
        %2234 = vmatprep.subr.mxu0 0.0
        %2235 = vmatpush1.msra.mxu0 0.0
        %2236 = vmatprep.subr.mxu0 0.0
        %2237 = vmatpush1.msra.mxu0 0.0
        %2238 = vmatprep.subr.mxu0 0.0
        %2239 = vmatpush1.msra.mxu0 0.0
        %2240 = vmatprep.subr.mxu0 0.0
        %2241 = vmatpush1.msra.mxu0 0.0
        %2242 = vmatprep.subr.mxu0 0.0
        %2243 = vmatpush1.msra.mxu0 0.0
        %2244 = vmatprep.subr.mxu0 0.0
        %2245 = vmatpush1.msra.mxu0 0.0
        %2246 = vmatprep.subr.mxu0 0.0
        %2247 = vmatpush1.msra.mxu0 0.0
        %2248 = vmatprep.subr.mxu0 0.0
        %2249 = vmatpush1.msra.mxu0 0.0
        %2250 = vmatprep.subr.mxu0 0.0
        %2251 = vmatpush1.msra.mxu0 0.0
        %2252 = vmatprep.subr.mxu0 0.0
        %2253 = vmatpush1.msra.mxu0 0.0
        %2254 = vmatprep.subr.mxu0 0.0
        %2255 = vmatpush1.msra.mxu0 0.0
        %2256 = vmatprep.subr.mxu0 0.0
        %2257 = vmatpush1.msra.mxu0 0.0
        %2258 = vmatprep.subr.mxu0 0.0
        %2259 = vmatpush1.msra.mxu0 0.0
        %2260 = vmatprep.subr.mxu0 0.0
        %2261 = vmatpush1.msra.mxu0 0.0
        %2262 = vmatprep.subr.mxu0 0.0
        %2263 = vmatpush1.msra.mxu0 0.0
        %2264 = vmatprep.subr.mxu0 0.0
        %2265 = vmatpush1.msra.mxu0 0.0
        %2266 = vmatprep.mubr.f32.mxu0 0.0
        %2267 = vmatmul.mubr.f32.gmra.mrb[0].mxu0 %v2192
        %v2268 = vpop.f32.mrb[0].mxu0
        %v2269 = vadd.f32 0.0, %v2268
        %v2270 = vpop.f32.mrb[0].mxu0
        %v2271 = vadd.f32 0.0, %v2270
        %2272 = vmatprep.mubr.f32.mxu0 0.0
        %2273 = vmatmul.mubr.f32.gmra.mrb[0].mxu0 %v2194
        %v2274 = vpop.f32.mrb[0].mxu0
        %v2275 = vadd.f32 0.0, %v2274
        %v2276 = vpop.f32.mrb[0].mxu0
        %v2277 = vadd.f32 0.0, %v2276
        %2278 = vdwg.mxu0
        %v2279 = vadd.f32 %v2162, %v2269
        %v2280 = vadd.f32 %v2163, %v2271
        %v2281 = vadd.f32 %v2164, %v2275
        %v2282 = vadd.f32 %v2165, %v2277
        %v2283 = vld [vmem:[%s8] sm:$0x3]
        %v2285 = vlaneseq
        %v2286 = vshrl.u32 %v2285, 7
        %v2287 = vsub.s32 0, %v2286
        %v2288 = vrot.slane %v2283, %v2287
        %v2289 = vlaneseq
        %v2290 = vshrl.u32 %v2289, 7
        %v2291 = vsub.s32 1, %v2290
        %v2292 = vrot.slane %v2283, %v2291
        %v2295 = vadd.f32 %v2279, %v2288
        %v2296 = vadd.f32 %v2280, %v2292
        %v2297 = vadd.f32 %v2281, %v2288
        %v2298 = vadd.f32 %v2282, %v2292
        %v2299 = vmax.f32 %v2295, 0.0
        %v2300 = vmax.f32 %v2296, 0.0
        %v2301 = vmax.f32 %v2297, 0.0
        %v2302 = vmax.f32 %v2298, 0.0
        %v2303 = vld [vmem:[%s9] sm:$0xff]
        %v2304 = vld [vmem:[%s9 + $0x8] sm:$0xff]
        %v2305 = vld [vmem:[%s9 + $0x10] sm:$0xff]
        %v2306 = vld [vmem:[%s9 + $0x18] sm:$0xff]
        %v2307 = vld [vmem:[%s9 + $0x20] sm:$0xff]
        %v2308 = vld [vmem:[%s9 + $0x28] sm:$0xff]
        %v2309 = vld [vmem:[%s9 + $0x30] sm:$0xff]
        %v2310 = vld [vmem:[%s9 + $0x38] sm:$0xff]
        %v2311 = vld [vmem:[%s9 + $0x40] sm:$0xff]
        %v2312 = vld [vmem:[%s9 + $0x48] sm:$0xff]
        %v2313 = vld [vmem:[%s9 + $0x50] sm:$0xff]
        %v2314 = vld [vmem:[%s9 + $0x58] sm:$0xff]
        %v2315 = vld [vmem:[%s9 + $0x60] sm:$0xff]
        %v2316 = vld [vmem:[%s9 + $0x68] sm:$0xff]
        %v2317 = vld [vmem:[%s9 + $0x70] sm:$0xff]
        %v2318 = vld [vmem:[%s9 + $0x78] sm:$0xff]
        %v2319 = vld [vmem:[%s9 + $0x80] sm:$0xff]
        %v2320 = vld [vmem:[%s9 + $0x88] sm:$0xff]
        %v2321 = vld [vmem:[%s9 + $0x90] sm:$0xff]
        %v2322 = vld [vmem:[%s9 + $0x98] sm:$0xff]
        %vm2323 = vcmask 261120
        %v2325 = vsel %vm2323, %v2300, 0
        %v2328 = vsel %vm2323, %v2302, 0
        %2330 = vmatprep.subr.mxu0 0.0
        %2331 = vmatpush1.msra.mxu0 %v2303
        %2332 = vmatprep.subr.mxu0 0.0
        %2333 = vmatpush1.msra.mxu0 %v2304
        %2334 = vmatprep.subr.mxu0 0.0
        %2335 = vmatpush1.msra.mxu0 %v2305
        %2336 = vmatprep.subr.mxu0 0.0
        %2337 = vmatpush1.msra.mxu0 %v2306
        %2338 = vmatprep.subr.mxu0 0.0
        %2339 = vmatpush1.msra.mxu0 %v2307
        %2340 = vmatprep.subr.mxu0 0.0
        %2341 = vmatpush1.msra.mxu0 %v2308
        %2342 = vmatprep.subr.mxu0 0.0
        %2343 = vmatpush1.msra.mxu0 %v2309
        %2344 = vmatprep.subr.mxu0 0.0
        %2345 = vmatpush1.msra.mxu0 %v2310
        %2346 = vmatprep.subr.mxu0 0.0
        %2347 = vmatpush1.msra.mxu0 %v2311
        %2348 = vmatprep.subr.mxu0 0.0
        %2349 = vmatpush1.msra.mxu0 %v2312
        %2350 = vmatprep.subr.mxu0 0.0
        %2351 = vmatpush1.msra.mxu0 %v2313
        %2352 = vmatprep.subr.mxu0 0.0
        %2353 = vmatpush1.msra.mxu0 %v2314
        %2354 = vmatprep.subr.mxu0 0.0
        %2355 = vmatpush1.msra.mxu0 %v2315
        %2356 = vmatprep.subr.mxu0 0.0
        %2357 = vmatpush1.msra.mxu0 %v2316
        %2358 = vmatprep.subr.mxu0 0.0
        %2359 = vmatpush1.msra.mxu0 %v2317
        %2360 = vmatprep.subr.mxu0 0.0
        %2361 = vmatpush1.msra.mxu0 %v2318
        %2362 = vmatprep.subr.mxu0 0.0
        %2363 = vmatpush1.msra.mxu0 %v2319
        %2364 = vmatprep.subr.mxu0 0.0
        %2365 = vmatpush1.msra.mxu0 %v2320
        %2366 = vmatprep.subr.mxu0 0.0
        %2367 = vmatpush1.msra.mxu0 %v2321
        %2368 = vmatprep.subr.mxu0 0.0
        %2369 = vmatpush1.msra.mxu0 %v2322
        %2370 = vmatprep.subr.mxu0 0.0
        %2371 = vmatpush1.msra.mxu0 0.0
        %2372 = vmatprep.subr.mxu0 0.0
        %2373 = vmatpush1.msra.mxu0 0.0
        %2374 = vmatprep.subr.mxu0 0.0
        %2375 = vmatpush1.msra.mxu0 0.0
        %2376 = vmatprep.subr.mxu0 0.0
        %2377 = vmatpush1.msra.mxu0 0.0
        %2378 = vmatprep.subr.mxu0 0.0
        %2379 = vmatpush1.msra.mxu0 0.0
        %2380 = vmatprep.subr.mxu0 0.0
        %2381 = vmatpush1.msra.mxu0 0.0
        %2382 = vmatprep.subr.mxu0 0.0
        %2383 = vmatpush1.msra.mxu0 0.0
        %2384 = vmatprep.subr.mxu0 0.0
        %2385 = vmatpush1.msra.mxu0 0.0
        %2386 = vmatprep.subr.mxu0 0.0
        %2387 = vmatpush1.msra.mxu0 0.0
        %2388 = vmatprep.subr.mxu0 0.0
        %2389 = vmatpush1.msra.mxu0 0.0
        %2390 = vmatprep.subr.mxu0 0.0
        %2391 = vmatpush1.msra.mxu0 0.0
        %2392 = vmatprep.subr.mxu0 0.0
        %2393 = vmatpush1.msra.mxu0 0.0
        %2394 = vmatprep.mubr.f32.mxu0 %v2325
        %2395 = vmatmul.mubr.f32.gmra.mrb[0].mxu0 %v2299
        %v2396 = vpop.f32.mrb[0].mxu0
        %v2397 = vadd.f32 0.0, %v2396
        %v2398 = vpop.f32.mrb[0].mxu0
        %2399 = vmatprep.mubr.f32.mxu0 %v2328
        %2400 = vmatmul.mubr.f32.gmra.mrb[0].mxu0 %v2301
        %v2401 = vpop.f32.mrb[0].mxu0
        %v2402 = vadd.f32 0.0, %v2401
        %v2403 = vpop.f32.mrb[0].mxu0
        %2404 = vdwg.mxu0
        %v2405 = vld [vmem:[%s10] sm:$0xff]
        %v2406 = vld [vmem:[%s10 + $0x8] sm:$0xff]
        %v2407 = vld [vmem:[%s10 + $0x10] sm:$0xff]
        %v2408 = vld [vmem:[%s10 + $0x18] sm:$0xff]
        %v2409 = vld [vmem:[%s10 + $0x20] sm:$0xff]
        %v2410 = vld [vmem:[%s10 + $0x28] sm:$0xff]
        %v2411 = vld [vmem:[%s10 + $0x30] sm:$0xff]
        %v2412 = vld [vmem:[%s10 + $0x38] sm:$0xff]
        %v2413 = vld [vmem:[%s10 + $0x40] sm:$0xff]
        %v2414 = vld [vmem:[%s10 + $0x48] sm:$0xff]
        %v2415 = vld [vmem:[%s10 + $0x50] sm:$0xff]
        %v2416 = vld [vmem:[%s10 + $0x58] sm:$0xff]
        %v2417 = vld [vmem:[%s10 + $0x60] sm:$0xff]
        %v2418 = vld [vmem:[%s10 + $0x68] sm:$0xff]
        %v2419 = vld [vmem:[%s10 + $0x70] sm:$0xff]
        %v2420 = vld [vmem:[%s10 + $0x78] sm:$0xff]
        %v2421 = vld [vmem:[%s10 + $0x80] sm:$0xff]
        %v2422 = vld [vmem:[%s10 + $0x88] sm:$0xff]
        %v2423 = vld [vmem:[%s10 + $0x90] sm:$0xff]
        %v2424 = vld [vmem:[%s10 + $0x98] sm:$0xff]
        %2425 = vmatprep.subr.mxu0 0.0
        %2426 = vmatpush1.msra.mxu0 %v2405
        %2427 = vmatprep.subr.mxu0 0.0
        %2428 = vmatpush1.msra.mxu0 %v2406
        %2429 = vmatprep.subr.mxu0 0.0
        %2430 = vmatpush1.msra.mxu0 %v2407
        %2431 = vmatprep.subr.mxu0 0.0
        %2432 = vmatpush1.msra.mxu0 %v2408
        %2433 = vmatprep.subr.mxu0 0.0
        %2434 = vmatpush1.msra.mxu0 %v2409
        %2435 = vmatprep.subr.mxu0 0.0
        %2436 = vmatpush1.msra.mxu0 %v2410
        %2437 = vmatprep.subr.mxu0 0.0
        %2438 = vmatpush1.msra.mxu0 %v2411
        %2439 = vmatprep.subr.mxu0 0.0
        %2440 = vmatpush1.msra.mxu0 %v2412
        %2441 = vmatprep.subr.mxu0 0.0
        %2442 = vmatpush1.msra.mxu0 %v2413
        %2443 = vmatprep.subr.mxu0 0.0
        %2444 = vmatpush1.msra.mxu0 %v2414
        %2445 = vmatprep.subr.mxu0 0.0
        %2446 = vmatpush1.msra.mxu0 %v2415
        %2447 = vmatprep.subr.mxu0 0.0
        %2448 = vmatpush1.msra.mxu0 %v2416
        %2449 = vmatprep.subr.mxu0 0.0
        %2450 = vmatpush1.msra.mxu0 %v2417
        %2451 = vmatprep.subr.mxu0 0.0
        %2452 = vmatpush1.msra.mxu0 %v2418
        %2453 = vmatprep.subr.mxu0 0.0
        %2454 = vmatpush1.msra.mxu0 %v2419
        %2455 = vmatprep.subr.mxu0 0.0
        %2456 = vmatpush1.msra.mxu0 %v2420
        %2457 = vmatprep.subr.mxu0 0.0
        %2458 = vmatpush1.msra.mxu0 %v2421
        %2459 = vmatprep.subr.mxu0 0.0
        %2460 = vmatpush1.msra.mxu0 %v2422
        %2461 = vmatprep.subr.mxu0 0.0
        %2462 = vmatpush1.msra.mxu0 %v2423
        %2463 = vmatprep.subr.mxu0 0.0
        %2464 = vmatpush1.msra.mxu0 %v2424
        %2465 = vmatprep.subr.mxu0 0.0
        %2466 = vmatpush1.msra.mxu0 0.0
        %2467 = vmatprep.subr.mxu0 0.0
        %2468 = vmatpush1.msra.mxu0 0.0
        %2469 = vmatprep.subr.mxu0 0.0
        %2470 = vmatpush1.msra.mxu0 0.0
        %2471 = vmatprep.subr.mxu0 0.0
        %2472 = vmatpush1.msra.mxu0 0.0
        %2473 = vmatprep.subr.mxu0 0.0
        %2474 = vmatpush1.msra.mxu0 0.0
        %2475 = vmatprep.subr.mxu0 0.0
        %2476 = vmatpush1.msra.mxu0 0.0
        %2477 = vmatprep.subr.mxu0 0.0
        %2478 = vmatpush1.msra.mxu0 0.0
        %2479 = vmatprep.subr.mxu0 0.0
        %2480 = vmatpush1.msra.mxu0 0.0
        %2481 = vmatprep.subr.mxu0 0.0
        %2482 = vmatpush1.msra.mxu0 0.0
        %2483 = vmatprep.subr.mxu0 0.0
        %2484 = vmatpush1.msra.mxu0 0.0
        %2485 = vmatprep.subr.mxu0 0.0
        %2486 = vmatpush1.msra.mxu0 0.0
        %2487 = vmatprep.subr.mxu0 0.0
        %2488 = vmatpush1.msra.mxu0 0.0
        %2489 = vmatprep.mubr.f32.mxu0 %v2325
        %2490 = vmatmul.mubr.f32.gmra.mrb[0].mxu0 %v2299
        %v2491 = vpop.f32.mrb[0].mxu0
        %v2492 = vadd.f32 0.0, %v2491
        %v2493 = vpop.f32.mrb[0].mxu0
        %2494 = vmatprep.mubr.f32.mxu0 %v2328
        %2495 = vmatmul.mubr.f32.gmra.mrb[0].mxu0 %v2301
        %v2496 = vpop.f32.mrb[0].mxu0
        %v2497 = vadd.f32 0.0, %v2496
        %v2498 = vpop.f32.mrb[0].mxu0
        %2499 = vdwg.mxu0
        %v2500 = vmax.f32 %v2397, %v2492
        %v2501 = vmax.f32 %v2402, %v2497
        %v2502 = vld [vmem:[%s11] sm:$0x1f]
        %vm2503 = vcmask 80896
        %v2505 = vsel %vm2503, %v2502, 0
        %vm2507 = vcmask 1041408
        %v2509 = vsel %vm2507, %v2501, 0
        %2511 = vmatprep.subr.mxu0 0.0
        %2512 = vmatpush1.msra.mxu0 %v2500
        %2513 = vmatprep.subr.mxu0 0.0
        %2514 = vmatpush1.msra.mxu0 %v2509
        %2515 = vmatprep.subr.mxu0 0.0
        %2516 = vmatpush1.msra.mxu0 0.0
        %2517 = vmatprep.subr.mxu0 0.0
        %2518 = vmatpush1.msra.mxu0 0.0
        %2519 = vmatprep.subr.mxu0 0.0
        %2520 = vmatpush1.msra.mxu0 0.0
        %2521 = vmatprep.subr.mxu0 0.0
        %2522 = vmatpush1.msra.mxu0 0.0
        %2523 = vmatprep.subr.mxu0 0.0
        %2524 = vmatpush1.msra.mxu0 0.0
        %2525 = vmatprep.subr.mxu0 0.0
        %2526 = vmatpush1.msra.mxu0 0.0
        %2527 = vmatprep.subr.mxu0 0.0
        %2528 = vmatpush1.msra.mxu0 0.0
        %2529 = vmatprep.subr.mxu0 0.0
        %2530 = vmatpush1.msra.mxu0 0.0
        %2531 = vmatprep.subr.mxu0 0.0
        %2532 = vmatpush1.msra.mxu0 0.0
        %2533 = vmatprep.subr.mxu0 0.0
        %2534 = vmatpush1.msra.mxu0 0.0
        %2535 = vmatprep.subr.mxu0 0.0
        %2536 = vmatpush1.msra.mxu0 0.0
        %2537 = vmatprep.subr.mxu0 0.0
        %2538 = vmatpush1.msra.mxu0 0.0
        %2539 = vmatprep.subr.mxu0 0.0
        %2540 = vmatpush1.msra.mxu0 0.0
        %2541 = vmatprep.subr.mxu0 0.0
        %2542 = vmatpush1.msra.mxu0 0.0
        %2543 = vmatprep.subr.mxu0 0.0
        %2544 = vmatpush1.msra.mxu0 0.0
        %2545 = vmatprep.subr.mxu0 0.0
        %2546 = vmatpush1.msra.mxu0 0.0
        %2547 = vmatprep.subr.mxu0 0.0
        %2548 = vmatpush1.msra.mxu0 0.0
        %2549 = vmatprep.subr.mxu0 0.0
        %2550 = vmatpush1.msra.mxu0 0.0
        %2551 = vmatprep.subr.mxu0 0.0
        %2552 = vmatpush1.msra.mxu0 0.0
        %2553 = vmatprep.subr.mxu0 0.0
        %2554 = vmatpush1.msra.mxu0 0.0
        %2555 = vmatprep.subr.mxu0 0.0
        %2556 = vmatpush1.msra.mxu0 0.0
        %2557 = vmatprep.subr.mxu0 0.0
        %2558 = vmatpush1.msra.mxu0 0.0
        %2559 = vmatprep.subr.mxu0 0.0
        %2560 = vmatpush1.msra.mxu0 0.0
        %2561 = vmatprep.subr.mxu0 0.0
        %2562 = vmatpush1.msra.mxu0 0.0
        %2563 = vmatprep.subr.mxu0 0.0
        %2564 = vmatpush1.msra.mxu0 0.0
        %2565 = vmatprep.subr.mxu0 0.0
        %2566 = vmatpush1.msra.mxu0 0.0
        %2567 = vmatprep.subr.mxu0 0.0
        %2568 = vmatpush1.msra.mxu0 0.0
        %2569 = vmatprep.subr.mxu0 0.0
        %2570 = vmatpush1.msra.mxu0 0.0
        %2571 = vmatprep.subr.mxu0 0.0
        %2572 = vmatpush1.msra.mxu0 0.0
        %2573 = vmatprep.subr.mxu0 0.0
        %2574 = vmatpush1.msra.mxu0 0.0
        %2575 = vmatprep.mubr.f32.mxu0 0.0
        %2576 = vmatmul.mubr.f32.gmra.mrb[0].mxu0 %v2505
        %v2577 = vpop.f32.mrb[0].mxu0
        %v2578 = vadd.f32 0.0, %v2577
        %v2579 = vpop.f32.mrb[0].mxu0
        %2580 = vdwg.mxu0
        %v2581 = vld [vmem:[%s12] sm:$0x1f]
        %v2583 = vsel %vm2503, %v2581, 0
        %2585 = vmatprep.subr.mxu0 0.0
        %2586 = vmatpush1.msra.mxu0 %v2500
        %2587 = vmatprep.subr.mxu0 0.0
        %2588 = vmatpush1.msra.mxu0 %v2509
        %2589 = vmatprep.subr.mxu0 0.0
        %2590 = vmatpush1.msra.mxu0 0.0
        %2591 = vmatprep.subr.mxu0 0.0
        %2592 = vmatpush1.msra.mxu0 0.0
        %2593 = vmatprep.subr.mxu0 0.0
        %2594 = vmatpush1.msra.mxu0 0.0
        %2595 = vmatprep.subr.mxu0 0.0
        %2596 = vmatpush1.msra.mxu0 0.0
        %2597 = vmatprep.subr.mxu0 0.0
        %2598 = vmatpush1.msra.mxu0 0.0
        %2599 = vmatprep.subr.mxu0 0.0
        %2600 = vmatpush1.msra.mxu0 0.0
        %2601 = vmatprep.subr.mxu0 0.0
        %2602 = vmatpush1.msra.mxu0 0.0
        %2603 = vmatprep.subr.mxu0 0.0
        %2604 = vmatpush1.msra.mxu0 0.0
        %2605 = vmatprep.subr.mxu0 0.0
        %2606 = vmatpush1.msra.mxu0 0.0
        %2607 = vmatprep.subr.mxu0 0.0
        %2608 = vmatpush1.msra.mxu0 0.0
        %2609 = vmatprep.subr.mxu0 0.0
        %2610 = vmatpush1.msra.mxu0 0.0
        %2611 = vmatprep.subr.mxu0 0.0
        %2612 = vmatpush1.msra.mxu0 0.0
        %2613 = vmatprep.subr.mxu0 0.0
        %2614 = vmatpush1.msra.mxu0 0.0
        %2615 = vmatprep.subr.mxu0 0.0
        %2616 = vmatpush1.msra.mxu0 0.0
        %2617 = vmatprep.subr.mxu0 0.0
        %2618 = vmatpush1.msra.mxu0 0.0
        %2619 = vmatprep.subr.mxu0 0.0
        %2620 = vmatpush1.msra.mxu0 0.0
        %2621 = vmatprep.subr.mxu0 0.0
        %2622 = vmatpush1.msra.mxu0 0.0
        %2623 = vmatprep.subr.mxu0 0.0
        %2624 = vmatpush1.msra.mxu0 0.0
        %2625 = vmatprep.subr.mxu0 0.0
        %2626 = vmatpush1.msra.mxu0 0.0
        %2627 = vmatprep.subr.mxu0 0.0
        %2628 = vmatpush1.msra.mxu0 0.0
        %2629 = vmatprep.subr.mxu0 0.0
        %2630 = vmatpush1.msra.mxu0 0.0
        %2631 = vmatprep.subr.mxu0 0.0
        %2632 = vmatpush1.msra.mxu0 0.0
        %2633 = vmatprep.subr.mxu0 0.0
        %2634 = vmatpush1.msra.mxu0 0.0
        %2635 = vmatprep.subr.mxu0 0.0
        %2636 = vmatpush1.msra.mxu0 0.0
        %2637 = vmatprep.subr.mxu0 0.0
        %2638 = vmatpush1.msra.mxu0 0.0
        %2639 = vmatprep.subr.mxu0 0.0
        %2640 = vmatpush1.msra.mxu0 0.0
        %2641 = vmatprep.subr.mxu0 0.0
        %2642 = vmatpush1.msra.mxu0 0.0
        %2643 = vmatprep.subr.mxu0 0.0
        %2644 = vmatpush1.msra.mxu0 0.0
        %2645 = vmatprep.subr.mxu0 0.0
        %2646 = vmatpush1.msra.mxu0 0.0
        %2647 = vmatprep.subr.mxu0 0.0
        %2648 = vmatpush1.msra.mxu0 0.0
        %2649 = vmatprep.mubr.f32.mxu0 0.0
        %2650 = vmatmul.mubr.f32.gmra.mrb[0].mxu0 %v2583
        %v2651 = vpop.f32.mrb[0].mxu0
        %v2652 = vadd.f32 0.0, %v2651
        %v2653 = vpop.f32.mrb[0].mxu0
        %2654 = vdwg.mxu0
        %v2655 = vmax.f32 %v2578, %v2652
        %v2656 = vld [vmem:[%s14] sm:$0x1]
        %v2657 = vld [vmem:[%s13] sm:$0xff]
        %v2658 = vld [vmem:[%s13 + $0x8] sm:$0xff]
        %v2659 = vld [vmem:[%s13 + $0x10] sm:$0xff]
        %v2660 = vld [vmem:[%s13 + $0x18] sm:$0xff]
        %v2661 = vld [vmem:[%s13 + $0x20] sm:$0xff]
        %v2662 = vld [vmem:[%s13 + $0x28] sm:$0xff]
        %v2663 = vld [vmem:[%s13 + $0x30] sm:$0xff]
        %v2664 = vld [vmem:[%s13 + $0x38] sm:$0xff]
        %v2665 = vld [vmem:[%s13 + $0x40] sm:$0xff]
        %v2666 = vld [vmem:[%s13 + $0x48] sm:$0xff]
        %vm2667 = vcmask 654336
        %v2669 = vsel %vm2667, %v2655, 0
        %2671 = vmatprep.subr.mxu0 0.0
        %2672 = vmatpush1.msra.mxu0 %v2657
        %2673 = vmatprep.subr.mxu0 0.0
        %2674 = vmatpush1.msra.mxu0 %v2658
        %2675 = vmatprep.subr.mxu0 0.0
        %2676 = vmatpush1.msra.mxu0 %v2659
        %2677 = vmatprep.subr.mxu0 0.0
        %2678 = vmatpush1.msra.mxu0 %v2660
        %2679 = vmatprep.subr.mxu0 0.0
        %2680 = vmatpush1.msra.mxu0 %v2661
        %2681 = vmatprep.subr.mxu0 0.0
        %2682 = vmatpush1.msra.mxu0 %v2662
        %2683 = vmatprep.subr.mxu0 0.0
        %2684 = vmatpush1.msra.mxu0 %v2663
        %2685 = vmatprep.subr.mxu0 0.0
        %2686 = vmatpush1.msra.mxu0 %v2664
        %2687 = vmatprep.subr.mxu0 0.0
        %2688 = vmatpush1.msra.mxu0 %v2665
        %2689 = vmatprep.subr.mxu0 0.0
        %2690 = vmatpush1.msra.mxu0 %v2666
        %2691 = vmatprep.subr.mxu0 0.0
        %2692 = vmatpush1.msra.mxu0 0.0
        %2693 = vmatprep.subr.mxu0 0.0
        %2694 = vmatpush1.msra.mxu0 0.0
        %2695 = vmatprep.subr.mxu0 0.0
        %2696 = vmatpush1.msra.mxu0 0.0
        %2697 = vmatprep.subr.mxu0 0.0
        %2698 = vmatpush1.msra.mxu0 0.0
        %2699 = vmatprep.subr.mxu0 0.0
        %2700 = vmatpush1.msra.mxu0 0.0
        %2701 = vmatprep.subr.mxu0 0.0
        %2702 = vmatpush1.msra.mxu0 0.0
        %2703 = vmatprep.subr.mxu0 0.0
        %2704 = vmatpush1.msra.mxu0 0.0
        %2705 = vmatprep.subr.mxu0 0.0
        %2706 = vmatpush1.msra.mxu0 0.0
        %2707 = vmatprep.subr.mxu0 0.0
        %2708 = vmatpush1.msra.mxu0 0.0
        %2709 = vmatprep.subr.mxu0 0.0
        %2710 = vmatpush1.msra.mxu0 0.0
        %2711 = vmatprep.subr.mxu0 0.0
        %2712 = vmatpush1.msra.mxu0 0.0
        %2713 = vmatprep.subr.mxu0 0.0
        %2714 = vmatpush1.msra.mxu0 0.0
        %2715 = vmatprep.subr.mxu0 0.0
        %2716 = vmatpush1.msra.mxu0 0.0
        %2717 = vmatprep.subr.mxu0 0.0
        %2718 = vmatpush1.msra.mxu0 0.0
        %2719 = vmatprep.subr.mxu0 0.0
        %2720 = vmatpush1.msra.mxu0 0.0
        %2721 = vmatprep.subr.mxu0 0.0
        %2722 = vmatpush1.msra.mxu0 0.0
        %2723 = vmatprep.subr.mxu0 0.0
        %2724 = vmatpush1.msra.mxu0 0.0
        %2725 = vmatprep.subr.mxu0 0.0
        %2726 = vmatpush1.msra.mxu0 0.0
        %2727 = vmatprep.subr.mxu0 0.0
        %2728 = vmatpush1.msra.mxu0 0.0
        %2729 = vmatprep.subr.mxu0 0.0
        %2730 = vmatpush1.msra.mxu0 0.0
        %2731 = vmatprep.subr.mxu0 0.0
        %2732 = vmatpush1.msra.mxu0 0.0
        %2733 = vmatprep.subr.mxu0 0.0
        %2734 = vmatpush1.msra.mxu0 0.0
        %2735 = vmatprep.mubr.f32.mxu0 0.0
        %2736 = vmatmul.mubr.f32.gmra.mrb[0].mxu0 %v2669
        %v2737 = vpop.f32.mrb[0].mxu0
        %v2738 = vadd.f32 0.0, %v2737
        %v2739 = vpop.f32.mrb[0].mxu0
        %2740 = vdwg.mxu0
        %v2741 = vadd.f32 %v2656, %v2738
        %v2742 = vld [vmem:[%s13 + $0x50] sm:$0xff]
        %v2743 = vld [vmem:[%s13 + $0x58] sm:$0xff]
        %v2744 = vld [vmem:[%s13 + $0x60] sm:$0xff]
        %v2745 = vld [vmem:[%s13 + $0x68] sm:$0xff]
        %v2746 = vld [vmem:[%s13 + $0x70] sm:$0xff]
        %v2747 = vld [vmem:[%s13 + $0x78] sm:$0xff]
        %v2748 = vld [vmem:[%s13 + $0x80] sm:$0xff]
        %v2749 = vld [vmem:[%s13 + $0x88] sm:$0xff]
        %v2750 = vld [vmem:[%s13 + $0x90] sm:$0xff]
        %v2751 = vld [vmem:[%s13 + $0x98] sm:$0xff]
        %v2752 = vrot.slane %v2655, 1
        %v2753 = vsel %vm2667, %v2752, 0
        %2755 = vmatprep.subr.mxu0 0.0
        %2756 = vmatpush1.msra.mxu0 %v2742
        %2757 = vmatprep.subr.mxu0 0.0
        %2758 = vmatpush1.msra.mxu0 %v2743
        %2759 = vmatprep.subr.mxu0 0.0
        %2760 = vmatpush1.msra.mxu0 %v2744
        %2761 = vmatprep.subr.mxu0 0.0
        %2762 = vmatpush1.msra.mxu0 %v2745
        %2763 = vmatprep.subr.mxu0 0.0
        %2764 = vmatpush1.msra.mxu0 %v2746
        %2765 = vmatprep.subr.mxu0 0.0
        %2766 = vmatpush1.msra.mxu0 %v2747
        %2767 = vmatprep.subr.mxu0 0.0
        %2768 = vmatpush1.msra.mxu0 %v2748
        %2769 = vmatprep.subr.mxu0 0.0
        %2770 = vmatpush1.msra.mxu0 %v2749
        %2771 = vmatprep.subr.mxu0 0.0
        %2772 = vmatpush1.msra.mxu0 %v2750
        %2773 = vmatprep.subr.mxu0 0.0
        %2774 = vmatpush1.msra.mxu0 %v2751
        %2775 = vmatprep.subr.mxu0 0.0
        %2776 = vmatpush1.msra.mxu0 0.0
        %2777 = vmatprep.subr.mxu0 0.0
        %2778 = vmatpush1.msra.mxu0 0.0
        %2779 = vmatprep.subr.mxu0 0.0
        %2780 = vmatpush1.msra.mxu0 0.0
        %2781 = vmatprep.subr.mxu0 0.0
        %2782 = vmatpush1.msra.mxu0 0.0
        %2783 = vmatprep.subr.mxu0 0.0
        %2784 = vmatpush1.msra.mxu0 0.0
        %2785 = vmatprep.subr.mxu0 0.0
        %2786 = vmatpush1.msra.mxu0 0.0
        %2787 = vmatprep.subr.mxu0 0.0
        %2788 = vmatpush1.msra.mxu0 0.0
        %2789 = vmatprep.subr.mxu0 0.0
        %2790 = vmatpush1.msra.mxu0 0.0
        %2791 = vmatprep.subr.mxu0 0.0
        %2792 = vmatpush1.msra.mxu0 0.0
        %2793 = vmatprep.subr.mxu0 0.0
        %2794 = vmatpush1.msra.mxu0 0.0
        %2795 = vmatprep.subr.mxu0 0.0
        %2796 = vmatpush1.msra.mxu0 0.0
        %2797 = vmatprep.subr.mxu0 0.0
        %2798 = vmatpush1.msra.mxu0 0.0
        %2799 = vmatprep.subr.mxu0 0.0
        %2800 = vmatpush1.msra.mxu0 0.0
        %2801 = vmatprep.subr.mxu0 0.0
        %2802 = vmatpush1.msra.mxu0 0.0
        %2803 = vmatprep.subr.mxu0 0.0
        %2804 = vmatpush1.msra.mxu0 0.0
        %2805 = vmatprep.subr.mxu0 0.0
        %2806 = vmatpush1.msra.mxu0 0.0
        %2807 = vmatprep.subr.mxu0 0.0
        %2808 = vmatpush1.msra.mxu0 0.0
        %2809 = vmatprep.subr.mxu0 0.0
        %2810 = vmatpush1.msra.mxu0 0.0
        %2811 = vmatprep.subr.mxu0 0.0
        %2812 = vmatpush1.msra.mxu0 0.0
        %2813 = vmatprep.subr.mxu0 0.0
        %2814 = vmatpush1.msra.mxu0 0.0
        %2815 = vmatprep.subr.mxu0 0.0
        %2816 = vmatpush1.msra.mxu0 0.0
        %2817 = vmatprep.subr.mxu0 0.0
        %2818 = vmatpush1.msra.mxu0 0.0
        %2819 = vmatprep.mubr.f32.mxu0 0.0
        %2820 = vmatmul.mubr.f32.gmra.mrb[0].mxu0 %v2753
        %v2821 = vpop.f32.mrb[0].mxu0
        %v2822 = vadd.f32 0.0, %v2821
        %v2823 = vpop.f32.mrb[0].mxu0
        %2824 = vdwg.mxu0
        %v2825 = vadd.f32 %v2741, %v2822
        %v2826 = vld [vmem:[%s13 + $0xa0] sm:$0xff]
        %v2827 = vld [vmem:[%s13 + $0xa8] sm:$0xff]
        %v2828 = vld [vmem:[%s13 + $0xb0] sm:$0xff]
        %v2829 = vld [vmem:[%s13 + $0xb8] sm:$0xff]
        %v2830 = vld [vmem:[%s13 + $0xc0] sm:$0xff]
        %v2831 = vld [vmem:[%s13 + $0xc8] sm:$0xff]
        %v2832 = vld [vmem:[%s13 + $0xd0] sm:$0xff]
        %v2833 = vld [vmem:[%s13 + $0xd8] sm:$0xff]
        %v2834 = vld [vmem:[%s13 + $0xe0] sm:$0xff]
        %v2835 = vld [vmem:[%s13 + $0xe8] sm:$0xff]
        %v2836 = vrot.slane %v2655, 2
        %v2837 = vsel %vm2667, %v2836, 0
        %2839 = vmatprep.subr.mxu0 0.0
        %2840 = vmatpush1.msra.mxu0 %v2826
        %2841 = vmatprep.subr.mxu0 0.0
        %2842 = vmatpush1.msra.mxu0 %v2827
        %2843 = vmatprep.subr.mxu0 0.0
        %2844 = vmatpush1.msra.mxu0 %v2828
        %2845 = vmatprep.subr.mxu0 0.0
        %2846 = vmatpush1.msra.mxu0 %v2829
        %2847 = vmatprep.subr.mxu0 0.0
        %2848 = vmatpush1.msra.mxu0 %v2830
        %2849 = vmatprep.subr.mxu0 0.0
        %2850 = vmatpush1.msra.mxu0 %v2831
        %2851 = vmatprep.subr.mxu0 0.0
        %2852 = vmatpush1.msra.mxu0 %v2832
        %2853 = vmatprep.subr.mxu0 0.0
        %2854 = vmatpush1.msra.mxu0 %v2833
        %2855 = vmatprep.subr.mxu0 0.0
        %2856 = vmatpush1.msra.mxu0 %v2834
        %2857 = vmatprep.subr.mxu0 0.0
        %2858 = vmatpush1.msra.mxu0 %v2835
        %2859 = vmatprep.subr.mxu0 0.0
        %2860 = vmatpush1.msra.mxu0 0.0
        %2861 = vmatprep.subr.mxu0 0.0
        %2862 = vmatpush1.msra.mxu0 0.0
        %2863 = vmatprep.subr.mxu0 0.0
        %2864 = vmatpush1.msra.mxu0 0.0
        %2865 = vmatprep.subr.mxu0 0.0
        %2866 = vmatpush1.msra.mxu0 0.0
        %2867 = vmatprep.subr.mxu0 0.0
        %2868 = vmatpush1.msra.mxu0 0.0
        %2869 = vmatprep.subr.mxu0 0.0
        %2870 = vmatpush1.msra.mxu0 0.0
        %2871 = vmatprep.subr.mxu0 0.0
        %2872 = vmatpush1.msra.mxu0 0.0
        %2873 = vmatprep.subr.mxu0 0.0
        %2874 = vmatpush1.msra.mxu0 0.0
        %2875 = vmatprep.subr.mxu0 0.0
        %2876 = vmatpush1.msra.mxu0 0.0
        %2877 = vmatprep.subr.mxu0 0.0
        %2878 = vmatpush1.msra.mxu0 0.0
        %2879 = vmatprep.subr.mxu0 0.0
        %2880 = vmatpush1.msra.mxu0 0.0
        %2881 = vmatprep.subr.mxu0 0.0
        %2882 = vmatpush1.msra.mxu0 0.0
        %2883 = vmatprep.subr.mxu0 0.0
        %2884 = vmatpush1.msra.mxu0 0.0
        %2885 = vmatprep.subr.mxu0 0.0
        %2886 = vmatpush1.msra.mxu0 0.0
        %2887 = vmatprep.subr.mxu0 0.0
        %2888 = vmatpush1.msra.mxu0 0.0
        %2889 = vmatprep.subr.mxu0 0.0
        %2890 = vmatpush1.msra.mxu0 0.0
        %2891 = vmatprep.subr.mxu0 0.0
        %2892 = vmatpush1.msra.mxu0 0.0
        %2893 = vmatprep.subr.mxu0 0.0
        %2894 = vmatpush1.msra.mxu0 0.0
        %2895 = vmatprep.subr.mxu0 0.0
        %2896 = vmatpush1.msra.mxu0 0.0
        %2897 = vmatprep.subr.mxu0 0.0
        %2898 = vmatpush1.msra.mxu0 0.0
        %2899 = vmatprep.subr.mxu0 0.0
        %2900 = vmatpush1.msra.mxu0 0.0
        %2901 = vmatprep.subr.mxu0 0.0
        %2902 = vmatpush1.msra.mxu0 0.0
        %2903 = vmatprep.mubr.f32.mxu0 0.0
        %2904 = vmatmul.mubr.f32.gmra.mrb[0].mxu0 %v2837
        %v2905 = vpop.f32.mrb[0].mxu0
        %v2906 = vadd.f32 0.0, %v2905
        %v2907 = vpop.f32.mrb[0].mxu0
        %2908 = vdwg.mxu0
        %v2909 = vadd.f32 %v2825, %v2906
        %v2910 = vld [vmem:[%s13 + $0xf0] sm:$0xff]
        %v2911 = vld [vmem:[%s13 + $0xf8] sm:$0xff]
        %v2912 = vld [vmem:[%s13 + $0x100] sm:$0xff]
        %v2913 = vld [vmem:[%s13 + $0x108] sm:$0xff]
        %v2914 = vld [vmem:[%s13 + $0x110] sm:$0xff]
        %v2915 = vld [vmem:[%s13 + $0x118] sm:$0xff]
        %v2916 = vld [vmem:[%s13 + $0x120] sm:$0xff]
        %v2917 = vld [vmem:[%s13 + $0x128] sm:$0xff]
        %v2918 = vld [vmem:[%s13 + $0x130] sm:$0xff]
        %v2919 = vld [vmem:[%s13 + $0x138] sm:$0xff]
        %v2920 = vrot.slane %v2655, 3
        %v2921 = vsel %vm2667, %v2920, 0
        %2923 = vmatprep.subr.mxu0 0.0
        %2924 = vmatpush1.msra.mxu0 %v2910
        %2925 = vmatprep.subr.mxu0 0.0
        %2926 = vmatpush1.msra.mxu0 %v2911
        %2927 = vmatprep.subr.mxu0 0.0
        %2928 = vmatpush1.msra.mxu0 %v2912
        %2929 = vmatprep.subr.mxu0 0.0
        %2930 = vmatpush1.msra.mxu0 %v2913
        %2931 = vmatprep.subr.mxu0 0.0
        %2932 = vmatpush1.msra.mxu0 %v2914
        %2933 = vmatprep.subr.mxu0 0.0
        %2934 = vmatpush1.msra.mxu0 %v2915
        %2935 = vmatprep.subr.mxu0 0.0
        %2936 = vmatpush1.msra.mxu0 %v2916
        %2937 = vmatprep.subr.mxu0 0.0
        %2938 = vmatpush1.msra.mxu0 %v2917
        %2939 = vmatprep.subr.mxu0 0.0
        %2940 = vmatpush1.msra.mxu0 %v2918
        %2941 = vmatprep.subr.mxu0 0.0
        %2942 = vmatpush1.msra.mxu0 %v2919
        %2943 = vmatprep.subr.mxu0 0.0
        %2944 = vmatpush1.msra.mxu0 0.0
        %2945 = vmatprep.subr.mxu0 0.0
        %2946 = vmatpush1.msra.mxu0 0.0
        %2947 = vmatprep.subr.mxu0 0.0
        %2948 = vmatpush1.msra.mxu0 0.0
        %2949 = vmatprep.subr.mxu0 0.0
        %2950 = vmatpush1.msra.mxu0 0.0
        %2951 = vmatprep.subr.mxu0 0.0
        %2952 = vmatpush1.msra.mxu0 0.0
        %2953 = vmatprep.subr.mxu0 0.0
        %2954 = vmatpush1.msra.mxu0 0.0
        %2955 = vmatprep.subr.mxu0 0.0
        %2956 = vmatpush1.msra.mxu0 0.0
        %2957 = vmatprep.subr.mxu0 0.0
        %2958 = vmatpush1.msra.mxu0 0.0
        %2959 = vmatprep.subr.mxu0 0.0
        %2960 = vmatpush1.msra.mxu0 0.0
        %2961 = vmatprep.subr.mxu0 0.0
        %2962 = vmatpush1.msra.mxu0 0.0
        %2963 = vmatprep.subr.mxu0 0.0
        %2964 = vmatpush1.msra.mxu0 0.0
        %2965 = vmatprep.subr.mxu0 0.0
        %2966 = vmatpush1.msra.mxu0 0.0
        %2967 = vmatprep.subr.mxu0 0.0
        %2968 = vmatpush1.msra.mxu0 0.0
        %2969 = vmatprep.subr.mxu0 0.0
        %2970 = vmatpush1.msra.mxu0 0.0
        %2971 = vmatprep.subr.mxu0 0.0
        %2972 = vmatpush1.msra.mxu0 0.0
        %2973 = vmatprep.subr.mxu0 0.0
        %2974 = vmatpush1.msra.mxu0 0.0
        %2975 = vmatprep.subr.mxu0 0.0
        %2976 = vmatpush1.msra.mxu0 0.0
        %2977 = vmatprep.subr.mxu0 0.0
        %2978 = vmatpush1.msra.mxu0 0.0
        %2979 = vmatprep.subr.mxu0 0.0
        %2980 = vmatpush1.msra.mxu0 0.0
        %2981 = vmatprep.subr.mxu0 0.0
        %2982 = vmatpush1.msra.mxu0 0.0
        %2983 = vmatprep.subr.mxu0 0.0
        %2984 = vmatpush1.msra.mxu0 0.0
        %2985 = vmatprep.subr.mxu0 0.0
        %2986 = vmatpush1.msra.mxu0 0.0
        %2987 = vmatprep.mubr.f32.mxu0 0.0
        %2988 = vmatmul.mubr.f32.gmra.mrb[0].mxu0 %v2921
        %v2989 = vpop.f32.mrb[0].mxu0
        %v2990 = vadd.f32 0.0, %v2989
        %v2991 = vpop.f32.mrb[0].mxu0
        %2992 = vdwg.mxu0
        %v2993 = vadd.f32 %v2909, %v2990
        %v2994 = vld [vmem:[%s13 + $0x140] sm:$0xff]
        %v2995 = vld [vmem:[%s13 + $0x148] sm:$0xff]
        %v2996 = vld [vmem:[%s13 + $0x150] sm:$0xff]
        %v2997 = vld [vmem:[%s13 + $0x158] sm:$0xff]
        %v2998 = vld [vmem:[%s13 + $0x160] sm:$0xff]
        %v2999 = vld [vmem:[%s13 + $0x168] sm:$0xff]
        %v3000 = vld [vmem:[%s13 + $0x170] sm:$0xff]
        %v3001 = vld [vmem:[%s13 + $0x178] sm:$0xff]
        %v3002 = vld [vmem:[%s13 + $0x180] sm:$0xff]
        %v3003 = vld [vmem:[%s13 + $0x188] sm:$0xff]
        %v3004 = vrot.slane %v2655, 4
        %v3005 = vsel %vm2667, %v3004, 0
        %3007 = vmatprep.subr.mxu0 0.0
        %3008 = vmatpush1.msra.mxu0 %v2994
        %3009 = vmatprep.subr.mxu0 0.0
        %3010 = vmatpush1.msra.mxu0 %v2995
        %3011 = vmatprep.subr.mxu0 0.0
        %3012 = vmatpush1.msra.mxu0 %v2996
        %3013 = vmatprep.subr.mxu0 0.0
        %3014 = vmatpush1.msra.mxu0 %v2997
        %3015 = vmatprep.subr.mxu0 0.0
        %3016 = vmatpush1.msra.mxu0 %v2998
        %3017 = vmatprep.subr.mxu0 0.0
        %3018 = vmatpush1.msra.mxu0 %v2999
        %3019 = vmatprep.subr.mxu0 0.0
        %3020 = vmatpush1.msra.mxu0 %v3000
        %3021 = vmatprep.subr.mxu0 0.0
        %3022 = vmatpush1.msra.mxu0 %v3001
        %3023 = vmatprep.subr.mxu0 0.0
        %3024 = vmatpush1.msra.mxu0 %v3002
        %3025 = vmatprep.subr.mxu0 0.0
        %3026 = vmatpush1.msra.mxu0 %v3003
        %3027 = vmatprep.subr.mxu0 0.0
        %3028 = vmatpush1.msra.mxu0 0.0
        %3029 = vmatprep.subr.mxu0 0.0
        %3030 = vmatpush1.msra.mxu0 0.0
        %3031 = vmatprep.subr.mxu0 0.0
        %3032 = vmatpush1.msra.mxu0 0.0
        %3033 = vmatprep.subr.mxu0 0.0
        %3034 = vmatpush1.msra.mxu0 0.0
        %3035 = vmatprep.subr.mxu0 0.0
        %3036 = vmatpush1.msra.mxu0 0.0
        %3037 = vmatprep.subr.mxu0 0.0
        %3038 = vmatpush1.msra.mxu0 0.0
        %3039 = vmatprep.subr.mxu0 0.0
        %3040 = vmatpush1.msra.mxu0 0.0
        %3041 = vmatprep.subr.mxu0 0.0
        %3042 = vmatpush1.msra.mxu0 0.0
        %3043 = vmatprep.subr.mxu0 0.0
        %3044 = vmatpush1.msra.mxu0 0.0
        %3045 = vmatprep.subr.mxu0 0.0
        %3046 = vmatpush1.msra.mxu0 0.0
        %3047 = vmatprep.subr.mxu0 0.0
        %3048 = vmatpush1.msra.mxu0 0.0
        %3049 = vmatprep.subr.mxu0 0.0
        %3050 = vmatpush1.msra.mxu0 0.0
        %3051 = vmatprep.subr.mxu0 0.0
        %3052 = vmatpush1.msra.mxu0 0.0
        %3053 = vmatprep.subr.mxu0 0.0
        %3054 = vmatpush1.msra.mxu0 0.0
        %3055 = vmatprep.subr.mxu0 0.0
        %3056 = vmatpush1.msra.mxu0 0.0
        %3057 = vmatprep.subr.mxu0 0.0
        %3058 = vmatpush1.msra.mxu0 0.0
        %3059 = vmatprep.subr.mxu0 0.0
        %3060 = vmatpush1.msra.mxu0 0.0
        %3061 = vmatprep.subr.mxu0 0.0
        %3062 = vmatpush1.msra.mxu0 0.0
        %3063 = vmatprep.subr.mxu0 0.0
        %3064 = vmatpush1.msra.mxu0 0.0
        %3065 = vmatprep.subr.mxu0 0.0
        %3066 = vmatpush1.msra.mxu0 0.0
        %3067 = vmatprep.subr.mxu0 0.0
        %3068 = vmatpush1.msra.mxu0 0.0
        %3069 = vmatprep.subr.mxu0 0.0
        %3070 = vmatpush1.msra.mxu0 0.0
        %3071 = vmatprep.mubr.f32.mxu0 0.0
        %3072 = vmatmul.mubr.f32.gmra.mrb[0].mxu0 %v3005
        %v3073 = vpop.f32.mrb[0].mxu0
        %v3074 = vadd.f32 0.0, %v3073
        %v3075 = vpop.f32.mrb[0].mxu0
        %3076 = vdwg.mxu0
        %v3077 = vadd.f32 %v2993, %v3074
        %v3078 = vmax.f32 %v3077, 0.0
        %v3079 = vld [vmem:[%s15] sm:$0xff]
        %v3080 = vld [vmem:[%s15 + $0x8] sm:$0xff]
        %v3081 = vld [vmem:[%s15 + $0x10] sm:$0xff]
        %v3082 = vld [vmem:[%s15 + $0x18] sm:$0xff]
        %v3083 = vld [vmem:[%s15 + $0x20] sm:$0xff]
        %v3084 = vld [vmem:[%s15 + $0x28] sm:$0xff]
        %v3085 = vld [vmem:[%s15 + $0x30] sm:$0xff]
        %v3086 = vld [vmem:[%s15 + $0x38] sm:$0xff]
        %v3087 = vld [vmem:[%s15 + $0x40] sm:$0xff]
        %v3088 = vld [vmem:[%s15 + $0x48] sm:$0xff]
        %v3089 = vld [vmem:[%s15 + $0x50] sm:$0xff]
        %v3090 = vld [vmem:[%s15 + $0x58] sm:$0xff]
        %v3091 = vld [vmem:[%s15 + $0x60] sm:$0xff]
        %v3092 = vld [vmem:[%s15 + $0x68] sm:$0xff]
        %v3093 = vld [vmem:[%s15 + $0x70] sm:$0xff]
        %v3094 = vld [vmem:[%s16] sm:$0x1]
        %vm3095 = vcmask 982016
        %v3097 = vsel %vm3095, %v3078, 0
        %3099 = vmatprep.subr.mxu0 0.0
        %3100 = vmatpush1.msra.mxu0 %v3079
        %3101 = vmatprep.subr.mxu0 0.0
        %3102 = vmatpush1.msra.mxu0 %v3080
        %3103 = vmatprep.subr.mxu0 0.0
        %3104 = vmatpush1.msra.mxu0 %v3081
        %3105 = vmatprep.subr.mxu0 0.0
        %3106 = vmatpush1.msra.mxu0 %v3082
        %3107 = vmatprep.subr.mxu0 0.0
        %3108 = vmatpush1.msra.mxu0 %v3083
        %3109 = vmatprep.subr.mxu0 0.0
        %3110 = vmatpush1.msra.mxu0 %v3084
        %3111 = vmatprep.subr.mxu0 0.0
        %3112 = vmatpush1.msra.mxu0 %v3085
        %3113 = vmatprep.subr.mxu0 0.0
        %3114 = vmatpush1.msra.mxu0 %v3086
        %3115 = vmatprep.subr.mxu0 0.0
        %3116 = vmatpush1.msra.mxu0 %v3087
        %3117 = vmatprep.subr.mxu0 0.0
        %3118 = vmatpush1.msra.mxu0 %v3088
        %3119 = vmatprep.subr.mxu0 0.0
        %3120 = vmatpush1.msra.mxu0 %v3089
        %3121 = vmatprep.subr.mxu0 0.0
        %3122 = vmatpush1.msra.mxu0 %v3090
        %3123 = vmatprep.subr.mxu0 0.0
        %3124 = vmatpush1.msra.mxu0 %v3091
        %3125 = vmatprep.subr.mxu0 0.0
        %3126 = vmatpush1.msra.mxu0 %v3092
        %3127 = vmatprep.subr.mxu0 0.0
        %3128 = vmatpush1.msra.mxu0 %v3093
        %3129 = vmatprep.subr.mxu0 0.0
        %3130 = vmatpush1.msra.mxu0 0.0
        %3131 = vmatprep.subr.mxu0 0.0
        %3132 = vmatpush1.msra.mxu0 0.0
        %3133 = vmatprep.subr.mxu0 0.0
        %3134 = vmatpush1.msra.mxu0 0.0
        %3135 = vmatprep.subr.mxu0 0.0
        %3136 = vmatpush1.msra.mxu0 0.0
        %3137 = vmatprep.subr.mxu0 0.0
        %3138 = vmatpush1.msra.mxu0 0.0
        %3139 = vmatprep.subr.mxu0 0.0
        %3140 = vmatpush1.msra.mxu0 0.0
        %3141 = vmatprep.subr.mxu0 0.0
        %3142 = vmatpush1.msra.mxu0 0.0
        %3143 = vmatprep.subr.mxu0 0.0
        %3144 = vmatpush1.msra.mxu0 0.0
        %3145 = vmatprep.subr.mxu0 0.0
        %3146 = vmatpush1.msra.mxu0 0.0
        %3147 = vmatprep.subr.mxu0 0.0
        %3148 = vmatpush1.msra.mxu0 0.0
        %3149 = vmatprep.subr.mxu0 0.0
        %3150 = vmatpush1.msra.mxu0 0.0
        %3151 = vmatprep.subr.mxu0 0.0
        %3152 = vmatpush1.msra.mxu0 0.0
        %3153 = vmatprep.subr.mxu0 0.0
        %3154 = vmatpush1.msra.mxu0 0.0
        %3155 = vmatprep.subr.mxu0 0.0
        %3156 = vmatpush1.msra.mxu0 0.0
        %3157 = vmatprep.subr.mxu0 0.0
        %3158 = vmatpush1.msra.mxu0 0.0
        %3159 = vmatprep.subr.mxu0 0.0
        %3160 = vmatpush1.msra.mxu0 0.0
        %3161 = vmatprep.subr.mxu0 0.0
        %3162 = vmatpush1.msra.mxu0 0.0
        %3163 = vmatprep.mubr.f32.mxu0 0.0
        %3164 = vmatmul.mubr.f32.gmra.mrb[0].mxu0 %v3097
        %v3165 = vpop.f32.mrb[0].mxu0
        %v3166 = vadd.f32 %v3094, %v3165
        %v3167 = vpop.f32.mrb[0].mxu0
        %3168 = vdwg.mxu0
        %v3169 = vmax.f32 %v3166, 0.0
        %v3170 = vld [vmem:[%s17] sm:$0xff]
        %v3171 = vld [vmem:[%s17 + $0x8] sm:$0xff]
        %v3172 = vld [vmem:[%s17 + $0x10] sm:$0xff]
        %v3173 = vld [vmem:[%s17 + $0x18] sm:$0xff]
        %v3174 = vld [vmem:[%s17 + $0x20] sm:$0xff]
        %v3175 = vld [vmem:[%s17 + $0x28] sm:$0xff]
        %v3176 = vld [vmem:[%s17 + $0x30] sm:$0xff]
        %v3177 = vld [vmem:[%s17 + $0x38] sm:$0xff]
        %v3178 = vld [vmem:[%s17 + $0x40] sm:$0xff]
        %v3179 = vld [vmem:[%s17 + $0x48] sm:$0xff]
        %v3180 = vld [vmem:[%s17 + $0x50] sm:$0xf]
        %v3181 = vld [vmem:[%s18] sm:$0x1]
        %v3183 = vsel %vm1755, %v3169, 0
        %v3186 = vsel %vm1540, %v3180, 0
        %3188 = vmatprep.subr.mxu0 0.0
        %3189 = vmatpush1.msra.mxu0 %v3170
        %3190 = vmatprep.subr.mxu0 0.0
        %3191 = vmatpush1.msra.mxu0 %v3171
        %3192 = vmatprep.subr.mxu0 0.0
        %3193 = vmatpush1.msra.mxu0 %v3172
        %3194 = vmatprep.subr.mxu0 0.0
        %3195 = vmatpush1.msra.mxu0 %v3173
        %3196 = vmatprep.subr.mxu0 0.0
        %3197 = vmatpush1.msra.mxu0 %v3174
        %3198 = vmatprep.subr.mxu0 0.0
        %3199 = vmatpush1.msra.mxu0 %v3175
        %3200 = vmatprep.subr.mxu0 0.0
        %3201 = vmatpush1.msra.mxu0 %v3176
        %3202 = vmatprep.subr.mxu0 0.0
        %3203 = vmatpush1.msra.mxu0 %v3177
        %3204 = vmatprep.subr.mxu0 0.0
        %3205 = vmatpush1.msra.mxu0 %v3178
        %3206 = vmatprep.subr.mxu0 0.0
        %3207 = vmatpush1.msra.mxu0 %v3179
        %3208 = vmatprep.subr.mxu0 0.0
        %3209 = vmatpush1.msra.mxu0 %v3186
        %3210 = vmatprep.subr.mxu0 0.0
        %3211 = vmatpush1.msra.mxu0 0.0
        %3212 = vmatprep.subr.mxu0 0.0
        %3213 = vmatpush1.msra.mxu0 0.0
        %3214 = vmatprep.subr.mxu0 0.0
        %3215 = vmatpush1.msra.mxu0 0.0
        %3216 = vmatprep.subr.mxu0 0.0
        %3217 = vmatpush1.msra.mxu0 0.0
        %3218 = vmatprep.subr.mxu0 0.0
        %3219 = vmatpush1.msra.mxu0 0.0
        %3220 = vmatprep.subr.mxu0 0.0
        %3221 = vmatpush1.msra.mxu0 0.0
        %3222 = vmatprep.subr.mxu0 0.0
        %3223 = vmatpush1.msra.mxu0 0.0
        %3224 = vmatprep.subr.mxu0 0.0
        %3225 = vmatpush1.msra.mxu0 0.0
        %3226 = vmatprep.subr.mxu0 0.0
        %3227 = vmatpush1.msra.mxu0 0.0
        %3228 = vmatprep.subr.mxu0 0.0
        %3229 = vmatpush1.msra.mxu0 0.0
        %3230 = vmatprep.subr.mxu0 0.0
        %3231 = vmatpush1.msra.mxu0 0.0
        %3232 = vmatprep.subr.mxu0 0.0
        %3233 = vmatpush1.msra.mxu0 0.0
        %3234 = vmatprep.subr.mxu0 0.0
        %3235 = vmatpush1.msra.mxu0 0.0
        %3236 = vmatprep.subr.mxu0 0.0
        %3237 = vmatpush1.msra.mxu0 0.0
        %3238 = vmatprep.subr.mxu0 0.0
        %3239 = vmatpush1.msra.mxu0 0.0
        %3240 = vmatprep.subr.mxu0 0.0
        %3241 = vmatpush1.msra.mxu0 0.0
        %3242 = vmatprep.subr.mxu0 0.0
        %3243 = vmatpush1.msra.mxu0 0.0
        %3244 = vmatprep.subr.mxu0 0.0
        %3245 = vmatpush1.msra.mxu0 0.0
        %3246 = vmatprep.subr.mxu0 0.0
        %3247 = vmatpush1.msra.mxu0 0.0
        %3248 = vmatprep.subr.mxu0 0.0
        %3249 = vmatpush1.msra.mxu0 0.0
        %3250 = vmatprep.subr.mxu0 0.0
        %3251 = vmatpush1.msra.mxu0 0.0
        %3252 = vmatprep.mubr.f32.mxu0 0.0
        %3253 = vmatmul.mubr.f32.gmra.mrb[0].mxu0 %v3183
        %v3254 = vpop.f32.mrb[0].mxu0
        %v3255 = vadd.f32 %v3181, %v3254
        %v3256 = vpop.f32.mrb[0].mxu0
        %3257 = vdwg.mxu0
        %vm3258 = vcmask 73728
        %3259 = vst.msk [vmem:[%s594] sm:$0x1] %vm3258, %v3255
        %s3260 = sand.u32 %s445, 1
        %s3261 = scalar_lea.sflag [#allocation3], %s3260
        %s3262 = sand.u32 %s445, 1
        %s3263 = scalar_lea.vmem [#allocation2], %s3262
        // Predicated region
        $region97: #{lenet_forward.1} parent=95 // pred_check
          %p3264 = pneg %p455
        $region98: #{lenet_forward.1} parent=95 // pred_check_branch
          %3266 = sbr.rel (%p3264) target = $region100
        $region99: #{lenet_forward.1} parent=95 // pred_region
          %s3268 = ssub.s32 16, 16
          %3269 = vsyncadd %s3261, %s3268
          %s3270 = smul.addr %s33, 16
          %s3271 = scalar_lea.hbm %s19, %s3270
          %s3273 = sshll.u32 %s3263, 4
          %s3274 = int_to_ptr.vmem [resolvable:$true] %s3273
          %3276 = dma.vmem_to_hbm [thread:$0]  %s3274, 16, %s3271, %s3261
        $region100: #{lenet_forward.1} parent=95 // pred_fallthru
          _
      $region96: #{lenet_forward.1} parent=5 // pred_fallthru
        _
      %p3277 = scmp.le.s32.totalorder 2, %s28
      // Predicated region
      $region101: #{lenet_forward.1} parent=5 // pred_check
        %p3278 = pneg %p3277
      $region102: #{lenet_forward.1} parent=5 // pred_check_branch
        %3280 = sbr.rel (%p3278) target = $region104
      $region103: #{lenet_forward.1} parent=5 // pred_region
        %s3281 = ssub.s32 %s28, 2
        // Predicated region
        $region105: #{lenet_forward.1} parent=103 // pred_check
          %p3282 = pneg %p461
        $region106: #{lenet_forward.1} parent=103 // pred_check_branch
          %3284 = sbr.rel (%p3282) target = $region108
        $region107: #{lenet_forward.1} parent=103 // pred_region
          %s3285 = sand.u32 %s446, 1
          %s3286 = scalar_lea.sflag [#allocation3], %s3285
          %s3287 = sand.u32 %s446, 1
          %s3288 = scalar_lea.vmem [#allocation2], %s3287
          %3289 = dma.done %s3286, 16
        $region108: #{lenet_forward.1} parent=103 // pred_fallthru
          _
      $region104: #{lenet_forward.1} parent=5 // pred_fallthru
        _
    $region6: #{lenet_forward.1} parent=1 // loop_footer
      %s32 = sadd.s32 1, %s28
    $region7: #{lenet_forward.1} parent=1 // loop_footer_branch
      %27 = sbr.rel target = $region3
    $region8: #{lenet_forward.1} parent=1 // loop_exit
      _
    %3290 = vsyncpa [#allocation3], 1
    %s3291 = scalar_lea.sflag [#allocation3], 1
    %3292 = vsyncpa %s3291, 1

</llo_original>
